<compile_context>
chip_gen: v5e
topology: v5e:2x2
jax: 0.10.0
libtpu: 0.0.40
codegen_flags: <defaults>
</compile_context>

<pallas_src>
import functools

import jax
import jax.numpy as jnp
from jax.experimental import pallas as pl
from jax.experimental.pallas import tpu as pltpu

# ---------------- model config (small, consistent with the module) -------------
STATE_DIM = 17
ACTION_DIM = 6
LATENT_DIM = 2 * ACTION_DIM          # 12
SA_DIM = STATE_DIM + ACTION_DIM      # 23
SA_PAD = 24                          # pad [state|action] 23 -> 24 lanes
HIDDEN = 750                         # logical hidden size (from the module)
HIDDEN_PAD = 768                     # 6 * 128 -> unmasked lane tiles
OUT_W = ACTION_DIM + 2 * LATENT_DIM  # packed output [u | mean | std] = 30
MAX_ACTION = 1.0
BATCH = 8


def _round_up(x, m):
    return ((x + m - 1) // m) * m


# ---------------------------- Pallas kernel ------------------------------------
def vae_fwd_kernel(max_action,
                   sa_ref, noise_ref,
                   e1_w_ref, e1_b_ref,
                   e2_wq_ref, e2_s_ref, e2_b_ref,
                   ml_w_ref, ml_b_ref,
                   d1_ws_ref, d1_wz_ref, d1_b_ref,
                   d2_wq_ref, d2_s_ref, d2_b_ref,
                   d3_w_ref, d3_b_ref,
                   out_ref):
    sa = sa_ref[...]                        # [TB, 24] bf16 (host-padded concat)

    # ---- encoder ----
    h = jnp.dot(sa, e1_w_ref[...], preferred_element_type=jnp.float32) + e1_b_ref[...]
    h = jnp.maximum(h, 0.0).astype(jnp.bfloat16)

    # int8-stored weight: widen to bf16 (integer values are exact in bf16),
    # matmul in bf16 on the MXU, apply per-column scale to the f32 accumulator.
    e2_w = e2_wq_ref[...].astype(jnp.bfloat16)
    h = jnp.dot(h, e2_w, preferred_element_type=jnp.float32) * e2_s_ref[...] + e2_b_ref[...]
    h = jnp.maximum(h, 0.0).astype(jnp.bfloat16)

    # fused mean / log_std head: one [H, 2*latent] matmul, sliced afterwards
    ml = jnp.dot(h, ml_w_ref[...], preferred_element_type=jnp.float32) + ml_b_ref[...]
    mean = ml[:, :LATENT_DIM]
    log_std = jnp.clip(ml[:, LATENT_DIM:], -4.0, 15.0)
    std = jnp.exp(log_std)

    # reparameterization: z = mean + std * eps (eps supplied from the host,
    # same semantics as torch.randn_like(std))
    z = mean + std * noise_ref[...]

    # ---- decoder: d1(cat([state, z], 1)) as split matmuls.  d1_ws has zero
    # rows for the action/pad columns of sa, so sa can be fed directly. ----
    d = jnp.dot(sa, d1_ws_ref[...], preferred_element_type=jnp.float32) \
        + jnp.dot(z.astype(jnp.bfloat16), d1_wz_ref[...],
                  preferred_element_type=jnp.float32) \
        + d1_b_ref[...]
    d = jnp.maximum(d, 0.0).astype(jnp.bfloat16)

    d2_w = d2_wq_ref[...].astype(jnp.bfloat16)
    d = jnp.dot(d, d2_w, preferred_element_type=jnp.float32) * d2_s_ref[...] + d2_b_ref[...]
    d = jnp.maximum(d, 0.0).astype(jnp.bfloat16)

    u = max_action * jnp.tanh(
        jnp.dot(d, d3_w_ref[...], preferred_element_type=jnp.float32) + d3_b_ref[...])

    # one lane-contiguous packed writeback: [u | mean | std]
    out = jnp.concatenate([u, mean, std], axis=1)
    out_ref[...] = out.astype(out_ref.dtype)


# ------------------------------ wrapper -----------------------------------------
def vae_forward(state, action, noise, kparams, max_action=MAX_ACTION, batch_tile=256):
    """Returns (u, mean, std) exactly like VAE.forward."""
    B = state.shape[0]

    # host-side concat of [state, action], padded 23 -> 24 lanes, cast bf16 once.
    sa = jnp.concatenate([state, action], axis=1).astype(jnp.bfloat16)
    sa = jnp.pad(sa, ((0, 0), (0, SA_PAD - SA_DIM)))
    noise = noise.astype(jnp.float32)

    tb = min(batch_tile, _round_up(B, 8))
    b_pad = _round_up(B, tb)
    if b_pad != B:
        sa = jnp.pad(sa, ((0, b_pad - B), (0, 0)))
        noise = jnp.pad(noise, ((0, b_pad - B), (0, 0)))

    p = kparams
    weights = (p["e1_w"], p["e1_b"],
               p["e2_wq"], p["e2_s"], p["e2_b"],
               p["ml_w"], p["ml_b"],
               p["d1_ws"], p["d1_wz"], p["d1_b"],
               p["d2_wq"], p["d2_s"], p["d2_b"],
               p["d3_w"], p["d3_b"])

    def act_spec(ncol):
        return pl.BlockSpec((tb, ncol), lambda i: (i, 0))

    def resident_spec(arr):
        # Full-array block with a constant index_map: the block index never
        # changes across the batch grid, so weights stay VMEM-resident instead
        # of being re-DMA'd per step.
        return pl.BlockSpec(arr.shape, lambda i: (0, 0))

    n_steps = b_pad // tb
    # For few-step grids don't shard the batch grid across v7x's two
    # TensorCores: each core would DMA its own full copy of the (constant
    # index_map) weights, doubling weight HBM traffic for no gain.
    semantics = ("parallel",) if n_steps >= 8 else ("arbitrary",)

    out = pl.pallas_call(
        functools.partial(vae_fwd_kernel, max_action),
        out_shape=jax.ShapeDtypeStruct((b_pad, OUT_W), jnp.float32),
        grid_spec=pltpu.PrefetchScalarGridSpec(
            num_scalar_prefetch=0,
            grid=(n_steps,),
            in_specs=[act_spec(SA_PAD), act_spec(LATENT_DIM)]
                     + [resident_spec(w) for w in weights],
            out_specs=act_spec(OUT_W),
        ),
        compiler_params=pltpu.CompilerParams(
            dimension_semantics=semantics,
            vmem_limit_bytes=32 << 20,    # footprint ~3-6 MB; generous headroom
        ),
    )(sa, noise, *weights)

    u = out[:B, :ACTION_DIM]
    mean = out[:B, ACTION_DIM:ACTION_DIM + LATENT_DIM]
    std = out[:B, ACTION_DIM + LATENT_DIM:]
    return u, mean, std


# -------------------------- deterministic params ---------------------------------
def _linear_init(key, fan_in, fan_out):
    # Mimic PyTorch nn.Linear default init: U(-1/sqrt(fan_in), 1/sqrt(fan_in)).
    kw, kb = jax.random.split(key)
    bound = 1.0 / jnp.sqrt(jnp.float32(fan_in))
    w = jax.random.uniform(kw, (fan_in, fan_out), jnp.float32, -bound, bound)
    b = jax.random.uniform(kb, (1, fan_out), jnp.float32, -bound, bound)
    return w, b


def make_params(key):
    """Full-precision logical parameters (match the PyTorch module layout)."""
    keys = jax.random.split(key, 7)
    e1_w, e1_b = _linear_init(keys[0], SA_DIM, HIDDEN)
    e2_w, e2_b = _linear_init(keys[1], HIDDEN, HIDDEN)
    mean_w, mean_b = _linear_init(keys[2], HIDDEN, LATENT_DIM)
    ls_w, ls_b = _linear_init(keys[3], HIDDEN, LATENT_DIM)
    d1_w, d1_b = _linear_init(keys[4], STATE_DIM + LATENT_DIM, HIDDEN)
    d2_w, d2_b = _linear_init(keys[5], HIDDEN, HIDDEN)
    d3_w, d3_b = _linear_init(keys[6], HIDDEN, ACTION_DIM)
    return dict(e1_w=e1_w, e1_b=e1_b, e2_w=e2_w, e2_b=e2_b,
                mean_w=mean_w, mean_b=mean_b, ls_w=ls_w, ls_b=ls_b,
                d1_w=d1_w, d1_b=d1_b, d2_w=d2_w, d2_b=d2_b,
                d3_w=d3_w, d3_b=d3_b)


def _pad_cols(x, n):
    return jnp.pad(x, ((0, 0), (0, n - x.shape[1])))


def _pad_rows(x, n):
    return jnp.pad(x, ((0, n - x.shape[0]), (0, 0)))


def _quantize_per_column_int8(w):
    """Symmetric per-output-column int8 quantization; returns (q_int8, scale_f32)."""
    absmax = jnp.max(jnp.abs(w), axis=0, keepdims=True)        # [1, N]
    scale = jnp.maximum(absmax, 1e-12) / 127.0                  # avoid /0 on padded cols
    q = jnp.clip(jnp.round(w / scale), -127.0, 127.0).astype(jnp.int8)
    return q, scale.astype(jnp.float32)


def prepare_kernel_params(p, wdtype=jnp.bfloat16):
    """Pad hidden 750->768, pad SA 23->24, fuse mean/log_std, split d1,
    int8-quantize the two 768x768 matrices, cast remaining weights to bf16.

    Zero-padding is exact: padded hidden lanes come out of every ReLU as 0 and
    the padded weight rows that consume them are also 0.  d1_ws rows for the
    action/pad columns of `sa` are 0, so feeding `sa` directly is exact.
    """
    H = HIDDEN_PAD
    e2_w = _pad_cols(_pad_rows(p["e2_w"], H), H)                    # [768, 768]
    d2_w = _pad_cols(_pad_rows(p["d2_w"], H), H)                    # [768, 768]
    e2_wq, e2_s = _quantize_per_column_int8(e2_w)
    d2_wq, d2_s = _quantize_per_column_int8(d2_w)

    kp = dict(
        e1_w=_pad_cols(_pad_rows(p["e1_w"], SA_PAD), H),            # [24, 768]
        e1_b=_pad_cols(p["e1_b"], H),
        e2_wq=e2_wq, e2_s=e2_s,                                     # int8 + [1,768] f32
        e2_b=_pad_cols(p["e2_b"], H),
        ml_w=_pad_rows(jnp.concatenate([p["mean_w"], p["ls_w"]], 1), H),  # [768, 24]
        ml_b=jnp.concatenate([p["mean_b"], p["ls_b"]], 1),                # [1, 24]
        d1_ws=_pad_cols(_pad_rows(p["d1_w"][:STATE_DIM], SA_PAD), H),     # [24, 768]
        d1_wz=_pad_cols(p["d1_w"][STATE_DIM:], H),                        # [12, 768]
        d1_b=_pad_cols(p["d1_b"], H),
        d2_wq=d2_wq, d2_s=d2_s,                                     # int8 + [1,768] f32
        d2_b=_pad_cols(p["d2_b"], H),
        d3_w=_pad_rows(p["d3_w"], H),                               # [768, 6]
        d3_b=p["d3_b"],
    )
    for k in list(kp):
        if k.endswith("_wq"):
            continue                                   # already int8
        if k.endswith("_b") or k.endswith("_s"):
            kp[k] = kp[k].astype(jnp.float32)          # biases / scales stay f32
        else:
            kp[k] = kp[k].astype(wdtype)               # remaining weights bf16
    return kp


# ------------------------------ reference ---------------------------------------
def vae_forward_ref(state, action, noise, p, max_action=MAX_ACTION):
    """Full-precision f32 reference on the original (unpadded, unfused) params."""
    sa = jnp.concatenate([state, action], axis=1)
    h = jnp.maximum(sa @ p["e1_w"] + p["e1_b"], 0.0)
    h = jnp.maximum(h @ p["e2_w"] + p["e2_b"], 0.0)
    mean = h @ p["mean_w"] + p["mean_b"]
    log_std = jnp.clip(h @ p["ls_w"] + p["ls_b"], -4.0, 15.0)
    std = jnp.exp(log_std)
    z = mean + std * noise
    sz = jnp.concatenate([state, z], axis=1)
    d = jnp.maximum(sz @ p["d1_w"] + p["d1_b"], 0.0)
    d = jnp.maximum(d @ p["d2_w"] + p["d2_b"], 0.0)
    u = max_action * jnp.tanh(d @ p["d3_w"] + p["d3_b"])
    return u, mean, std


if __name__ == "__main__":
    key = jax.random.PRNGKey(0)
    k_s, k_a, k_n, k_p = jax.random.split(key, 4)
    state = jax.random.normal(k_s, (BATCH, STATE_DIM), jnp.float32)
    action = jax.random.normal(k_a, (BATCH, ACTION_DIM), jnp.float32)
    noise = jax.random.normal(k_n, (BATCH, LATENT_DIM), jnp.float32)  # randn_like(std)
    params = make_params(k_p)
    kparams = prepare_kernel_params(params)

    u, mean, std = jax.block_until_ready(vae_forward(state, action, noise, kparams))

    u_r, mean_r, std_r = vae_forward_ref(state, action, noise, params)
    # bf16 activations + int8 per-column weights vs f32 reference -> loose tolerance.
    assert jnp.allclose(u, u_r, atol=3e-2, rtol=3e-2), float(jnp.max(jnp.abs(u - u_r)))
    assert jnp.allclose(mean, mean_r, atol=3e-2, rtol=3e-2), float(jnp.max(jnp.abs(mean - mean_r)))
    assert jnp.allclose(std, std_r, atol=3e-2, rtol=3e-2), float(jnp.max(jnp.abs(std - std_r)))

    print("KERNEL_OK")
</pallas_src>

<mosaic_0001>
module attributes {stable_mosaic.version = 11 : i64} {
  func.func @vae_fwd_kernel(%arg0: i32, %arg1: memref<8x24xbf16, #tpu.memory_space<vmem>>, %arg2: memref<8x12xf32, #tpu.memory_space<vmem>>, %arg3: memref<24x768xbf16, #tpu.memory_space<vmem>>, %arg4: memref<1x768xf32, #tpu.memory_space<vmem>>, %arg5: memref<768x768xi8, #tpu.memory_space<vmem>>, %arg6: memref<1x768xf32, #tpu.memory_space<vmem>>, %arg7: memref<1x768xf32, #tpu.memory_space<vmem>>, %arg8: memref<768x24xbf16, #tpu.memory_space<vmem>>, %arg9: memref<1x24xf32, #tpu.memory_space<vmem>>, %arg10: memref<24x768xbf16, #tpu.memory_space<vmem>>, %arg11: memref<12x768xbf16, #tpu.memory_space<vmem>>, %arg12: memref<1x768xf32, #tpu.memory_space<vmem>>, %arg13: memref<768x768xi8, #tpu.memory_space<vmem>>, %arg14: memref<1x768xf32, #tpu.memory_space<vmem>>, %arg15: memref<1x768xf32, #tpu.memory_space<vmem>>, %arg16: memref<768x6xbf16, #tpu.memory_space<vmem>>, %arg17: memref<1x6xf32, #tpu.memory_space<vmem>>, %arg18: memref<8x30xf32, #tpu.memory_space<vmem>>) attributes {dimension_semantics = [#tpu.dimension_semantics<arbitrary>], iteration_bounds = array<i64: 1>, scalar_prefetch = 0 : i64, scratch_operands = 0 : i64, tpu.core_type = #tpu.core_type<tc>, window_params = [{transform_indices = @transform_0, window_bounds = array<i64: 8, 24>}, {transform_indices = @transform_1, window_bounds = array<i64: 8, 12>}, {pipeline_mode = #tpu.pipeline_mode<synchronous>, transform_indices = @transform_2, window_bounds = array<i64: 24, 768>}, {pipeline_mode = #tpu.pipeline_mode<synchronous>, transform_indices = @transform_3, window_bounds = array<i64: 1, 768>}, {pipeline_mode = #tpu.pipeline_mode<synchronous>, transform_indices = @transform_4, window_bounds = array<i64: 768, 768>}, {pipeline_mode = #tpu.pipeline_mode<synchronous>, transform_indices = @transform_5, window_bounds = array<i64: 1, 768>}, {pipeline_mode = #tpu.pipeline_mode<synchronous>, transform_indices = @transform_6, window_bounds = array<i64: 1, 768>}, {pipeline_mode = #tpu.pipeline_mode<synchronous>, transform_indices = @transform_7, window_bounds = array<i64: 768, 24>}, {pipeline_mode = #tpu.pipeline_mode<synchronous>, transform_indices = @transform_8, window_bounds = array<i64: 1, 24>}, {pipeline_mode = #tpu.pipeline_mode<synchronous>, transform_indices = @transform_9, window_bounds = array<i64: 24, 768>}, {pipeline_mode = #tpu.pipeline_mode<synchronous>, transform_indices = @transform_10, window_bounds = array<i64: 12, 768>}, {pipeline_mode = #tpu.pipeline_mode<synchronous>, transform_indices = @transform_11, window_bounds = array<i64: 1, 768>}, {pipeline_mode = #tpu.pipeline_mode<synchronous>, transform_indices = @transform_12, window_bounds = array<i64: 768, 768>}, {pipeline_mode = #tpu.pipeline_mode<synchronous>, transform_indices = @transform_13, window_bounds = array<i64: 1, 768>}, {pipeline_mode = #tpu.pipeline_mode<synchronous>, transform_indices = @transform_14, window_bounds = array<i64: 1, 768>}, {pipeline_mode = #tpu.pipeline_mode<synchronous>, transform_indices = @transform_15, window_bounds = array<i64: 768, 6>}, {pipeline_mode = #tpu.pipeline_mode<synchronous>, transform_indices = @transform_16, window_bounds = array<i64: 1, 6>}, {transform_indices = @transform_17, window_bounds = array<i64: 8, 30>}]} {
    %c0 = arith.constant 0 : index
    %c0_0 = arith.constant 0 : index
    %0 = vector.load %arg1[%c0, %c0_0] : memref<8x24xbf16, #tpu.memory_space<vmem>>, vector<8x24xbf16>
    %c0_1 = arith.constant 0 : index
    %c0_2 = arith.constant 0 : index
    %1 = vector.load %arg3[%c0_1, %c0_2] : memref<24x768xbf16, #tpu.memory_space<vmem>>, vector<24x768xbf16>
    %cst = arith.constant dense<0.000000e+00> : vector<8x768xf32>
    %2 = tpu.matmul %0, %1, %cst {dimension_numbers = #tpu.dot_dimension_numbers<[1], [0], [0], [1], [0, 0, 1, 1], [], []>} : vector<8x24xbf16>, vector<24x768xbf16>, vector<8x768xf32> -> vector<8x768xf32>
    %c0_3 = arith.constant 0 : index
    %c0_4 = arith.constant 0 : index
    %3 = vector.load %arg4[%c0_3, %c0_4] : memref<1x768xf32, #tpu.memory_space<vmem>>, vector<1x768xf32>
    %4 = vector.broadcast %3 : vector<1x768xf32> to vector<8x768xf32>
    %5 = arith.addf %2, %4 : vector<8x768xf32>
    %cst_5 = arith.constant 0.000000e+00 : f32
    %6 = vector.broadcast %cst_5 : f32 to vector<8x768xf32>
    %7 = arith.maximumf %5, %6 : vector<8x768xf32>
    %8 = arith.truncf %7 : vector<8x768xf32> to vector<8x768xbf16>
    %c0_6 = arith.constant 0 : index
    %c0_7 = arith.constant 0 : index
    %9 = vector.load %arg5[%c0_6, %c0_7] : memref<768x768xi8, #tpu.memory_space<vmem>>, vector<768x768xi8>
    %10 = arith.sitofp %9 : vector<768x768xi8> to vector<768x768xbf16>
    %cst_8 = arith.constant dense<0.000000e+00> : vector<8x768xf32>
    %11 = tpu.matmul %8, %10, %cst_8 {dimension_numbers = #tpu.dot_dimension_numbers<[1], [0], [0], [1], [0, 0, 1, 1], [], []>} : vector<8x768xbf16>, vector<768x768xbf16>, vector<8x768xf32> -> vector<8x768xf32>
    %c0_9 = arith.constant 0 : index
    %c0_10 = arith.constant 0 : index
    %12 = vector.load %arg6[%c0_9, %c0_10] : memref<1x768xf32, #tpu.memory_space<vmem>>, vector<1x768xf32>
    %13 = vector.broadcast %12 : vector<1x768xf32> to vector<8x768xf32>
    %14 = arith.mulf %11, %13 : vector<8x768xf32>
    %c0_11 = arith.constant 0 : index
    %c0_12 = arith.constant 0 : index
    %15 = vector.load %arg7[%c0_11, %c0_12] : memref<1x768xf32, #tpu.memory_space<vmem>>, vector<1x768xf32>
    %16 = vector.broadcast %15 : vector<1x768xf32> to vector<8x768xf32>
    %17 = arith.addf %14, %16 : vector<8x768xf32>
    %cst_13 = arith.constant 0.000000e+00 : f32
    %18 = vector.broadcast %cst_13 : f32 to vector<8x768xf32>
    %19 = arith.maximumf %17, %18 : vector<8x768xf32>
    %20 = arith.truncf %19 : vector<8x768xf32> to vector<8x768xbf16>
    %c0_14 = arith.constant 0 : index
    %c0_15 = arith.constant 0 : index
    %21 = vector.load %arg8[%c0_14, %c0_15] : memref<768x24xbf16, #tpu.memory_space<vmem>>, vector<768x24xbf16>
    %cst_16 = arith.constant dense<0.000000e+00> : vector<8x24xf32>
    %22 = tpu.matmul %20, %21, %cst_16 {dimension_numbers = #tpu.dot_dimension_numbers<[1], [0], [0], [1], [0, 0, 1, 1], [], []>} : vector<8x768xbf16>, vector<768x24xbf16>, vector<8x24xf32> -> vector<8x24xf32>
    %c0_17 = arith.constant 0 : index
    %c0_18 = arith.constant 0 : index
    %23 = vector.load %arg9[%c0_17, %c0_18] : memref<1x24xf32, #tpu.memory_space<vmem>>, vector<1x24xf32>
    %24 = vector.broadcast %23 : vector<1x24xf32> to vector<8x24xf32>
    %25 = arith.addf %22, %24 : vector<8x24xf32>
    %26 = vector.extract_strided_slice %25 {offsets = [0, 0], sizes = [8, 12], strides = [1, 1]} : vector<8x24xf32> to vector<8x12xf32>
    %27 = vector.extract_strided_slice %25 {offsets = [0, 12], sizes = [8, 12], strides = [1, 1]} : vector<8x24xf32> to vector<8x12xf32>
    %cst_19 = arith.constant -4.000000e+00 : f32
    %cst_20 = arith.constant 1.500000e+01 : f32
    %28 = vector.broadcast %cst_19 : f32 to vector<8x12xf32>
    %29 = arith.maximumf %28, %27 : vector<8x12xf32>
    %30 = vector.broadcast %cst_20 : f32 to vector<8x12xf32>
    %31 = arith.minimumf %30, %29 : vector<8x12xf32>
    %32 = math.exp %31 : vector<8x12xf32>
    %c0_21 = arith.constant 0 : index
    %c0_22 = arith.constant 0 : index
    %33 = vector.load %arg2[%c0_21, %c0_22] : memref<8x12xf32, #tpu.memory_space<vmem>>, vector<8x12xf32>
    %34 = arith.mulf %32, %33 : vector<8x12xf32>
    %35 = arith.addf %26, %34 : vector<8x12xf32>
    %c0_23 = arith.constant 0 : index
    %c0_24 = arith.constant 0 : index
    %36 = vector.load %arg10[%c0_23, %c0_24] : memref<24x768xbf16, #tpu.memory_space<vmem>>, vector<24x768xbf16>
    %cst_25 = arith.constant dense<0.000000e+00> : vector<8x768xf32>
    %37 = tpu.matmul %0, %36, %cst_25 {dimension_numbers = #tpu.dot_dimension_numbers<[1], [0], [0], [1], [0, 0, 1, 1], [], []>} : vector<8x24xbf16>, vector<24x768xbf16>, vector<8x768xf32> -> vector<8x768xf32>
    %38 = arith.truncf %35 : vector<8x12xf32> to vector<8x12xbf16>
    %c0_26 = arith.constant 0 : index
    %c0_27 = arith.constant 0 : index
    %39 = vector.load %arg11[%c0_26, %c0_27] : memref<12x768xbf16, #tpu.memory_space<vmem>>, vector<12x768xbf16>
    %cst_28 = arith.constant dense<0.000000e+00> : vector<8x768xf32>
    %40 = tpu.matmul %38, %39, %cst_28 {dimension_numbers = #tpu.dot_dimension_numbers<[1], [0], [0], [1], [0, 0, 1, 1], [], []>} : vector<8x12xbf16>, vector<12x768xbf16>, vector<8x768xf32> -> vector<8x768xf32>
    %41 = arith.addf %37, %40 : vector<8x768xf32>
    %c0_29 = arith.constant 0 : index
    %c0_30 = arith.constant 0 : index
    %42 = vector.load %arg12[%c0_29, %c0_30] : memref<1x768xf32, #tpu.memory_space<vmem>>, vector<1x768xf32>
    %43 = vector.broadcast %42 : vector<1x768xf32> to vector<8x768xf32>
    %44 = arith.addf %41, %43 : vector<8x768xf32>
    %cst_31 = arith.constant 0.000000e+00 : f32
    %45 = vector.broadcast %cst_31 : f32 to vector<8x768xf32>
    %46 = arith.maximumf %44, %45 : vector<8x768xf32>
    %47 = arith.truncf %46 : vector<8x768xf32> to vector<8x768xbf16>
    %c0_32 = arith.constant 0 : index
    %c0_33 = arith.constant 0 : index
    %48 = vector.load %arg13[%c0_32, %c0_33] : memref<768x768xi8, #tpu.memory_space<vmem>>, vector<768x768xi8>
    %49 = arith.sitofp %48 : vector<768x768xi8> to vector<768x768xbf16>
    %cst_34 = arith.constant dense<0.000000e+00> : vector<8x768xf32>
    %50 = tpu.matmul %47, %49, %cst_34 {dimension_numbers = #tpu.dot_dimension_numbers<[1], [0], [0], [1], [0, 0, 1, 1], [], []>} : vector<8x768xbf16>, vector<768x768xbf16>, vector<8x768xf32> -> vector<8x768xf32>
    %c0_35 = arith.constant 0 : index
    %c0_36 = arith.constant 0 : index
    %51 = vector.load %arg14[%c0_35, %c0_36] : memref<1x768xf32, #tpu.memory_space<vmem>>, vector<1x768xf32>
    %52 = vector.broadcast %51 : vector<1x768xf32> to vector<8x768xf32>
    %53 = arith.mulf %50, %52 : vector<8x768xf32>
    %c0_37 = arith.constant 0 : index
    %c0_38 = arith.constant 0 : index
    %54 = vector.load %arg15[%c0_37, %c0_38] : memref<1x768xf32, #tpu.memory_space<vmem>>, vector<1x768xf32>
    %55 = vector.broadcast %54 : vector<1x768xf32> to vector<8x768xf32>
    %56 = arith.addf %53, %55 : vector<8x768xf32>
    %cst_39 = arith.constant 0.000000e+00 : f32
    %57 = vector.broadcast %cst_39 : f32 to vector<8x768xf32>
    %58 = arith.maximumf %56, %57 : vector<8x768xf32>
    %59 = arith.truncf %58 : vector<8x768xf32> to vector<8x768xbf16>
    %c0_40 = arith.constant 0 : index
    %c0_41 = arith.constant 0 : index
    %60 = vector.load %arg16[%c0_40, %c0_41] : memref<768x6xbf16, #tpu.memory_space<vmem>>, vector<768x6xbf16>
    %cst_42 = arith.constant dense<0.000000e+00> : vector<8x6xf32>
    %61 = tpu.matmul %59, %60, %cst_42 {dimension_numbers = #tpu.dot_dimension_numbers<[1], [0], [0], [1], [0, 0, 1, 1], [], []>} : vector<8x768xbf16>, vector<768x6xbf16>, vector<8x6xf32> -> vector<8x6xf32>
    %c0_43 = arith.constant 0 : index
    %c0_44 = arith.constant 0 : index
    %62 = vector.load %arg17[%c0_43, %c0_44] : memref<1x6xf32, #tpu.memory_space<vmem>>, vector<1x6xf32>
    %63 = vector.broadcast %62 : vector<1x6xf32> to vector<8x6xf32>
    %64 = arith.addf %61, %63 : vector<8x6xf32>
    %65 = math.tanh %64 : vector<8x6xf32>
    %cst_45 = arith.constant 1.000000e+00 : f32
    %66 = vector.broadcast %cst_45 : f32 to vector<8x6xf32>
    %67 = arith.mulf %66, %65 : vector<8x6xf32>
    %68 = tpu.concatenate %67, %26, %32 in 1 : vector<8x6xf32>, vector<8x12xf32>, vector<8x12xf32> -> vector<8x30xf32>
    %c0_46 = arith.constant 0 : index
    %c0_47 = arith.constant 0 : index
    %69 = vector.load %arg18[%c0_46, %c0_47] : memref<8x30xf32, #tpu.memory_space<vmem>>, vector<8x30xf32>
    tpu.vector_store %arg18[%c0_46, %c0_47], %68 {strides = array<i32>} : memref<8x30xf32, #tpu.memory_space<vmem>>, vector<8x30xf32>,
    return
  }
  func.func @transform_0(%arg0: i32) -> (i32, i32) {
    %c0_i32 = arith.constant 0 : i32
    %c0_i32_0 = arith.constant 0 : i32
    return %arg0, %c0_i32 : i32, i32
  }
  func.func @transform_1(%arg0: i32) -> (i32, i32) {
    %c0_i32 = arith.constant 0 : i32
    %c0_i32_0 = arith.constant 0 : i32
    return %arg0, %c0_i32 : i32, i32
  }
  func.func @transform_2(%arg0: i32) -> (i32, i32) {
    %c0_i32 = arith.constant 0 : i32
    %c0_i32_0 = arith.constant 0 : i32
    %c0_i32_1 = arith.constant 0 : i32
    return %c0_i32, %c0_i32_0 : i32, i32
  }
  func.func @transform_3(%arg0: i32) -> (i32, i32) {
    %c0_i32 = arith.constant 0 : i32
    %c0_i32_0 = arith.constant 0 : i32
    %c0_i32_1 = arith.constant 0 : i32
    return %c0_i32, %c0_i32_0 : i32, i32
  }
  func.func @transform_4(%arg0: i32) -> (i32, i32) {
    %c0_i32 = arith.constant 0 : i32
    %c0_i32_0 = arith.constant 0 : i32
    %c0_i32_1 = arith.constant 0 : i32
    return %c0_i32, %c0_i32_0 : i32, i32
  }
  func.func @transform_5(%arg0: i32) -> (i32, i32) {
    %c0_i32 = arith.constant 0 : i32
    %c0_i32_0 = arith.constant 0 : i32
    %c0_i32_1 = arith.constant 0 : i32
    return %c0_i32, %c0_i32_0 : i32, i32
  }
  func.func @transform_6(%arg0: i32) -> (i32, i32) {
    %c0_i32 = arith.constant 0 : i32
    %c0_i32_0 = arith.constant 0 : i32
    %c0_i32_1 = arith.constant 0 : i32
    return %c0_i32, %c0_i32_0 : i32, i32
  }
  func.func @transform_7(%arg0: i32) -> (i32, i32) {
    %c0_i32 = arith.constant 0 : i32
    %c0_i32_0 = arith.constant 0 : i32
    %c0_i32_1 = arith.constant 0 : i32
    return %c0_i32, %c0_i32_0 : i32, i32
  }
  func.func @transform_8(%arg0: i32) -> (i32, i32) {
    %c0_i32 = arith.constant 0 : i32
    %c0_i32_0 = arith.constant 0 : i32
    %c0_i32_1 = arith.constant 0 : i32
    return %c0_i32, %c0_i32_0 : i32, i32
  }
  func.func @transform_9(%arg0: i32) -> (i32, i32) {
    %c0_i32 = arith.constant 0 : i32
    %c0_i32_0 = arith.constant 0 : i32
    %c0_i32_1 = arith.constant 0 : i32
    return %c0_i32, %c0_i32_0 : i32, i32
  }
  func.func @transform_10(%arg0: i32) -> (i32, i32) {
    %c0_i32 = arith.constant 0 : i32
    %c0_i32_0 = arith.constant 0 : i32
    %c0_i32_1 = arith.constant 0 : i32
    return %c0_i32, %c0_i32_0 : i32, i32
  }
  func.func @transform_11(%arg0: i32) -> (i32, i32) {
    %c0_i32 = arith.constant 0 : i32
    %c0_i32_0 = arith.constant 0 : i32
    %c0_i32_1 = arith.constant 0 : i32
    return %c0_i32, %c0_i32_0 : i32, i32
  }
  func.func @transform_12(%arg0: i32) -> (i32, i32) {
    %c0_i32 = arith.constant 0 : i32
    %c0_i32_0 = arith.constant 0 : i32
    %c0_i32_1 = arith.constant 0 : i32
    return %c0_i32, %c0_i32_0 : i32, i32
  }
  func.func @transform_13(%arg0: i32) -> (i32, i32) {
    %c0_i32 = arith.constant 0 : i32
    %c0_i32_0 = arith.constant 0 : i32
    %c0_i32_1 = arith.constant 0 : i32
    return %c0_i32, %c0_i32_0 : i32, i32
  }
  func.func @transform_14(%arg0: i32) -> (i32, i32) {
    %c0_i32 = arith.constant 0 : i32
    %c0_i32_0 = arith.constant 0 : i32
    %c0_i32_1 = arith.constant 0 : i32
    return %c0_i32, %c0_i32_0 : i32, i32
  }
  func.func @transform_15(%arg0: i32) -> (i32, i32) {
    %c0_i32 = arith.constant 0 : i32
    %c0_i32_0 = arith.constant 0 : i32
    %c0_i32_1 = arith.constant 0 : i32
    return %c0_i32, %c0_i32_0 : i32, i32
  }
  func.func @transform_16(%arg0: i32) -> (i32, i32) {
    %c0_i32 = arith.constant 0 : i32
    %c0_i32_0 = arith.constant 0 : i32
    %c0_i32_1 = arith.constant 0 : i32
    return %c0_i32, %c0_i32_0 : i32, i32
  }
  func.func @transform_17(%arg0: i32) -> (i32, i32) {
    %c0_i32 = arith.constant 0 : i32
    %c0_i32_0 = arith.constant 0 : i32
    return %arg0, %c0_i32 : i32, i32
  }
}

</mosaic_0001>

<llo_original>
// kernel: tpu_custom_call.1
$region0: #{tpu_custom_call.1}
  #allocation0 [shape = 'u32[]', space=smem, size = 0x4, offset = 0x4, fixed_abs, tag = 'smem constant byte address 0x4 - core index']
  #allocation1 [shape = 'u32[72,128]{1,0:T(1,128)}', space=vmem, size = 0x9000, scoped, tag = 'internal scratch']
  %s0 = inlined_call_operand.vmem [shape: bf16[8,24], index: 0, kind: input, shape index: {}]
  %s1 = inlined_call_operand.vmem [shape: f32[8,12], index: 1, kind: input, shape index: {}]
  %s2 = inlined_call_operand.vmem [shape: bf16[24,768], index: 2, kind: input, shape index: {}]
  %s3 = inlined_call_operand.vmem [shape: f32[1,768], index: 3, kind: input, shape index: {}]
  %s4 = inlined_call_operand.hbm [shape: s8[768,768], index: 4, kind: input, shape index: {}]
  %s5 = inlined_call_operand.vmem [shape: f32[1,768], index: 5, kind: input, shape index: {}]
  %s6 = inlined_call_operand.vmem [shape: f32[1,768], index: 6, kind: input, shape index: {}]
  %s7 = inlined_call_operand.vmem [shape: bf16[768,24], index: 7, kind: input, shape index: {}]
  %s8 = inlined_call_operand.vmem [shape: f32[1,24], index: 8, kind: input, shape index: {}]
  %s9 = inlined_call_operand.vmem [shape: bf16[24,768], index: 9, kind: input, shape index: {}]
  %s10 = inlined_call_operand.vmem [shape: bf16[12,768], index: 10, kind: input, shape index: {}]
  %s11 = inlined_call_operand.vmem [shape: f32[1,768], index: 11, kind: input, shape index: {}]
  %s12 = inlined_call_operand.hbm [shape: s8[768,768], index: 12, kind: input, shape index: {}]
  %s13 = inlined_call_operand.vmem [shape: f32[1,768], index: 13, kind: input, shape index: {}]
  %s14 = inlined_call_operand.vmem [shape: f32[1,768], index: 14, kind: input, shape index: {}]
  %s15 = inlined_call_operand.vmem [shape: bf16[768,6], index: 15, kind: input, shape index: {}]
  %s16 = inlined_call_operand.vmem [shape: f32[1,6], index: 16, kind: input, shape index: {}]
  %s17 = inlined_call_operand.hbm [shape: f32[8,30], index: 17, kind: output, shape index: {}]
  %s18 = sld [smem:[#allocation0]]
  $region86: #{tpu_custom_call.1} parent=0
    _
  %s20 = ssub.s32 1, %s18
  %s21 = scalar_select 0, %s20, %s18
  $region1: #{tpu_custom_call.1} parent=0
    #allocation2 [shape = 'u8[589824]{0}', space=vmem, size = 0x90000, scoped, tag = 'input window, operand 4, single buffered']
    #allocation3 [shape = 's32[1]{0}', space=sflag, size = 0x4, scoped, tag = 'scoped memory for tpu_custom_call.1']
    #allocation4 [shape = 's32[1]{0}', space=sflag, size = 0x4, scoped, tag = 'scoped memory for tpu_custom_call.1']
    #allocation5 [shape = 'u8[589824]{0}', space=vmem, size = 0x90000, scoped, tag = 'input window, operand 12, single buffered']
    #allocation6 [shape = 's32[1]{0}', space=sflag, size = 0x4, scoped, tag = 'scoped memory for tpu_custom_call.1']
    #allocation7 [shape = 'u8[4096]{0}', space=vmem, size = 0x1000, scoped, tag = 'output window, operand 0, single buffered']
    %22 = vsyncpa [#allocation3], 0
    %23 = vsyncpa [#allocation6], 0
    %24 = vsyncpa [#allocation4], 0
    // Predicated region
    $region2: #{tpu_custom_call.1} parent=1 // pred_check
      _
    $region3: #{tpu_custom_call.1} parent=1 // pred_check_branch
      %26 = sbr.rel (0) target = $region5
    $region4: #{tpu_custom_call.1} parent=1 // pred_region
      _
    $region5: #{tpu_custom_call.1} parent=1 // pred_fallthru
      _
    // Predicated region
    $region6: #{tpu_custom_call.1} parent=1 // pred_check
      _
    $region7: #{tpu_custom_call.1} parent=1 // pred_check_branch
      %28 = sbr.rel (0) target = $region9
    $region8: #{tpu_custom_call.1} parent=1 // pred_region
      _
    $region9: #{tpu_custom_call.1} parent=1 // pred_fallthru
      _
    // Predicated region
    $region10: #{tpu_custom_call.1} parent=1 // pred_check
      _
    $region11: #{tpu_custom_call.1} parent=1 // pred_check_branch
      %30 = sbr.rel (0) target = $region13
    $region12: #{tpu_custom_call.1} parent=1 // pred_region
      _
    $region13: #{tpu_custom_call.1} parent=1 // pred_fallthru
      _
    // Predicated region
    $region14: #{tpu_custom_call.1} parent=1 // pred_check
      _
    $region15: #{tpu_custom_call.1} parent=1 // pred_check_branch
      %32 = sbr.rel (0) target = $region17
    $region16: #{tpu_custom_call.1} parent=1 // pred_region
      _
    $region17: #{tpu_custom_call.1} parent=1 // pred_fallthru
      _
    // Predicated region
    $region18: #{tpu_custom_call.1} parent=1 // pred_check
      _
    $region19: #{tpu_custom_call.1} parent=1 // pred_check_branch
      %34 = sbr.rel (0) target = $region21
    $region20: #{tpu_custom_call.1} parent=1 // pred_region
      %36 = vsyncadd [#allocation3], 0
      %s37 = sshll.u32 %s4, 4
      %s38 = int_to_ptr.hbm [resolvable:$true] %s37
      %s39 = sshll.u32 [#allocation2], 4
      %s40 = int_to_ptr.vmem [resolvable:$true] %s39
      %45 = dma.hbm_to_vmem [thread:$0]  %s38, 18432, %s40, [#allocation3], 768, 768, 48
    $region21: #{tpu_custom_call.1} parent=1 // pred_fallthru
      _
    // Predicated region
    $region22: #{tpu_custom_call.1} parent=1 // pred_check
      _
    $region23: #{tpu_custom_call.1} parent=1 // pred_check_branch
      %47 = sbr.rel (0) target = $region25
    $region24: #{tpu_custom_call.1} parent=1 // pred_region
      _
    $region25: #{tpu_custom_call.1} parent=1 // pred_fallthru
      _
    // Predicated region
    $region26: #{tpu_custom_call.1} parent=1 // pred_check
      _
    $region27: #{tpu_custom_call.1} parent=1 // pred_check_branch
      %49 = sbr.rel (0) target = $region29
    $region28: #{tpu_custom_call.1} parent=1 // pred_region
      _
    $region29: #{tpu_custom_call.1} parent=1 // pred_fallthru
      _
    // Predicated region
    $region30: #{tpu_custom_call.1} parent=1 // pred_check
      _
    $region31: #{tpu_custom_call.1} parent=1 // pred_check_branch
      %51 = sbr.rel (0) target = $region33
    $region32: #{tpu_custom_call.1} parent=1 // pred_region
      _
    $region33: #{tpu_custom_call.1} parent=1 // pred_fallthru
      _
    // Predicated region
    $region34: #{tpu_custom_call.1} parent=1 // pred_check
      _
    $region35: #{tpu_custom_call.1} parent=1 // pred_check_branch
      %53 = sbr.rel (0) target = $region37
    $region36: #{tpu_custom_call.1} parent=1 // pred_region
      _
    $region37: #{tpu_custom_call.1} parent=1 // pred_fallthru
      _
    // Predicated region
    $region38: #{tpu_custom_call.1} parent=1 // pred_check
      _
    $region39: #{tpu_custom_call.1} parent=1 // pred_check_branch
      %55 = sbr.rel (0) target = $region41
    $region40: #{tpu_custom_call.1} parent=1 // pred_region
      _
    $region41: #{tpu_custom_call.1} parent=1 // pred_fallthru
      _
    // Predicated region
    $region42: #{tpu_custom_call.1} parent=1 // pred_check
      _
    $region43: #{tpu_custom_call.1} parent=1 // pred_check_branch
      %57 = sbr.rel (0) target = $region45
    $region44: #{tpu_custom_call.1} parent=1 // pred_region
      _
    $region45: #{tpu_custom_call.1} parent=1 // pred_fallthru
      _
    // Predicated region
    $region46: #{tpu_custom_call.1} parent=1 // pred_check
      _
    $region47: #{tpu_custom_call.1} parent=1 // pred_check_branch
      %59 = sbr.rel (0) target = $region49
    $region48: #{tpu_custom_call.1} parent=1 // pred_region
      _
    $region49: #{tpu_custom_call.1} parent=1 // pred_fallthru
      _
    // Predicated region
    $region50: #{tpu_custom_call.1} parent=1 // pred_check
      _
    $region51: #{tpu_custom_call.1} parent=1 // pred_check_branch
      %61 = sbr.rel (0) target = $region53
    $region52: #{tpu_custom_call.1} parent=1 // pred_region
      %63 = vsyncadd [#allocation6], 0
      %s64 = sshll.u32 %s12, 4
      %s65 = int_to_ptr.hbm [resolvable:$true] %s64
      %s66 = sshll.u32 [#allocation5], 4
      %s67 = int_to_ptr.vmem [resolvable:$true] %s66
      %72 = dma.hbm_to_vmem [thread:$0]  %s65, 18432, %s67, [#allocation6], 768, 768, 48
    $region53: #{tpu_custom_call.1} parent=1 // pred_fallthru
      _
    // Predicated region
    $region54: #{tpu_custom_call.1} parent=1 // pred_check
      _
    $region55: #{tpu_custom_call.1} parent=1 // pred_check_branch
      %74 = sbr.rel (0) target = $region57
    $region56: #{tpu_custom_call.1} parent=1 // pred_region
      _
    $region57: #{tpu_custom_call.1} parent=1 // pred_fallthru
      _
    // Predicated region
    $region58: #{tpu_custom_call.1} parent=1 // pred_check
      _
    $region59: #{tpu_custom_call.1} parent=1 // pred_check_branch
      %76 = sbr.rel (0) target = $region61
    $region60: #{tpu_custom_call.1} parent=1 // pred_region
      _
    $region61: #{tpu_custom_call.1} parent=1 // pred_fallthru
      _
    // Predicated region
    $region62: #{tpu_custom_call.1} parent=1 // pred_check
      _
    $region63: #{tpu_custom_call.1} parent=1 // pred_check_branch
      %78 = sbr.rel (0) target = $region65
    $region64: #{tpu_custom_call.1} parent=1 // pred_region
      _
    $region65: #{tpu_custom_call.1} parent=1 // pred_fallthru
      _
    // Predicated region
    $region66: #{tpu_custom_call.1} parent=1 // pred_check
      _
    $region67: #{tpu_custom_call.1} parent=1 // pred_check_branch
      %80 = sbr.rel (0) target = $region69
    $region68: #{tpu_custom_call.1} parent=1 // pred_region
      _
    $region69: #{tpu_custom_call.1} parent=1 // pred_fallthru
      _
    // Predicated region
    $region70: #{tpu_custom_call.1} parent=1 // pred_check
      _
    $region71: #{tpu_custom_call.1} parent=1 // pred_check_branch
      %82 = sbr.rel (0) target = $region73
    $region72: #{tpu_custom_call.1} parent=1 // pred_region
      %84 = dma.done [#allocation3], 18432
    $region73: #{tpu_custom_call.1} parent=1 // pred_fallthru
      _
    // Predicated region
    $region74: #{tpu_custom_call.1} parent=1 // pred_check
      _
    $region75: #{tpu_custom_call.1} parent=1 // pred_check_branch
      %86 = sbr.rel (0) target = $region77
    $region76: #{tpu_custom_call.1} parent=1 // pred_region
      %88 = dma.done [#allocation6], 18432
    $region77: #{tpu_custom_call.1} parent=1 // pred_fallthru
      _
    %v90 = vld [vmem:[%s0] sm:$0xf]
    %v91 = vld [vmem:[%s2] sm:$0xff]
    %v92 = vld [vmem:[%s2 + $0x8] sm:$0xff]
    %v93 = vld [vmem:[%s2 + $0x10] sm:$0xff]
    %v94 = vld [vmem:[%s2 + $0x18] sm:$0xff]
    %v95 = vld [vmem:[%s2 + $0x20] sm:$0xff]
    %v96 = vld [vmem:[%s2 + $0x28] sm:$0xff]
    %v97 = vld [vmem:[%s2 + $0x30] sm:$0xff]
    %v98 = vld [vmem:[%s2 + $0x38] sm:$0xff]
    %v99 = vld [vmem:[%s2 + $0x40] sm:$0xff]
    %v100 = vld [vmem:[%s3] sm:$0x3f]
    %v102 = vperm.slane %v100, 0
    %v103 = vperm.slane %v100, 1
    %v104 = vperm.slane %v100, 2
    %v105 = vperm.slane %v100, 3
    %v106 = vperm.slane %v100, 4
    %v107 = vperm.slane %v100, 5
    %v123 = vunpack.c.l.b16 %v91
    %v124 = vunpack.c.h.b16 %v91
    %v125 = vunpack.c.l.b16 %v92
    %v126 = vunpack.c.h.b16 %v92
    %v127 = vunpack.c.l.b16 %v93
    %v128 = vunpack.c.h.b16 %v93
    %v129 = vunpack.c.l.b16 %v94
    %v130 = vunpack.c.h.b16 %v94
    %v131 = vunpack.c.l.b16 %v95
    %v132 = vunpack.c.h.b16 %v95
    %v133 = vunpack.c.l.b16 %v96
    %v134 = vunpack.c.h.b16 %v96
    %v135 = vunpack.c.l.b16 %v97
    %v136 = vunpack.c.h.b16 %v97
    %v137 = vunpack.c.l.b16 %v98
    %v138 = vunpack.c.h.b16 %v98
    %v139 = vunpack.c.l.b16 %v99
    %v140 = vunpack.c.h.b16 %v99
    %v141 = vpack.c.b16 %v129, %v123
    %v142 = vpack.c.b16 %v130, %v124
    %v143 = vpack.c.b16 %v131, %v125
    %v144 = vpack.c.b16 %v132, %v126
    %v145 = vpack.c.b16 %v133, %v127
    %v146 = vpack.c.b16 %v134, %v128
    %v147 = vpack.c.b16 %v135, %v135
    %v148 = vpack.c.b16 %v136, %v136
    %v149 = vpack.c.b16 %v137, %v137
    %v150 = vpack.c.b16 %v138, %v138
    %v151 = vpack.c.b16 %v139, %v139
    %v152 = vpack.c.b16 %v140, %v140
    %vm159 = vcmask 195584
    %v161 = vsel %vm159, %v90, 0
    %vm163 = vcmask 1043456
    %v165 = vsel %vm163, %v147, 0
    %v168 = vsel %vm163, %v148, 0
    %v171 = vsel %vm163, %v149, 0
    %v174 = vsel %vm163, %v150, 0
    %v177 = vsel %vm163, %v151, 0
    %v180 = vsel %vm163, %v152, 0
    %182 = vmatpush.bf16.msra.mxu0 0
    %183 = vmatpush.bf16.msra.mxu0 0
    %184 = vmatpush.bf16.msra.mxu0 0
    %185 = vmatpush.bf16.msra.mxu0 0
    %186 = vmatpush.bf16.msra.mxu0 0
    %187 = vmatpush.bf16.msra.mxu0 0
    %188 = vmatpush.bf16.msra.mxu0 %v165
    %189 = vmatpush.bf16.msra.mxu0 %v141
    %190 = vmatmul.bf16.gmra.mxu0 %v161
    %v191 = vpop.f32.mrf.mxu0
    %v192 = vadd.f32 %v102, %v191
    %v193 = vpop.f32.mrf.mxu0
    %194 = vdwg.mxu0
    %195 = vmatpush.bf16.msra.mxu0 0
    %196 = vmatpush.bf16.msra.mxu0 0
    %197 = vmatpush.bf16.msra.mxu0 0
    %198 = vmatpush.bf16.msra.mxu0 0
    %199 = vmatpush.bf16.msra.mxu0 0
    %200 = vmatpush.bf16.msra.mxu0 0
    %201 = vmatpush.bf16.msra.mxu0 %v168
    %202 = vmatpush.bf16.msra.mxu0 %v142
    %203 = vmatmul.bf16.gmra.mxu0 %v161
    %v204 = vpop.f32.mrf.mxu0
    %v205 = vadd.f32 %v103, %v204
    %v206 = vpop.f32.mrf.mxu0
    %207 = vdwg.mxu0
    %208 = vmatpush.bf16.msra.mxu0 0
    %209 = vmatpush.bf16.msra.mxu0 0
    %210 = vmatpush.bf16.msra.mxu0 0
    %211 = vmatpush.bf16.msra.mxu0 0
    %212 = vmatpush.bf16.msra.mxu0 0
    %213 = vmatpush.bf16.msra.mxu0 0
    %214 = vmatpush.bf16.msra.mxu0 %v171
    %215 = vmatpush.bf16.msra.mxu0 %v143
    %216 = vmatmul.bf16.gmra.mxu0 %v161
    %v217 = vpop.f32.mrf.mxu0
    %v218 = vadd.f32 %v104, %v217
    %v219 = vpop.f32.mrf.mxu0
    %220 = vdwg.mxu0
    %221 = vmatpush.bf16.msra.mxu0 0
    %222 = vmatpush.bf16.msra.mxu0 0
    %223 = vmatpush.bf16.msra.mxu0 0
    %224 = vmatpush.bf16.msra.mxu0 0
    %225 = vmatpush.bf16.msra.mxu0 0
    %226 = vmatpush.bf16.msra.mxu0 0
    %227 = vmatpush.bf16.msra.mxu0 %v174
    %228 = vmatpush.bf16.msra.mxu0 %v144
    %229 = vmatmul.bf16.gmra.mxu0 %v161
    %v230 = vpop.f32.mrf.mxu0
    %v231 = vadd.f32 %v105, %v230
    %v232 = vpop.f32.mrf.mxu0
    %233 = vdwg.mxu0
    %234 = vmatpush.bf16.msra.mxu0 0
    %235 = vmatpush.bf16.msra.mxu0 0
    %236 = vmatpush.bf16.msra.mxu0 0
    %237 = vmatpush.bf16.msra.mxu0 0
    %238 = vmatpush.bf16.msra.mxu0 0
    %239 = vmatpush.bf16.msra.mxu0 0
    %240 = vmatpush.bf16.msra.mxu0 %v177
    %241 = vmatpush.bf16.msra.mxu0 %v145
    %242 = vmatmul.bf16.gmra.mxu0 %v161
    %v243 = vpop.f32.mrf.mxu0
    %v244 = vadd.f32 %v106, %v243
    %v245 = vpop.f32.mrf.mxu0
    %246 = vdwg.mxu0
    %247 = vmatpush.bf16.msra.mxu0 0
    %248 = vmatpush.bf16.msra.mxu0 0
    %249 = vmatpush.bf16.msra.mxu0 0
    %250 = vmatpush.bf16.msra.mxu0 0
    %251 = vmatpush.bf16.msra.mxu0 0
    %252 = vmatpush.bf16.msra.mxu0 0
    %253 = vmatpush.bf16.msra.mxu0 %v180
    %254 = vmatpush.bf16.msra.mxu0 %v146
    %255 = vmatmul.bf16.gmra.mxu0 %v161
    %v256 = vpop.f32.mrf.mxu0
    %v257 = vadd.f32 %v107, %v256
    %v258 = vpop.f32.mrf.mxu0
    %259 = vdwg.mxu0
    %v260 = vmax.f32 %v192, 0.0
    %v261 = vmax.f32 %v205, 0.0
    %v262 = vmax.f32 %v218, 0.0
    %v263 = vmax.f32 %v231, 0.0
    %v264 = vmax.f32 %v244, 0.0
    %v265 = vmax.f32 %v257, 0.0
    %v266 = vpack.c.bf16 %v260, %v260
    %v267 = vpack.c.bf16 %v261, %v261
    %v268 = vpack.c.bf16 %v262, %v262
    %v269 = vpack.c.bf16 %v263, %v263
    %v270 = vpack.c.bf16 %v264, %v264
    %v271 = vpack.c.bf16 %v265, %v265
    %v272 = vld [vmem:[#allocation2] sm:$0xff]
    %v273 = vld [vmem:[#allocation2 + $0x8] sm:$0xff]
    %v274 = vld [vmem:[#allocation2 + $0x10] sm:$0xff]
    %v275 = vld [vmem:[#allocation2 + $0x18] sm:$0xff]
    %v276 = vld [vmem:[#allocation2 + $0x20] sm:$0xff]
    %v277 = vld [vmem:[#allocation2 + $0x28] sm:$0xff]
    %v278 = vld [vmem:[#allocation2 + $0x30] sm:$0xff]
    %v279 = vld [vmem:[#allocation2 + $0x38] sm:$0xff]
    %v280 = vld [vmem:[#allocation2 + $0x40] sm:$0xff]
    %v281 = vld [vmem:[#allocation2 + $0x48] sm:$0xff]
    %v282 = vld [vmem:[#allocation2 + $0x50] sm:$0xff]
    %v283 = vld [vmem:[#allocation2 + $0x58] sm:$0xff]
    %v284 = vld [vmem:[#allocation2 + $0x60] sm:$0xff]
    %v285 = vld [vmem:[#allocation2 + $0x68] sm:$0xff]
    %v286 = vld [vmem:[#allocation2 + $0x70] sm:$0xff]
    %v287 = vld [vmem:[#allocation2 + $0x78] sm:$0xff]
    %v288 = vld [vmem:[#allocation2 + $0x80] sm:$0xff]
    %v289 = vld [vmem:[#allocation2 + $0x88] sm:$0xff]
    %v290 = vld [vmem:[#allocation2 + $0x90] sm:$0xff]
    %v291 = vld [vmem:[#allocation2 + $0x98] sm:$0xff]
    %v292 = vld [vmem:[#allocation2 + $0xa0] sm:$0xff]
    %v293 = vld [vmem:[#allocation2 + $0xa8] sm:$0xff]
    %v294 = vld [vmem:[#allocation2 + $0xb0] sm:$0xff]
    %v295 = vld [vmem:[#allocation2 + $0xb8] sm:$0xff]
    %v296 = vld [vmem:[#allocation2 + $0xc0] sm:$0xff]
    %v297 = vld [vmem:[#allocation2 + $0xc8] sm:$0xff]
    %v298 = vld [vmem:[#allocation2 + $0xd0] sm:$0xff]
    %v299 = vld [vmem:[#allocation2 + $0xd8] sm:$0xff]
    %v300 = vld [vmem:[#allocation2 + $0xe0] sm:$0xff]
    %v301 = vld [vmem:[#allocation2 + $0xe8] sm:$0xff]
    %v302 = vld [vmem:[#allocation2 + $0xf0] sm:$0xff]
    %v303 = vld [vmem:[#allocation2 + $0xf8] sm:$0xff]
    %v304 = vld [vmem:[#allocation2 + $0x100] sm:$0xff]
    %v305 = vld [vmem:[#allocation2 + $0x108] sm:$0xff]
    %v306 = vld [vmem:[#allocation2 + $0x110] sm:$0xff]
    %v307 = vld [vmem:[#allocation2 + $0x118] sm:$0xff]
    %v308 = vld [vmem:[#allocation2 + $0x120] sm:$0xff]
    %v309 = vld [vmem:[#allocation2 + $0x128] sm:$0xff]
    %v310 = vld [vmem:[#allocation2 + $0x130] sm:$0xff]
    %v311 = vld [vmem:[#allocation2 + $0x138] sm:$0xff]
    %v312 = vld [vmem:[#allocation2 + $0x140] sm:$0xff]
    %v313 = vld [vmem:[#allocation2 + $0x148] sm:$0xff]
    %v314 = vld [vmem:[#allocation2 + $0x150] sm:$0xff]
    %v315 = vld [vmem:[#allocation2 + $0x158] sm:$0xff]
    %v316 = vld [vmem:[#allocation2 + $0x160] sm:$0xff]
    %v317 = vld [vmem:[#allocation2 + $0x168] sm:$0xff]
    %v318 = vld [vmem:[#allocation2 + $0x170] sm:$0xff]
    %v319 = vld [vmem:[#allocation2 + $0x178] sm:$0xff]
    %v320 = vld [vmem:[#allocation2 + $0x180] sm:$0xff]
    %v321 = vld [vmem:[#allocation2 + $0x188] sm:$0xff]
    %v322 = vld [vmem:[#allocation2 + $0x190] sm:$0xff]
    %v323 = vld [vmem:[#allocation2 + $0x198] sm:$0xff]
    %v324 = vld [vmem:[#allocation2 + $0x1a0] sm:$0xff]
    %v325 = vld [vmem:[#allocation2 + $0x1a8] sm:$0xff]
    %v326 = vld [vmem:[#allocation2 + $0x1b0] sm:$0xff]
    %v327 = vld [vmem:[#allocation2 + $0x1b8] sm:$0xff]
    %v328 = vld [vmem:[#allocation2 + $0x1c0] sm:$0xff]
    %v329 = vld [vmem:[#allocation2 + $0x1c8] sm:$0xff]
    %v330 = vld [vmem:[#allocation2 + $0x1d0] sm:$0xff]
    %v331 = vld [vmem:[#allocation2 + $0x1d8] sm:$0xff]
    %v332 = vld [vmem:[#allocation2 + $0x1e0] sm:$0xff]
    %v333 = vld [vmem:[#allocation2 + $0x1e8] sm:$0xff]
    %v334 = vld [vmem:[#allocation2 + $0x1f0] sm:$0xff]
    %v335 = vld [vmem:[#allocation2 + $0x1f8] sm:$0xff]
    %v336 = vld [vmem:[#allocation2 + $0x200] sm:$0xff]
    %v337 = vld [vmem:[#allocation2 + $0x208] sm:$0xff]
    %v338 = vld [vmem:[#allocation2 + $0x210] sm:$0xff]
    %v339 = vld [vmem:[#allocation2 + $0x218] sm:$0xff]
    %v340 = vld [vmem:[#allocation2 + $0x220] sm:$0xff]
    %v341 = vld [vmem:[#allocation2 + $0x228] sm:$0xff]
    %v342 = vld [vmem:[#allocation2 + $0x230] sm:$0xff]
    %v343 = vld [vmem:[#allocation2 + $0x238] sm:$0xff]
    %v344 = vld [vmem:[#allocation2 + $0x240] sm:$0xff]
    %v345 = vld [vmem:[#allocation2 + $0x248] sm:$0xff]
    %v346 = vld [vmem:[#allocation2 + $0x250] sm:$0xff]
    %v347 = vld [vmem:[#allocation2 + $0x258] sm:$0xff]
    %v348 = vld [vmem:[#allocation2 + $0x260] sm:$0xff]
    %v349 = vld [vmem:[#allocation2 + $0x268] sm:$0xff]
    %v350 = vld [vmem:[#allocation2 + $0x270] sm:$0xff]
    %v351 = vld [vmem:[#allocation2 + $0x278] sm:$0xff]
    %v352 = vld [vmem:[#allocation2 + $0x280] sm:$0xff]
    %v353 = vld [vmem:[#allocation2 + $0x288] sm:$0xff]
    %v354 = vld [vmem:[#allocation2 + $0x290] sm:$0xff]
    %v355 = vld [vmem:[#allocation2 + $0x298] sm:$0xff]
    %v356 = vld [vmem:[#allocation2 + $0x2a0] sm:$0xff]
    %v357 = vld [vmem:[#allocation2 + $0x2a8] sm:$0xff]
    %v358 = vld [vmem:[#allocation2 + $0x2b0] sm:$0xff]
    %v359 = vld [vmem:[#allocation2 + $0x2b8] sm:$0xff]
    %v360 = vld [vmem:[#allocation2 + $0x2c0] sm:$0xff]
    %v361 = vld [vmem:[#allocation2 + $0x2c8] sm:$0xff]
    %v362 = vld [vmem:[#allocation2 + $0x2d0] sm:$0xff]
    %v363 = vld [vmem:[#allocation2 + $0x2d8] sm:$0xff]
    %v364 = vld [vmem:[#allocation2 + $0x2e0] sm:$0xff]
    %v365 = vld [vmem:[#allocation2 + $0x2e8] sm:$0xff]
    %v366 = vld [vmem:[#allocation2 + $0x2f0] sm:$0xff]
    %v367 = vld [vmem:[#allocation2 + $0x2f8] sm:$0xff]
    %v368 = vld [vmem:[#allocation2 + $0x300] sm:$0xff]
    %v369 = vld [vmem:[#allocation2 + $0x308] sm:$0xff]
    %v370 = vld [vmem:[#allocation2 + $0x310] sm:$0xff]
    %v371 = vld [vmem:[#allocation2 + $0x318] sm:$0xff]
    %v372 = vld [vmem:[#allocation2 + $0x320] sm:$0xff]
    %v373 = vld [vmem:[#allocation2 + $0x328] sm:$0xff]
    %v374 = vld [vmem:[#allocation2 + $0x330] sm:$0xff]
    %v375 = vld [vmem:[#allocation2 + $0x338] sm:$0xff]
    %v376 = vld [vmem:[#allocation2 + $0x340] sm:$0xff]
    %v377 = vld [vmem:[#allocation2 + $0x348] sm:$0xff]
    %v378 = vld [vmem:[#allocation2 + $0x350] sm:$0xff]
    %v379 = vld [vmem:[#allocation2 + $0x358] sm:$0xff]
    %v380 = vld [vmem:[#allocation2 + $0x360] sm:$0xff]
    %v381 = vld [vmem:[#allocation2 + $0x368] sm:$0xff]
    %v382 = vld [vmem:[#allocation2 + $0x370] sm:$0xff]
    %v383 = vld [vmem:[#allocation2 + $0x378] sm:$0xff]
    %v384 = vld [vmem:[#allocation2 + $0x380] sm:$0xff]
    %v385 = vld [vmem:[#allocation2 + $0x388] sm:$0xff]
    %v386 = vld [vmem:[#allocation2 + $0x390] sm:$0xff]
    %v387 = vld [vmem:[#allocation2 + $0x398] sm:$0xff]
    %v388 = vld [vmem:[#allocation2 + $0x3a0] sm:$0xff]
    %v389 = vld [vmem:[#allocation2 + $0x3a8] sm:$0xff]
    %v390 = vld [vmem:[#allocation2 + $0x3b0] sm:$0xff]
    %v391 = vld [vmem:[#allocation2 + $0x3b8] sm:$0xff]
    %v392 = vld [vmem:[#allocation2 + $0x3c0] sm:$0xff]
    %v393 = vld [vmem:[#allocation2 + $0x3c8] sm:$0xff]
    %v394 = vld [vmem:[#allocation2 + $0x3d0] sm:$0xff]
    %v395 = vld [vmem:[#allocation2 + $0x3d8] sm:$0xff]
    %v396 = vld [vmem:[#allocation2 + $0x3e0] sm:$0xff]
    %v397 = vld [vmem:[#allocation2 + $0x3e8] sm:$0xff]
    %v398 = vld [vmem:[#allocation2 + $0x3f0] sm:$0xff]
    %v399 = vld [vmem:[#allocation2 + $0x3f8] sm:$0xff]
    %v400 = vld [vmem:[#allocation2 + $0x400] sm:$0xff]
    %v401 = vld [vmem:[#allocation2 + $0x408] sm:$0xff]
    %v402 = vld [vmem:[#allocation2 + $0x410] sm:$0xff]
    %v403 = vld [vmem:[#allocation2 + $0x418] sm:$0xff]
    %v404 = vld [vmem:[#allocation2 + $0x420] sm:$0xff]
    %v405 = vld [vmem:[#allocation2 + $0x428] sm:$0xff]
    %v406 = vld [vmem:[#allocation2 + $0x430] sm:$0xff]
    %v407 = vld [vmem:[#allocation2 + $0x438] sm:$0xff]
    %v408 = vld [vmem:[#allocation2 + $0x440] sm:$0xff]
    %v409 = vld [vmem:[#allocation2 + $0x448] sm:$0xff]
    %v410 = vld [vmem:[#allocation2 + $0x450] sm:$0xff]
    %v411 = vld [vmem:[#allocation2 + $0x458] sm:$0xff]
    %v412 = vld [vmem:[#allocation2 + $0x460] sm:$0xff]
    %v413 = vld [vmem:[#allocation2 + $0x468] sm:$0xff]
    %v414 = vld [vmem:[#allocation2 + $0x470] sm:$0xff]
    %v415 = vld [vmem:[#allocation2 + $0x478] sm:$0xff]
    %v416 = vunpack.c.0.s8 %v272
    %v417 = vunpack.c.0.s8 %v273
    %v418 = vunpack.c.0.s8 %v274
    %v419 = vunpack.c.0.s8 %v275
    %v420 = vunpack.c.0.s8 %v276
    %v421 = vunpack.c.0.s8 %v277
    %v422 = vunpack.c.1.s8 %v272
    %v423 = vunpack.c.1.s8 %v273
    %v424 = vunpack.c.1.s8 %v274
    %v425 = vunpack.c.1.s8 %v275
    %v426 = vunpack.c.1.s8 %v276
    %v427 = vunpack.c.1.s8 %v277
    %v428 = vunpack.c.2.s8 %v272
    %v429 = vunpack.c.2.s8 %v273
    %v430 = vunpack.c.2.s8 %v274
    %v431 = vunpack.c.2.s8 %v275
    %v432 = vunpack.c.2.s8 %v276
    %v433 = vunpack.c.2.s8 %v277
    %v434 = vunpack.c.3.s8 %v272
    %v435 = vunpack.c.3.s8 %v273
    %v436 = vunpack.c.3.s8 %v274
    %v437 = vunpack.c.3.s8 %v275
    %v438 = vunpack.c.3.s8 %v276
    %v439 = vunpack.c.3.s8 %v277
    %v440 = vunpack.c.0.s8 %v278
    %v441 = vunpack.c.0.s8 %v279
    %v442 = vunpack.c.0.s8 %v280
    %v443 = vunpack.c.0.s8 %v281
    %v444 = vunpack.c.0.s8 %v282
    %v445 = vunpack.c.0.s8 %v283
    %v446 = vunpack.c.1.s8 %v278
    %v447 = vunpack.c.1.s8 %v279
    %v448 = vunpack.c.1.s8 %v280
    %v449 = vunpack.c.1.s8 %v281
    %v450 = vunpack.c.1.s8 %v282
    %v451 = vunpack.c.1.s8 %v283
    %v452 = vunpack.c.2.s8 %v278
    %v453 = vunpack.c.2.s8 %v279
    %v454 = vunpack.c.2.s8 %v280
    %v455 = vunpack.c.2.s8 %v281
    %v456 = vunpack.c.2.s8 %v282
    %v457 = vunpack.c.2.s8 %v283
    %v458 = vunpack.c.3.s8 %v278
    %v459 = vunpack.c.3.s8 %v279
    %v460 = vunpack.c.3.s8 %v280
    %v461 = vunpack.c.3.s8 %v281
    %v462 = vunpack.c.3.s8 %v282
    %v463 = vunpack.c.3.s8 %v283
    %v464 = vunpack.c.0.s8 %v284
    %v465 = vunpack.c.0.s8 %v285
    %v466 = vunpack.c.0.s8 %v286
    %v467 = vunpack.c.0.s8 %v287
    %v468 = vunpack.c.0.s8 %v288
    %v469 = vunpack.c.0.s8 %v289
    %v470 = vunpack.c.1.s8 %v284
    %v471 = vunpack.c.1.s8 %v285
    %v472 = vunpack.c.1.s8 %v286
    %v473 = vunpack.c.1.s8 %v287
    %v474 = vunpack.c.1.s8 %v288
    %v475 = vunpack.c.1.s8 %v289
    %v476 = vunpack.c.2.s8 %v284
    %v477 = vunpack.c.2.s8 %v285
    %v478 = vunpack.c.2.s8 %v286
    %v479 = vunpack.c.2.s8 %v287
    %v480 = vunpack.c.2.s8 %v288
    %v481 = vunpack.c.2.s8 %v289
    %v482 = vunpack.c.3.s8 %v284
    %v483 = vunpack.c.3.s8 %v285
    %v484 = vunpack.c.3.s8 %v286
    %v485 = vunpack.c.3.s8 %v287
    %v486 = vunpack.c.3.s8 %v288
    %v487 = vunpack.c.3.s8 %v289
    %v488 = vunpack.c.0.s8 %v290
    %v489 = vunpack.c.0.s8 %v291
    %v490 = vunpack.c.0.s8 %v292
    %v491 = vunpack.c.0.s8 %v293
    %v492 = vunpack.c.0.s8 %v294
    %v493 = vunpack.c.0.s8 %v295
    %v494 = vunpack.c.1.s8 %v290
    %v495 = vunpack.c.1.s8 %v291
    %v496 = vunpack.c.1.s8 %v292
    %v497 = vunpack.c.1.s8 %v293
    %v498 = vunpack.c.1.s8 %v294
    %v499 = vunpack.c.1.s8 %v295
    %v500 = vunpack.c.2.s8 %v290
    %v501 = vunpack.c.2.s8 %v291
    %v502 = vunpack.c.2.s8 %v292
    %v503 = vunpack.c.2.s8 %v293
    %v504 = vunpack.c.2.s8 %v294
    %v505 = vunpack.c.2.s8 %v295
    %v506 = vunpack.c.3.s8 %v290
    %v507 = vunpack.c.3.s8 %v291
    %v508 = vunpack.c.3.s8 %v292
    %v509 = vunpack.c.3.s8 %v293
    %v510 = vunpack.c.3.s8 %v294
    %v511 = vunpack.c.3.s8 %v295
    %v512 = vunpack.c.0.s8 %v296
    %v513 = vunpack.c.0.s8 %v297
    %v514 = vunpack.c.0.s8 %v298
    %v515 = vunpack.c.0.s8 %v299
    %v516 = vunpack.c.0.s8 %v300
    %v517 = vunpack.c.0.s8 %v301
    %v518 = vunpack.c.1.s8 %v296
    %v519 = vunpack.c.1.s8 %v297
    %v520 = vunpack.c.1.s8 %v298
    %v521 = vunpack.c.1.s8 %v299
    %v522 = vunpack.c.1.s8 %v300
    %v523 = vunpack.c.1.s8 %v301
    %v524 = vunpack.c.2.s8 %v296
    %v525 = vunpack.c.2.s8 %v297
    %v526 = vunpack.c.2.s8 %v298
    %v527 = vunpack.c.2.s8 %v299
    %v528 = vunpack.c.2.s8 %v300
    %v529 = vunpack.c.2.s8 %v301
    %v530 = vunpack.c.3.s8 %v296
    %v531 = vunpack.c.3.s8 %v297
    %v532 = vunpack.c.3.s8 %v298
    %v533 = vunpack.c.3.s8 %v299
    %v534 = vunpack.c.3.s8 %v300
    %v535 = vunpack.c.3.s8 %v301
    %v536 = vunpack.c.0.s8 %v302
    %v537 = vunpack.c.0.s8 %v303
    %v538 = vunpack.c.0.s8 %v304
    %v539 = vunpack.c.0.s8 %v305
    %v540 = vunpack.c.0.s8 %v306
    %v541 = vunpack.c.0.s8 %v307
    %v542 = vunpack.c.1.s8 %v302
    %v543 = vunpack.c.1.s8 %v303
    %v544 = vunpack.c.1.s8 %v304
    %v545 = vunpack.c.1.s8 %v305
    %v546 = vunpack.c.1.s8 %v306
    %v547 = vunpack.c.1.s8 %v307
    %v548 = vunpack.c.2.s8 %v302
    %v549 = vunpack.c.2.s8 %v303
    %v550 = vunpack.c.2.s8 %v304
    %v551 = vunpack.c.2.s8 %v305
    %v552 = vunpack.c.2.s8 %v306
    %v553 = vunpack.c.2.s8 %v307
    %v554 = vunpack.c.3.s8 %v302
    %v555 = vunpack.c.3.s8 %v303
    %v556 = vunpack.c.3.s8 %v304
    %v557 = vunpack.c.3.s8 %v305
    %v558 = vunpack.c.3.s8 %v306
    %v559 = vunpack.c.3.s8 %v307
    %v560 = vunpack.c.0.s8 %v308
    %v561 = vunpack.c.0.s8 %v309
    %v562 = vunpack.c.0.s8 %v310
    %v563 = vunpack.c.0.s8 %v311
    %v564 = vunpack.c.0.s8 %v312
    %v565 = vunpack.c.0.s8 %v313
    %v566 = vunpack.c.1.s8 %v308
    %v567 = vunpack.c.1.s8 %v309
    %v568 = vunpack.c.1.s8 %v310
    %v569 = vunpack.c.1.s8 %v311
    %v570 = vunpack.c.1.s8 %v312
    %v571 = vunpack.c.1.s8 %v313
    %v572 = vunpack.c.2.s8 %v308
    %v573 = vunpack.c.2.s8 %v309
    %v574 = vunpack.c.2.s8 %v310
    %v575 = vunpack.c.2.s8 %v311
    %v576 = vunpack.c.2.s8 %v312
    %v577 = vunpack.c.2.s8 %v313
    %v578 = vunpack.c.3.s8 %v308
    %v579 = vunpack.c.3.s8 %v309
    %v580 = vunpack.c.3.s8 %v310
    %v581 = vunpack.c.3.s8 %v311
    %v582 = vunpack.c.3.s8 %v312
    %v583 = vunpack.c.3.s8 %v313
    %v584 = vunpack.c.0.s8 %v314
    %v585 = vunpack.c.0.s8 %v315
    %v586 = vunpack.c.0.s8 %v316
    %v587 = vunpack.c.0.s8 %v317
    %v588 = vunpack.c.0.s8 %v318
    %v589 = vunpack.c.0.s8 %v319
    %v590 = vunpack.c.1.s8 %v314
    %v591 = vunpack.c.1.s8 %v315
    %v592 = vunpack.c.1.s8 %v316
    %v593 = vunpack.c.1.s8 %v317
    %v594 = vunpack.c.1.s8 %v318
    %v595 = vunpack.c.1.s8 %v319
    %v596 = vunpack.c.2.s8 %v314
    %v597 = vunpack.c.2.s8 %v315
    %v598 = vunpack.c.2.s8 %v316
    %v599 = vunpack.c.2.s8 %v317
    %v600 = vunpack.c.2.s8 %v318
    %v601 = vunpack.c.2.s8 %v319
    %v602 = vunpack.c.3.s8 %v314
    %v603 = vunpack.c.3.s8 %v315
    %v604 = vunpack.c.3.s8 %v316
    %v605 = vunpack.c.3.s8 %v317
    %v606 = vunpack.c.3.s8 %v318
    %v607 = vunpack.c.3.s8 %v319
    %v608 = vunpack.c.0.s8 %v320
    %v609 = vunpack.c.0.s8 %v321
    %v610 = vunpack.c.0.s8 %v322
    %v611 = vunpack.c.0.s8 %v323
    %v612 = vunpack.c.0.s8 %v324
    %v613 = vunpack.c.0.s8 %v325
    %v614 = vunpack.c.1.s8 %v320
    %v615 = vunpack.c.1.s8 %v321
    %v616 = vunpack.c.1.s8 %v322
    %v617 = vunpack.c.1.s8 %v323
    %v618 = vunpack.c.1.s8 %v324
    %v619 = vunpack.c.1.s8 %v325
    %v620 = vunpack.c.2.s8 %v320
    %v621 = vunpack.c.2.s8 %v321
    %v622 = vunpack.c.2.s8 %v322
    %v623 = vunpack.c.2.s8 %v323
    %v624 = vunpack.c.2.s8 %v324
    %v625 = vunpack.c.2.s8 %v325
    %v626 = vunpack.c.3.s8 %v320
    %v627 = vunpack.c.3.s8 %v321
    %v628 = vunpack.c.3.s8 %v322
    %v629 = vunpack.c.3.s8 %v323
    %v630 = vunpack.c.3.s8 %v324
    %v631 = vunpack.c.3.s8 %v325
    %v632 = vunpack.c.0.s8 %v326
    %v633 = vunpack.c.0.s8 %v327
    %v634 = vunpack.c.0.s8 %v328
    %v635 = vunpack.c.0.s8 %v329
    %v636 = vunpack.c.0.s8 %v330
    %v637 = vunpack.c.0.s8 %v331
    %v638 = vunpack.c.1.s8 %v326
    %v639 = vunpack.c.1.s8 %v327
    %v640 = vunpack.c.1.s8 %v328
    %v641 = vunpack.c.1.s8 %v329
    %v642 = vunpack.c.1.s8 %v330
    %v643 = vunpack.c.1.s8 %v331
    %v644 = vunpack.c.2.s8 %v326
    %v645 = vunpack.c.2.s8 %v327
    %v646 = vunpack.c.2.s8 %v328
    %v647 = vunpack.c.2.s8 %v329
    %v648 = vunpack.c.2.s8 %v330
    %v649 = vunpack.c.2.s8 %v331
    %v650 = vunpack.c.3.s8 %v326
    %v651 = vunpack.c.3.s8 %v327
    %v652 = vunpack.c.3.s8 %v328
    %v653 = vunpack.c.3.s8 %v329
    %v654 = vunpack.c.3.s8 %v330
    %v655 = vunpack.c.3.s8 %v331
    %v656 = vunpack.c.0.s8 %v332
    %v657 = vunpack.c.0.s8 %v333
    %v658 = vunpack.c.0.s8 %v334
    %v659 = vunpack.c.0.s8 %v335
    %v660 = vunpack.c.0.s8 %v336
    %v661 = vunpack.c.0.s8 %v337
    %v662 = vunpack.c.1.s8 %v332
    %v663 = vunpack.c.1.s8 %v333
    %v664 = vunpack.c.1.s8 %v334
    %v665 = vunpack.c.1.s8 %v335
    %v666 = vunpack.c.1.s8 %v336
    %v667 = vunpack.c.1.s8 %v337
    %v668 = vunpack.c.2.s8 %v332
    %v669 = vunpack.c.2.s8 %v333
    %v670 = vunpack.c.2.s8 %v334
    %v671 = vunpack.c.2.s8 %v335
    %v672 = vunpack.c.2.s8 %v336
    %v673 = vunpack.c.2.s8 %v337
    %v674 = vunpack.c.3.s8 %v332
    %v675 = vunpack.c.3.s8 %v333
    %v676 = vunpack.c.3.s8 %v334
    %v677 = vunpack.c.3.s8 %v335
    %v678 = vunpack.c.3.s8 %v336
    %v679 = vunpack.c.3.s8 %v337
    %v680 = vunpack.c.0.s8 %v338
    %v681 = vunpack.c.0.s8 %v339
    %v682 = vunpack.c.0.s8 %v340
    %v683 = vunpack.c.0.s8 %v341
    %v684 = vunpack.c.0.s8 %v342
    %v685 = vunpack.c.0.s8 %v343
    %v686 = vunpack.c.1.s8 %v338
    %v687 = vunpack.c.1.s8 %v339
    %v688 = vunpack.c.1.s8 %v340
    %v689 = vunpack.c.1.s8 %v341
    %v690 = vunpack.c.1.s8 %v342
    %v691 = vunpack.c.1.s8 %v343
    %v692 = vunpack.c.2.s8 %v338
    %v693 = vunpack.c.2.s8 %v339
    %v694 = vunpack.c.2.s8 %v340
    %v695 = vunpack.c.2.s8 %v341
    %v696 = vunpack.c.2.s8 %v342
    %v697 = vunpack.c.2.s8 %v343
    %v698 = vunpack.c.3.s8 %v338
    %v699 = vunpack.c.3.s8 %v339
    %v700 = vunpack.c.3.s8 %v340
    %v701 = vunpack.c.3.s8 %v341
    %v702 = vunpack.c.3.s8 %v342
    %v703 = vunpack.c.3.s8 %v343
    %v704 = vunpack.c.0.s8 %v344
    %v705 = vunpack.c.0.s8 %v345
    %v706 = vunpack.c.0.s8 %v346
    %v707 = vunpack.c.0.s8 %v347
    %v708 = vunpack.c.0.s8 %v348
    %v709 = vunpack.c.0.s8 %v349
    %v710 = vunpack.c.1.s8 %v344
    %v711 = vunpack.c.1.s8 %v345
    %v712 = vunpack.c.1.s8 %v346
    %v713 = vunpack.c.1.s8 %v347
    %v714 = vunpack.c.1.s8 %v348
    %v715 = vunpack.c.1.s8 %v349
    %v716 = vunpack.c.2.s8 %v344
    %v717 = vunpack.c.2.s8 %v345
    %v718 = vunpack.c.2.s8 %v346
    %v719 = vunpack.c.2.s8 %v347
    %v720 = vunpack.c.2.s8 %v348
    %v721 = vunpack.c.2.s8 %v349
    %v722 = vunpack.c.3.s8 %v344
    %v723 = vunpack.c.3.s8 %v345
    %v724 = vunpack.c.3.s8 %v346
    %v725 = vunpack.c.3.s8 %v347
    %v726 = vunpack.c.3.s8 %v348
    %v727 = vunpack.c.3.s8 %v349
    %v728 = vunpack.c.0.s8 %v350
    %v729 = vunpack.c.0.s8 %v351
    %v730 = vunpack.c.0.s8 %v352
    %v731 = vunpack.c.0.s8 %v353
    %v732 = vunpack.c.0.s8 %v354
    %v733 = vunpack.c.0.s8 %v355
    %v734 = vunpack.c.1.s8 %v350
    %v735 = vunpack.c.1.s8 %v351
    %v736 = vunpack.c.1.s8 %v352
    %v737 = vunpack.c.1.s8 %v353
    %v738 = vunpack.c.1.s8 %v354
    %v739 = vunpack.c.1.s8 %v355
    %v740 = vunpack.c.2.s8 %v350
    %v741 = vunpack.c.2.s8 %v351
    %v742 = vunpack.c.2.s8 %v352
    %v743 = vunpack.c.2.s8 %v353
    %v744 = vunpack.c.2.s8 %v354
    %v745 = vunpack.c.2.s8 %v355
    %v746 = vunpack.c.3.s8 %v350
    %v747 = vunpack.c.3.s8 %v351
    %v748 = vunpack.c.3.s8 %v352
    %v749 = vunpack.c.3.s8 %v353
    %v750 = vunpack.c.3.s8 %v354
    %v751 = vunpack.c.3.s8 %v355
    %v752 = vunpack.c.0.s8 %v356
    %v753 = vunpack.c.0.s8 %v357
    %v754 = vunpack.c.0.s8 %v358
    %v755 = vunpack.c.0.s8 %v359
    %v756 = vunpack.c.0.s8 %v360
    %v757 = vunpack.c.0.s8 %v361
    %v758 = vunpack.c.1.s8 %v356
    %v759 = vunpack.c.1.s8 %v357
    %v760 = vunpack.c.1.s8 %v358
    %v761 = vunpack.c.1.s8 %v359
    %v762 = vunpack.c.1.s8 %v360
    %v763 = vunpack.c.1.s8 %v361
    %v764 = vunpack.c.2.s8 %v356
    %v765 = vunpack.c.2.s8 %v357
    %v766 = vunpack.c.2.s8 %v358
    %v767 = vunpack.c.2.s8 %v359
    %v768 = vunpack.c.2.s8 %v360
    %v769 = vunpack.c.2.s8 %v361
    %v770 = vunpack.c.3.s8 %v356
    %v771 = vunpack.c.3.s8 %v357
    %v772 = vunpack.c.3.s8 %v358
    %v773 = vunpack.c.3.s8 %v359
    %v774 = vunpack.c.3.s8 %v360
    %v775 = vunpack.c.3.s8 %v361
    %v776 = vunpack.c.0.s8 %v362
    %v777 = vunpack.c.0.s8 %v363
    %v778 = vunpack.c.0.s8 %v364
    %v779 = vunpack.c.0.s8 %v365
    %v780 = vunpack.c.0.s8 %v366
    %v781 = vunpack.c.0.s8 %v367
    %v782 = vunpack.c.1.s8 %v362
    %v783 = vunpack.c.1.s8 %v363
    %v784 = vunpack.c.1.s8 %v364
    %v785 = vunpack.c.1.s8 %v365
    %v786 = vunpack.c.1.s8 %v366
    %v787 = vunpack.c.1.s8 %v367
    %v788 = vunpack.c.2.s8 %v362
    %v789 = vunpack.c.2.s8 %v363
    %v790 = vunpack.c.2.s8 %v364
    %v791 = vunpack.c.2.s8 %v365
    %v792 = vunpack.c.2.s8 %v366
    %v793 = vunpack.c.2.s8 %v367
    %v794 = vunpack.c.3.s8 %v362
    %v795 = vunpack.c.3.s8 %v363
    %v796 = vunpack.c.3.s8 %v364
    %v797 = vunpack.c.3.s8 %v365
    %v798 = vunpack.c.3.s8 %v366
    %v799 = vunpack.c.3.s8 %v367
    %v800 = vunpack.c.0.s8 %v368
    %v801 = vunpack.c.0.s8 %v369
    %v802 = vunpack.c.0.s8 %v370
    %v803 = vunpack.c.0.s8 %v371
    %v804 = vunpack.c.0.s8 %v372
    %v805 = vunpack.c.0.s8 %v373
    %v806 = vunpack.c.1.s8 %v368
    %v807 = vunpack.c.1.s8 %v369
    %v808 = vunpack.c.1.s8 %v370
    %v809 = vunpack.c.1.s8 %v371
    %v810 = vunpack.c.1.s8 %v372
    %v811 = vunpack.c.1.s8 %v373
    %v812 = vunpack.c.2.s8 %v368
    %v813 = vunpack.c.2.s8 %v369
    %v814 = vunpack.c.2.s8 %v370
    %v815 = vunpack.c.2.s8 %v371
    %v816 = vunpack.c.2.s8 %v372
    %v817 = vunpack.c.2.s8 %v373
    %v818 = vunpack.c.3.s8 %v368
    %v819 = vunpack.c.3.s8 %v369
    %v820 = vunpack.c.3.s8 %v370
    %v821 = vunpack.c.3.s8 %v371
    %v822 = vunpack.c.3.s8 %v372
    %v823 = vunpack.c.3.s8 %v373
    %v824 = vunpack.c.0.s8 %v374
    %v825 = vunpack.c.0.s8 %v375
    %v826 = vunpack.c.0.s8 %v376
    %v827 = vunpack.c.0.s8 %v377
    %v828 = vunpack.c.0.s8 %v378
    %v829 = vunpack.c.0.s8 %v379
    %v830 = vunpack.c.1.s8 %v374
    %v831 = vunpack.c.1.s8 %v375
    %v832 = vunpack.c.1.s8 %v376
    %v833 = vunpack.c.1.s8 %v377
    %v834 = vunpack.c.1.s8 %v378
    %v835 = vunpack.c.1.s8 %v379
    %v836 = vunpack.c.2.s8 %v374
    %v837 = vunpack.c.2.s8 %v375
    %v838 = vunpack.c.2.s8 %v376
    %v839 = vunpack.c.2.s8 %v377
    %v840 = vunpack.c.2.s8 %v378
    %v841 = vunpack.c.2.s8 %v379
    %v842 = vunpack.c.3.s8 %v374
    %v843 = vunpack.c.3.s8 %v375
    %v844 = vunpack.c.3.s8 %v376
    %v845 = vunpack.c.3.s8 %v377
    %v846 = vunpack.c.3.s8 %v378
    %v847 = vunpack.c.3.s8 %v379
    %v848 = vunpack.c.0.s8 %v380
    %v849 = vunpack.c.0.s8 %v381
    %v850 = vunpack.c.0.s8 %v382
    %v851 = vunpack.c.0.s8 %v383
    %v852 = vunpack.c.0.s8 %v384
    %v853 = vunpack.c.0.s8 %v385
    %v854 = vunpack.c.1.s8 %v380
    %v855 = vunpack.c.1.s8 %v381
    %v856 = vunpack.c.1.s8 %v382
    %v857 = vunpack.c.1.s8 %v383
    %v858 = vunpack.c.1.s8 %v384
    %v859 = vunpack.c.1.s8 %v385
    %v860 = vunpack.c.2.s8 %v380
    %v861 = vunpack.c.2.s8 %v381
    %v862 = vunpack.c.2.s8 %v382
    %v863 = vunpack.c.2.s8 %v383
    %v864 = vunpack.c.2.s8 %v384
    %v865 = vunpack.c.2.s8 %v385
    %v866 = vunpack.c.3.s8 %v380
    %v867 = vunpack.c.3.s8 %v381
    %v868 = vunpack.c.3.s8 %v382
    %v869 = vunpack.c.3.s8 %v383
    %v870 = vunpack.c.3.s8 %v384
    %v871 = vunpack.c.3.s8 %v385
    %v872 = vunpack.c.0.s8 %v386
    %v873 = vunpack.c.0.s8 %v387
    %v874 = vunpack.c.0.s8 %v388
    %v875 = vunpack.c.0.s8 %v389
    %v876 = vunpack.c.0.s8 %v390
    %v877 = vunpack.c.0.s8 %v391
    %v878 = vunpack.c.1.s8 %v386
    %v879 = vunpack.c.1.s8 %v387
    %v880 = vunpack.c.1.s8 %v388
    %v881 = vunpack.c.1.s8 %v389
    %v882 = vunpack.c.1.s8 %v390
    %v883 = vunpack.c.1.s8 %v391
    %v884 = vunpack.c.2.s8 %v386
    %v885 = vunpack.c.2.s8 %v387
    %v886 = vunpack.c.2.s8 %v388
    %v887 = vunpack.c.2.s8 %v389
    %v888 = vunpack.c.2.s8 %v390
    %v889 = vunpack.c.2.s8 %v391
    %v890 = vunpack.c.3.s8 %v386
    %v891 = vunpack.c.3.s8 %v387
    %v892 = vunpack.c.3.s8 %v388
    %v893 = vunpack.c.3.s8 %v389
    %v894 = vunpack.c.3.s8 %v390
    %v895 = vunpack.c.3.s8 %v391
    %v896 = vunpack.c.0.s8 %v392
    %v897 = vunpack.c.0.s8 %v393
    %v898 = vunpack.c.0.s8 %v394
    %v899 = vunpack.c.0.s8 %v395
    %v900 = vunpack.c.0.s8 %v396
    %v901 = vunpack.c.0.s8 %v397
    %v902 = vunpack.c.1.s8 %v392
    %v903 = vunpack.c.1.s8 %v393
    %v904 = vunpack.c.1.s8 %v394
    %v905 = vunpack.c.1.s8 %v395
    %v906 = vunpack.c.1.s8 %v396
    %v907 = vunpack.c.1.s8 %v397
    %v908 = vunpack.c.2.s8 %v392
    %v909 = vunpack.c.2.s8 %v393
    %v910 = vunpack.c.2.s8 %v394
    %v911 = vunpack.c.2.s8 %v395
    %v912 = vunpack.c.2.s8 %v396
    %v913 = vunpack.c.2.s8 %v397
    %v914 = vunpack.c.3.s8 %v392
    %v915 = vunpack.c.3.s8 %v393
    %v916 = vunpack.c.3.s8 %v394
    %v917 = vunpack.c.3.s8 %v395
    %v918 = vunpack.c.3.s8 %v396
    %v919 = vunpack.c.3.s8 %v397
    %v920 = vunpack.c.0.s8 %v398
    %v921 = vunpack.c.0.s8 %v399
    %v922 = vunpack.c.0.s8 %v400
    %v923 = vunpack.c.0.s8 %v401
    %v924 = vunpack.c.0.s8 %v402
    %v925 = vunpack.c.0.s8 %v403
    %v926 = vunpack.c.1.s8 %v398
    %v927 = vunpack.c.1.s8 %v399
    %v928 = vunpack.c.1.s8 %v400
    %v929 = vunpack.c.1.s8 %v401
    %v930 = vunpack.c.1.s8 %v402
    %v931 = vunpack.c.1.s8 %v403
    %v932 = vunpack.c.2.s8 %v398
    %v933 = vunpack.c.2.s8 %v399
    %v934 = vunpack.c.2.s8 %v400
    %v935 = vunpack.c.2.s8 %v401
    %v936 = vunpack.c.2.s8 %v402
    %v937 = vunpack.c.2.s8 %v403
    %v938 = vunpack.c.3.s8 %v398
    %v939 = vunpack.c.3.s8 %v399
    %v940 = vunpack.c.3.s8 %v400
    %v941 = vunpack.c.3.s8 %v401
    %v942 = vunpack.c.3.s8 %v402
    %v943 = vunpack.c.3.s8 %v403
    %v944 = vunpack.c.0.s8 %v404
    %v945 = vunpack.c.0.s8 %v405
    %v946 = vunpack.c.0.s8 %v406
    %v947 = vunpack.c.0.s8 %v407
    %v948 = vunpack.c.0.s8 %v408
    %v949 = vunpack.c.0.s8 %v409
    %v950 = vunpack.c.1.s8 %v404
    %v951 = vunpack.c.1.s8 %v405
    %v952 = vunpack.c.1.s8 %v406
    %v953 = vunpack.c.1.s8 %v407
    %v954 = vunpack.c.1.s8 %v408
    %v955 = vunpack.c.1.s8 %v409
    %v956 = vunpack.c.2.s8 %v404
    %v957 = vunpack.c.2.s8 %v405
    %v958 = vunpack.c.2.s8 %v406
    %v959 = vunpack.c.2.s8 %v407
    %v960 = vunpack.c.2.s8 %v408
    %v961 = vunpack.c.2.s8 %v409
    %v962 = vunpack.c.3.s8 %v404
    %v963 = vunpack.c.3.s8 %v405
    %v964 = vunpack.c.3.s8 %v406
    %v965 = vunpack.c.3.s8 %v407
    %v966 = vunpack.c.3.s8 %v408
    %v967 = vunpack.c.3.s8 %v409
    %v968 = vunpack.c.0.s8 %v410
    %v969 = vunpack.c.0.s8 %v411
    %v970 = vunpack.c.0.s8 %v412
    %v971 = vunpack.c.0.s8 %v413
    %v972 = vunpack.c.0.s8 %v414
    %v973 = vunpack.c.0.s8 %v415
    %v974 = vunpack.c.1.s8 %v410
    %v975 = vunpack.c.1.s8 %v411
    %v976 = vunpack.c.1.s8 %v412
    %v977 = vunpack.c.1.s8 %v413
    %v978 = vunpack.c.1.s8 %v414
    %v979 = vunpack.c.1.s8 %v415
    %v980 = vunpack.c.2.s8 %v410
    %v981 = vunpack.c.2.s8 %v411
    %v982 = vunpack.c.2.s8 %v412
    %v983 = vunpack.c.2.s8 %v413
    %v984 = vunpack.c.2.s8 %v414
    %v985 = vunpack.c.2.s8 %v415
    %v986 = vunpack.c.3.s8 %v410
    %v987 = vunpack.c.3.s8 %v411
    %v988 = vunpack.c.3.s8 %v412
    %v989 = vunpack.c.3.s8 %v413
    %v990 = vunpack.c.3.s8 %v414
    %v991 = vunpack.c.3.s8 %v415
    %v992 = vcvt.s32.f32 %v416
    %v993 = vcvt.s32.f32 %v417
    %v994 = vcvt.s32.f32 %v418
    %v995 = vcvt.s32.f32 %v419
    %v996 = vcvt.s32.f32 %v420
    %v997 = vcvt.s32.f32 %v421
    %v998 = vcvt.s32.f32 %v422
    %v999 = vcvt.s32.f32 %v423
    %v1000 = vcvt.s32.f32 %v424
    %v1001 = vcvt.s32.f32 %v425
    %v1002 = vcvt.s32.f32 %v426
    %v1003 = vcvt.s32.f32 %v427
    %v1004 = vcvt.s32.f32 %v428
    %v1005 = vcvt.s32.f32 %v429
    %v1006 = vcvt.s32.f32 %v430
    %v1007 = vcvt.s32.f32 %v431
    %v1008 = vcvt.s32.f32 %v432
    %v1009 = vcvt.s32.f32 %v433
    %v1010 = vcvt.s32.f32 %v434
    %v1011 = vcvt.s32.f32 %v435
    %v1012 = vcvt.s32.f32 %v436
    %v1013 = vcvt.s32.f32 %v437
    %v1014 = vcvt.s32.f32 %v438
    %v1015 = vcvt.s32.f32 %v439
    %v1016 = vcvt.s32.f32 %v440
    %v1017 = vcvt.s32.f32 %v441
    %v1018 = vcvt.s32.f32 %v442
    %v1019 = vcvt.s32.f32 %v443
    %v1020 = vcvt.s32.f32 %v444
    %v1021 = vcvt.s32.f32 %v445
    %v1022 = vcvt.s32.f32 %v446
    %v1023 = vcvt.s32.f32 %v447
    %v1024 = vcvt.s32.f32 %v448
    %v1025 = vcvt.s32.f32 %v449
    %v1026 = vcvt.s32.f32 %v450
    %v1027 = vcvt.s32.f32 %v451
    %v1028 = vcvt.s32.f32 %v452
    %v1029 = vcvt.s32.f32 %v453
    %v1030 = vcvt.s32.f32 %v454
    %v1031 = vcvt.s32.f32 %v455
    %v1032 = vcvt.s32.f32 %v456
    %v1033 = vcvt.s32.f32 %v457
    %v1034 = vcvt.s32.f32 %v458
    %v1035 = vcvt.s32.f32 %v459
    %v1036 = vcvt.s32.f32 %v460
    %v1037 = vcvt.s32.f32 %v461
    %v1038 = vcvt.s32.f32 %v462
    %v1039 = vcvt.s32.f32 %v463
    %v1040 = vcvt.s32.f32 %v464
    %v1041 = vcvt.s32.f32 %v465
    %v1042 = vcvt.s32.f32 %v466
    %v1043 = vcvt.s32.f32 %v467
    %v1044 = vcvt.s32.f32 %v468
    %v1045 = vcvt.s32.f32 %v469
    %v1046 = vcvt.s32.f32 %v470
    %v1047 = vcvt.s32.f32 %v471
    %v1048 = vcvt.s32.f32 %v472
    %v1049 = vcvt.s32.f32 %v473
    %v1050 = vcvt.s32.f32 %v474
    %v1051 = vcvt.s32.f32 %v475
    %v1052 = vcvt.s32.f32 %v476
    %v1053 = vcvt.s32.f32 %v477
    %v1054 = vcvt.s32.f32 %v478
    %v1055 = vcvt.s32.f32 %v479
    %v1056 = vcvt.s32.f32 %v480
    %v1057 = vcvt.s32.f32 %v481
    %v1058 = vcvt.s32.f32 %v482
    %v1059 = vcvt.s32.f32 %v483
    %v1060 = vcvt.s32.f32 %v484
    %v1061 = vcvt.s32.f32 %v485
    %v1062 = vcvt.s32.f32 %v486
    %v1063 = vcvt.s32.f32 %v487
    %v1064 = vcvt.s32.f32 %v488
    %v1065 = vcvt.s32.f32 %v489
    %v1066 = vcvt.s32.f32 %v490
    %v1067 = vcvt.s32.f32 %v491
    %v1068 = vcvt.s32.f32 %v492
    %v1069 = vcvt.s32.f32 %v493
    %v1070 = vcvt.s32.f32 %v494
    %v1071 = vcvt.s32.f32 %v495
    %v1072 = vcvt.s32.f32 %v496
    %v1073 = vcvt.s32.f32 %v497
    %v1074 = vcvt.s32.f32 %v498
    %v1075 = vcvt.s32.f32 %v499
    %v1076 = vcvt.s32.f32 %v500
    %v1077 = vcvt.s32.f32 %v501
    %v1078 = vcvt.s32.f32 %v502
    %v1079 = vcvt.s32.f32 %v503
    %v1080 = vcvt.s32.f32 %v504
    %v1081 = vcvt.s32.f32 %v505
    %v1082 = vcvt.s32.f32 %v506
    %v1083 = vcvt.s32.f32 %v507
    %v1084 = vcvt.s32.f32 %v508
    %v1085 = vcvt.s32.f32 %v509
    %v1086 = vcvt.s32.f32 %v510
    %v1087 = vcvt.s32.f32 %v511
    %v1088 = vcvt.s32.f32 %v512
    %v1089 = vcvt.s32.f32 %v513
    %v1090 = vcvt.s32.f32 %v514
    %v1091 = vcvt.s32.f32 %v515
    %v1092 = vcvt.s32.f32 %v516
    %v1093 = vcvt.s32.f32 %v517
    %v1094 = vcvt.s32.f32 %v518
    %v1095 = vcvt.s32.f32 %v519
    %v1096 = vcvt.s32.f32 %v520
    %v1097 = vcvt.s32.f32 %v521
    %v1098 = vcvt.s32.f32 %v522
    %v1099 = vcvt.s32.f32 %v523
    %v1100 = vcvt.s32.f32 %v524
    %v1101 = vcvt.s32.f32 %v525
    %v1102 = vcvt.s32.f32 %v526
    %v1103 = vcvt.s32.f32 %v527
    %v1104 = vcvt.s32.f32 %v528
    %v1105 = vcvt.s32.f32 %v529
    %v1106 = vcvt.s32.f32 %v530
    %v1107 = vcvt.s32.f32 %v531
    %v1108 = vcvt.s32.f32 %v532
    %v1109 = vcvt.s32.f32 %v533
    %v1110 = vcvt.s32.f32 %v534
    %v1111 = vcvt.s32.f32 %v535
    %v1112 = vcvt.s32.f32 %v536
    %v1113 = vcvt.s32.f32 %v537
    %v1114 = vcvt.s32.f32 %v538
    %v1115 = vcvt.s32.f32 %v539
    %v1116 = vcvt.s32.f32 %v540
    %v1117 = vcvt.s32.f32 %v541
    %v1118 = vcvt.s32.f32 %v542
    %v1119 = vcvt.s32.f32 %v543
    %v1120 = vcvt.s32.f32 %v544
    %v1121 = vcvt.s32.f32 %v545
    %v1122 = vcvt.s32.f32 %v546
    %v1123 = vcvt.s32.f32 %v547
    %v1124 = vcvt.s32.f32 %v548
    %v1125 = vcvt.s32.f32 %v549
    %v1126 = vcvt.s32.f32 %v550
    %v1127 = vcvt.s32.f32 %v551
    %v1128 = vcvt.s32.f32 %v552
    %v1129 = vcvt.s32.f32 %v553
    %v1130 = vcvt.s32.f32 %v554
    %v1131 = vcvt.s32.f32 %v555
    %v1132 = vcvt.s32.f32 %v556
    %v1133 = vcvt.s32.f32 %v557
    %v1134 = vcvt.s32.f32 %v558
    %v1135 = vcvt.s32.f32 %v559
    %v1136 = vcvt.s32.f32 %v560
    %v1137 = vcvt.s32.f32 %v561
    %v1138 = vcvt.s32.f32 %v562
    %v1139 = vcvt.s32.f32 %v563
    %v1140 = vcvt.s32.f32 %v564
    %v1141 = vcvt.s32.f32 %v565
    %v1142 = vcvt.s32.f32 %v566
    %v1143 = vcvt.s32.f32 %v567
    %v1144 = vcvt.s32.f32 %v568
    %v1145 = vcvt.s32.f32 %v569
    %v1146 = vcvt.s32.f32 %v570
    %v1147 = vcvt.s32.f32 %v571
    %v1148 = vcvt.s32.f32 %v572
    %v1149 = vcvt.s32.f32 %v573
    %v1150 = vcvt.s32.f32 %v574
    %v1151 = vcvt.s32.f32 %v575
    %v1152 = vcvt.s32.f32 %v576
    %v1153 = vcvt.s32.f32 %v577
    %v1154 = vcvt.s32.f32 %v578
    %v1155 = vcvt.s32.f32 %v579
    %v1156 = vcvt.s32.f32 %v580
    %v1157 = vcvt.s32.f32 %v581
    %v1158 = vcvt.s32.f32 %v582
    %v1159 = vcvt.s32.f32 %v583
    %v1160 = vcvt.s32.f32 %v584
    %v1161 = vcvt.s32.f32 %v585
    %v1162 = vcvt.s32.f32 %v586
    %v1163 = vcvt.s32.f32 %v587
    %v1164 = vcvt.s32.f32 %v588
    %v1165 = vcvt.s32.f32 %v589
    %v1166 = vcvt.s32.f32 %v590
    %v1167 = vcvt.s32.f32 %v591
    %v1168 = vcvt.s32.f32 %v592
    %v1169 = vcvt.s32.f32 %v593
    %v1170 = vcvt.s32.f32 %v594
    %v1171 = vcvt.s32.f32 %v595
    %v1172 = vcvt.s32.f32 %v596
    %v1173 = vcvt.s32.f32 %v597
    %v1174 = vcvt.s32.f32 %v598
    %v1175 = vcvt.s32.f32 %v599
    %v1176 = vcvt.s32.f32 %v600
    %v1177 = vcvt.s32.f32 %v601
    %v1178 = vcvt.s32.f32 %v602
    %v1179 = vcvt.s32.f32 %v603
    %v1180 = vcvt.s32.f32 %v604
    %v1181 = vcvt.s32.f32 %v605
    %v1182 = vcvt.s32.f32 %v606
    %v1183 = vcvt.s32.f32 %v607
    %v1184 = vcvt.s32.f32 %v608
    %v1185 = vcvt.s32.f32 %v609
    %v1186 = vcvt.s32.f32 %v610
    %v1187 = vcvt.s32.f32 %v611
    %v1188 = vcvt.s32.f32 %v612
    %v1189 = vcvt.s32.f32 %v613
    %v1190 = vcvt.s32.f32 %v614
    %v1191 = vcvt.s32.f32 %v615
    %v1192 = vcvt.s32.f32 %v616
    %v1193 = vcvt.s32.f32 %v617
    %v1194 = vcvt.s32.f32 %v618
    %v1195 = vcvt.s32.f32 %v619
    %v1196 = vcvt.s32.f32 %v620
    %v1197 = vcvt.s32.f32 %v621
    %v1198 = vcvt.s32.f32 %v622
    %v1199 = vcvt.s32.f32 %v623
    %v1200 = vcvt.s32.f32 %v624
    %v1201 = vcvt.s32.f32 %v625
    %v1202 = vcvt.s32.f32 %v626
    %v1203 = vcvt.s32.f32 %v627
    %v1204 = vcvt.s32.f32 %v628
    %v1205 = vcvt.s32.f32 %v629
    %v1206 = vcvt.s32.f32 %v630
    %v1207 = vcvt.s32.f32 %v631
    %v1208 = vcvt.s32.f32 %v632
    %v1209 = vcvt.s32.f32 %v633
    %v1210 = vcvt.s32.f32 %v634
    %v1211 = vcvt.s32.f32 %v635
    %v1212 = vcvt.s32.f32 %v636
    %v1213 = vcvt.s32.f32 %v637
    %v1214 = vcvt.s32.f32 %v638
    %v1215 = vcvt.s32.f32 %v639
    %v1216 = vcvt.s32.f32 %v640
    %v1217 = vcvt.s32.f32 %v641
    %v1218 = vcvt.s32.f32 %v642
    %v1219 = vcvt.s32.f32 %v643
    %v1220 = vcvt.s32.f32 %v644
    %v1221 = vcvt.s32.f32 %v645
    %v1222 = vcvt.s32.f32 %v646
    %v1223 = vcvt.s32.f32 %v647
    %v1224 = vcvt.s32.f32 %v648
    %v1225 = vcvt.s32.f32 %v649
    %v1226 = vcvt.s32.f32 %v650
    %v1227 = vcvt.s32.f32 %v651
    %v1228 = vcvt.s32.f32 %v652
    %v1229 = vcvt.s32.f32 %v653
    %v1230 = vcvt.s32.f32 %v654
    %v1231 = vcvt.s32.f32 %v655
    %v1232 = vcvt.s32.f32 %v656
    %v1233 = vcvt.s32.f32 %v657
    %v1234 = vcvt.s32.f32 %v658
    %v1235 = vcvt.s32.f32 %v659
    %v1236 = vcvt.s32.f32 %v660
    %v1237 = vcvt.s32.f32 %v661
    %v1238 = vcvt.s32.f32 %v662
    %v1239 = vcvt.s32.f32 %v663
    %v1240 = vcvt.s32.f32 %v664
    %v1241 = vcvt.s32.f32 %v665
    %v1242 = vcvt.s32.f32 %v666
    %v1243 = vcvt.s32.f32 %v667
    %v1244 = vcvt.s32.f32 %v668
    %v1245 = vcvt.s32.f32 %v669
    %v1246 = vcvt.s32.f32 %v670
    %v1247 = vcvt.s32.f32 %v671
    %v1248 = vcvt.s32.f32 %v672
    %v1249 = vcvt.s32.f32 %v673
    %v1250 = vcvt.s32.f32 %v674
    %v1251 = vcvt.s32.f32 %v675
    %v1252 = vcvt.s32.f32 %v676
    %v1253 = vcvt.s32.f32 %v677
    %v1254 = vcvt.s32.f32 %v678
    %v1255 = vcvt.s32.f32 %v679
    %v1256 = vcvt.s32.f32 %v680
    %v1257 = vcvt.s32.f32 %v681
    %v1258 = vcvt.s32.f32 %v682
    %v1259 = vcvt.s32.f32 %v683
    %v1260 = vcvt.s32.f32 %v684
    %v1261 = vcvt.s32.f32 %v685
    %v1262 = vcvt.s32.f32 %v686
    %v1263 = vcvt.s32.f32 %v687
    %v1264 = vcvt.s32.f32 %v688
    %v1265 = vcvt.s32.f32 %v689
    %v1266 = vcvt.s32.f32 %v690
    %v1267 = vcvt.s32.f32 %v691
    %v1268 = vcvt.s32.f32 %v692
    %v1269 = vcvt.s32.f32 %v693
    %v1270 = vcvt.s32.f32 %v694
    %v1271 = vcvt.s32.f32 %v695
    %v1272 = vcvt.s32.f32 %v696
    %v1273 = vcvt.s32.f32 %v697
    %v1274 = vcvt.s32.f32 %v698
    %v1275 = vcvt.s32.f32 %v699
    %v1276 = vcvt.s32.f32 %v700
    %v1277 = vcvt.s32.f32 %v701
    %v1278 = vcvt.s32.f32 %v702
    %v1279 = vcvt.s32.f32 %v703
    %v1280 = vcvt.s32.f32 %v704
    %v1281 = vcvt.s32.f32 %v705
    %v1282 = vcvt.s32.f32 %v706
    %v1283 = vcvt.s32.f32 %v707
    %v1284 = vcvt.s32.f32 %v708
    %v1285 = vcvt.s32.f32 %v709
    %v1286 = vcvt.s32.f32 %v710
    %v1287 = vcvt.s32.f32 %v711
    %v1288 = vcvt.s32.f32 %v712
    %v1289 = vcvt.s32.f32 %v713
    %v1290 = vcvt.s32.f32 %v714
    %v1291 = vcvt.s32.f32 %v715
    %v1292 = vcvt.s32.f32 %v716
    %v1293 = vcvt.s32.f32 %v717
    %v1294 = vcvt.s32.f32 %v718
    %v1295 = vcvt.s32.f32 %v719
    %v1296 = vcvt.s32.f32 %v720
    %v1297 = vcvt.s32.f32 %v721
    %v1298 = vcvt.s32.f32 %v722
    %v1299 = vcvt.s32.f32 %v723
    %v1300 = vcvt.s32.f32 %v724
    %v1301 = vcvt.s32.f32 %v725
    %v1302 = vcvt.s32.f32 %v726
    %v1303 = vcvt.s32.f32 %v727
    %v1304 = vcvt.s32.f32 %v728
    %v1305 = vcvt.s32.f32 %v729
    %v1306 = vcvt.s32.f32 %v730
    %v1307 = vcvt.s32.f32 %v731
    %v1308 = vcvt.s32.f32 %v732
    %v1309 = vcvt.s32.f32 %v733
    %v1310 = vcvt.s32.f32 %v734
    %v1311 = vcvt.s32.f32 %v735
    %v1312 = vcvt.s32.f32 %v736
    %v1313 = vcvt.s32.f32 %v737
    %v1314 = vcvt.s32.f32 %v738
    %v1315 = vcvt.s32.f32 %v739
    %v1316 = vcvt.s32.f32 %v740
    %v1317 = vcvt.s32.f32 %v741
    %v1318 = vcvt.s32.f32 %v742
    %v1319 = vcvt.s32.f32 %v743
    %v1320 = vcvt.s32.f32 %v744
    %v1321 = vcvt.s32.f32 %v745
    %v1322 = vcvt.s32.f32 %v746
    %v1323 = vcvt.s32.f32 %v747
    %v1324 = vcvt.s32.f32 %v748
    %v1325 = vcvt.s32.f32 %v749
    %v1326 = vcvt.s32.f32 %v750
    %v1327 = vcvt.s32.f32 %v751
    %v1328 = vcvt.s32.f32 %v752
    %v1329 = vcvt.s32.f32 %v753
    %v1330 = vcvt.s32.f32 %v754
    %v1331 = vcvt.s32.f32 %v755
    %v1332 = vcvt.s32.f32 %v756
    %v1333 = vcvt.s32.f32 %v757
    %v1334 = vcvt.s32.f32 %v758
    %v1335 = vcvt.s32.f32 %v759
    %v1336 = vcvt.s32.f32 %v760
    %v1337 = vcvt.s32.f32 %v761
    %v1338 = vcvt.s32.f32 %v762
    %v1339 = vcvt.s32.f32 %v763
    %v1340 = vcvt.s32.f32 %v764
    %v1341 = vcvt.s32.f32 %v765
    %v1342 = vcvt.s32.f32 %v766
    %v1343 = vcvt.s32.f32 %v767
    %v1344 = vcvt.s32.f32 %v768
    %v1345 = vcvt.s32.f32 %v769
    %v1346 = vcvt.s32.f32 %v770
    %v1347 = vcvt.s32.f32 %v771
    %v1348 = vcvt.s32.f32 %v772
    %v1349 = vcvt.s32.f32 %v773
    %v1350 = vcvt.s32.f32 %v774
    %v1351 = vcvt.s32.f32 %v775
    %v1352 = vcvt.s32.f32 %v776
    %v1353 = vcvt.s32.f32 %v777
    %v1354 = vcvt.s32.f32 %v778
    %v1355 = vcvt.s32.f32 %v779
    %v1356 = vcvt.s32.f32 %v780
    %v1357 = vcvt.s32.f32 %v781
    %v1358 = vcvt.s32.f32 %v782
    %v1359 = vcvt.s32.f32 %v783
    %v1360 = vcvt.s32.f32 %v784
    %v1361 = vcvt.s32.f32 %v785
    %v1362 = vcvt.s32.f32 %v786
    %v1363 = vcvt.s32.f32 %v787
    %v1364 = vcvt.s32.f32 %v788
    %v1365 = vcvt.s32.f32 %v789
    %v1366 = vcvt.s32.f32 %v790
    %v1367 = vcvt.s32.f32 %v791
    %v1368 = vcvt.s32.f32 %v792
    %v1369 = vcvt.s32.f32 %v793
    %v1370 = vcvt.s32.f32 %v794
    %v1371 = vcvt.s32.f32 %v795
    %v1372 = vcvt.s32.f32 %v796
    %v1373 = vcvt.s32.f32 %v797
    %v1374 = vcvt.s32.f32 %v798
    %v1375 = vcvt.s32.f32 %v799
    %v1376 = vcvt.s32.f32 %v800
    %v1377 = vcvt.s32.f32 %v801
    %v1378 = vcvt.s32.f32 %v802
    %v1379 = vcvt.s32.f32 %v803
    %v1380 = vcvt.s32.f32 %v804
    %v1381 = vcvt.s32.f32 %v805
    %v1382 = vcvt.s32.f32 %v806
    %v1383 = vcvt.s32.f32 %v807
    %v1384 = vcvt.s32.f32 %v808
    %v1385 = vcvt.s32.f32 %v809
    %v1386 = vcvt.s32.f32 %v810
    %v1387 = vcvt.s32.f32 %v811
    %v1388 = vcvt.s32.f32 %v812
    %v1389 = vcvt.s32.f32 %v813
    %v1390 = vcvt.s32.f32 %v814
    %v1391 = vcvt.s32.f32 %v815
    %v1392 = vcvt.s32.f32 %v816
    %v1393 = vcvt.s32.f32 %v817
    %v1394 = vcvt.s32.f32 %v818
    %v1395 = vcvt.s32.f32 %v819
    %v1396 = vcvt.s32.f32 %v820
    %v1397 = vcvt.s32.f32 %v821
    %v1398 = vcvt.s32.f32 %v822
    %v1399 = vcvt.s32.f32 %v823
    %v1400 = vcvt.s32.f32 %v824
    %v1401 = vcvt.s32.f32 %v825
    %v1402 = vcvt.s32.f32 %v826
    %v1403 = vcvt.s32.f32 %v827
    %v1404 = vcvt.s32.f32 %v828
    %v1405 = vcvt.s32.f32 %v829
    %v1406 = vcvt.s32.f32 %v830
    %v1407 = vcvt.s32.f32 %v831
    %v1408 = vcvt.s32.f32 %v832
    %v1409 = vcvt.s32.f32 %v833
    %v1410 = vcvt.s32.f32 %v834
    %v1411 = vcvt.s32.f32 %v835
    %v1412 = vcvt.s32.f32 %v836
    %v1413 = vcvt.s32.f32 %v837
    %v1414 = vcvt.s32.f32 %v838
    %v1415 = vcvt.s32.f32 %v839
    %v1416 = vcvt.s32.f32 %v840
    %v1417 = vcvt.s32.f32 %v841
    %v1418 = vcvt.s32.f32 %v842
    %v1419 = vcvt.s32.f32 %v843
    %v1420 = vcvt.s32.f32 %v844
    %v1421 = vcvt.s32.f32 %v845
    %v1422 = vcvt.s32.f32 %v846
    %v1423 = vcvt.s32.f32 %v847
    %v1424 = vcvt.s32.f32 %v848
    %v1425 = vcvt.s32.f32 %v849
    %v1426 = vcvt.s32.f32 %v850
    %v1427 = vcvt.s32.f32 %v851
    %v1428 = vcvt.s32.f32 %v852
    %v1429 = vcvt.s32.f32 %v853
    %v1430 = vcvt.s32.f32 %v854
    %v1431 = vcvt.s32.f32 %v855
    %v1432 = vcvt.s32.f32 %v856
    %v1433 = vcvt.s32.f32 %v857
    %v1434 = vcvt.s32.f32 %v858
    %v1435 = vcvt.s32.f32 %v859
    %v1436 = vcvt.s32.f32 %v860
    %v1437 = vcvt.s32.f32 %v861
    %v1438 = vcvt.s32.f32 %v862
    %v1439 = vcvt.s32.f32 %v863
    %v1440 = vcvt.s32.f32 %v864
    %v1441 = vcvt.s32.f32 %v865
    %v1442 = vcvt.s32.f32 %v866
    %v1443 = vcvt.s32.f32 %v867
    %v1444 = vcvt.s32.f32 %v868
    %v1445 = vcvt.s32.f32 %v869
    %v1446 = vcvt.s32.f32 %v870
    %v1447 = vcvt.s32.f32 %v871
    %v1448 = vcvt.s32.f32 %v872
    %v1449 = vcvt.s32.f32 %v873
    %v1450 = vcvt.s32.f32 %v874
    %v1451 = vcvt.s32.f32 %v875
    %v1452 = vcvt.s32.f32 %v876
    %v1453 = vcvt.s32.f32 %v877
    %v1454 = vcvt.s32.f32 %v878
    %v1455 = vcvt.s32.f32 %v879
    %v1456 = vcvt.s32.f32 %v880
    %v1457 = vcvt.s32.f32 %v881
    %v1458 = vcvt.s32.f32 %v882
    %v1459 = vcvt.s32.f32 %v883
    %v1460 = vcvt.s32.f32 %v884
    %v1461 = vcvt.s32.f32 %v885
    %v1462 = vcvt.s32.f32 %v886
    %v1463 = vcvt.s32.f32 %v887
    %v1464 = vcvt.s32.f32 %v888
    %v1465 = vcvt.s32.f32 %v889
    %v1466 = vcvt.s32.f32 %v890
    %v1467 = vcvt.s32.f32 %v891
    %v1468 = vcvt.s32.f32 %v892
    %v1469 = vcvt.s32.f32 %v893
    %v1470 = vcvt.s32.f32 %v894
    %v1471 = vcvt.s32.f32 %v895
    %v1472 = vcvt.s32.f32 %v896
    %v1473 = vcvt.s32.f32 %v897
    %v1474 = vcvt.s32.f32 %v898
    %v1475 = vcvt.s32.f32 %v899
    %v1476 = vcvt.s32.f32 %v900
    %v1477 = vcvt.s32.f32 %v901
    %v1478 = vcvt.s32.f32 %v902
    %v1479 = vcvt.s32.f32 %v903
    %v1480 = vcvt.s32.f32 %v904
    %v1481 = vcvt.s32.f32 %v905
    %v1482 = vcvt.s32.f32 %v906
    %v1483 = vcvt.s32.f32 %v907
    %v1484 = vcvt.s32.f32 %v908
    %v1485 = vcvt.s32.f32 %v909
    %v1486 = vcvt.s32.f32 %v910
    %v1487 = vcvt.s32.f32 %v911
    %v1488 = vcvt.s32.f32 %v912
    %v1489 = vcvt.s32.f32 %v913
    %v1490 = vcvt.s32.f32 %v914
    %v1491 = vcvt.s32.f32 %v915
    %v1492 = vcvt.s32.f32 %v916
    %v1493 = vcvt.s32.f32 %v917
    %v1494 = vcvt.s32.f32 %v918
    %v1495 = vcvt.s32.f32 %v919
    %v1496 = vcvt.s32.f32 %v920
    %v1497 = vcvt.s32.f32 %v921
    %v1498 = vcvt.s32.f32 %v922
    %v1499 = vcvt.s32.f32 %v923
    %v1500 = vcvt.s32.f32 %v924
    %v1501 = vcvt.s32.f32 %v925
    %v1502 = vcvt.s32.f32 %v926
    %v1503 = vcvt.s32.f32 %v927
    %v1504 = vcvt.s32.f32 %v928
    %v1505 = vcvt.s32.f32 %v929
    %v1506 = vcvt.s32.f32 %v930
    %v1507 = vcvt.s32.f32 %v931
    %v1508 = vcvt.s32.f32 %v932
    %v1509 = vcvt.s32.f32 %v933
    %v1510 = vcvt.s32.f32 %v934
    %v1511 = vcvt.s32.f32 %v935
    %v1512 = vcvt.s32.f32 %v936
    %v1513 = vcvt.s32.f32 %v937
    %v1514 = vcvt.s32.f32 %v938
    %v1515 = vcvt.s32.f32 %v939
    %v1516 = vcvt.s32.f32 %v940
    %v1517 = vcvt.s32.f32 %v941
    %v1518 = vcvt.s32.f32 %v942
    %v1519 = vcvt.s32.f32 %v943
    %v1520 = vcvt.s32.f32 %v944
    %v1521 = vcvt.s32.f32 %v945
    %v1522 = vcvt.s32.f32 %v946
    %v1523 = vcvt.s32.f32 %v947
    %v1524 = vcvt.s32.f32 %v948
    %v1525 = vcvt.s32.f32 %v949
    %v1526 = vcvt.s32.f32 %v950
    %v1527 = vcvt.s32.f32 %v951
    %v1528 = vcvt.s32.f32 %v952
    %v1529 = vcvt.s32.f32 %v953
    %v1530 = vcvt.s32.f32 %v954
    %v1531 = vcvt.s32.f32 %v955
    %v1532 = vcvt.s32.f32 %v956
    %v1533 = vcvt.s32.f32 %v957
    %v1534 = vcvt.s32.f32 %v958
    %v1535 = vcvt.s32.f32 %v959
    %v1536 = vcvt.s32.f32 %v960
    %v1537 = vcvt.s32.f32 %v961
    %v1538 = vcvt.s32.f32 %v962
    %v1539 = vcvt.s32.f32 %v963
    %v1540 = vcvt.s32.f32 %v964
    %v1541 = vcvt.s32.f32 %v965
    %v1542 = vcvt.s32.f32 %v966
    %v1543 = vcvt.s32.f32 %v967
    %v1544 = vcvt.s32.f32 %v968
    %v1545 = vcvt.s32.f32 %v969
    %v1546 = vcvt.s32.f32 %v970
    %v1547 = vcvt.s32.f32 %v971
    %v1548 = vcvt.s32.f32 %v972
    %v1549 = vcvt.s32.f32 %v973
    %v1550 = vcvt.s32.f32 %v974
    %v1551 = vcvt.s32.f32 %v975
    %v1552 = vcvt.s32.f32 %v976
    %v1553 = vcvt.s32.f32 %v977
    %v1554 = vcvt.s32.f32 %v978
    %v1555 = vcvt.s32.f32 %v979
    %v1556 = vcvt.s32.f32 %v980
    %v1557 = vcvt.s32.f32 %v981
    %v1558 = vcvt.s32.f32 %v982
    %v1559 = vcvt.s32.f32 %v983
    %v1560 = vcvt.s32.f32 %v984
    %v1561 = vcvt.s32.f32 %v985
    %v1562 = vcvt.s32.f32 %v986
    %v1563 = vcvt.s32.f32 %v987
    %v1564 = vcvt.s32.f32 %v988
    %v1565 = vcvt.s32.f32 %v989
    %v1566 = vcvt.s32.f32 %v990
    %v1567 = vcvt.s32.f32 %v991
    %v1568 = vpack.c.bf16 %v998, %v992
    %v1569 = vpack.c.bf16 %v999, %v993
    %v1570 = vpack.c.bf16 %v1000, %v994
    %v1571 = vpack.c.bf16 %v1001, %v995
    %v1572 = vpack.c.bf16 %v1002, %v996
    %v1573 = vpack.c.bf16 %v1003, %v997
    %v1574 = vpack.c.bf16 %v1010, %v1004
    %v1575 = vpack.c.bf16 %v1011, %v1005
    %v1576 = vpack.c.bf16 %v1012, %v1006
    %v1577 = vpack.c.bf16 %v1013, %v1007
    %v1578 = vpack.c.bf16 %v1014, %v1008
    %v1579 = vpack.c.bf16 %v1015, %v1009
    %v1580 = vpack.c.bf16 %v1022, %v1016
    %v1581 = vpack.c.bf16 %v1023, %v1017
    %v1582 = vpack.c.bf16 %v1024, %v1018
    %v1583 = vpack.c.bf16 %v1025, %v1019
    %v1584 = vpack.c.bf16 %v1026, %v1020
    %v1585 = vpack.c.bf16 %v1027, %v1021
    %v1586 = vpack.c.bf16 %v1034, %v1028
    %v1587 = vpack.c.bf16 %v1035, %v1029
    %v1588 = vpack.c.bf16 %v1036, %v1030
    %v1589 = vpack.c.bf16 %v1037, %v1031
    %v1590 = vpack.c.bf16 %v1038, %v1032
    %v1591 = vpack.c.bf16 %v1039, %v1033
    %v1592 = vpack.c.bf16 %v1046, %v1040
    %v1593 = vpack.c.bf16 %v1047, %v1041
    %v1594 = vpack.c.bf16 %v1048, %v1042
    %v1595 = vpack.c.bf16 %v1049, %v1043
    %v1596 = vpack.c.bf16 %v1050, %v1044
    %v1597 = vpack.c.bf16 %v1051, %v1045
    %v1598 = vpack.c.bf16 %v1058, %v1052
    %v1599 = vpack.c.bf16 %v1059, %v1053
    %v1600 = vpack.c.bf16 %v1060, %v1054
    %v1601 = vpack.c.bf16 %v1061, %v1055
    %v1602 = vpack.c.bf16 %v1062, %v1056
    %v1603 = vpack.c.bf16 %v1063, %v1057
    %v1604 = vpack.c.bf16 %v1070, %v1064
    %v1605 = vpack.c.bf16 %v1071, %v1065
    %v1606 = vpack.c.bf16 %v1072, %v1066
    %v1607 = vpack.c.bf16 %v1073, %v1067
    %v1608 = vpack.c.bf16 %v1074, %v1068
    %v1609 = vpack.c.bf16 %v1075, %v1069
    %v1610 = vpack.c.bf16 %v1082, %v1076
    %v1611 = vpack.c.bf16 %v1083, %v1077
    %v1612 = vpack.c.bf16 %v1084, %v1078
    %v1613 = vpack.c.bf16 %v1085, %v1079
    %v1614 = vpack.c.bf16 %v1086, %v1080
    %v1615 = vpack.c.bf16 %v1087, %v1081
    %v1616 = vpack.c.bf16 %v1094, %v1088
    %v1617 = vpack.c.bf16 %v1095, %v1089
    %v1618 = vpack.c.bf16 %v1096, %v1090
    %v1619 = vpack.c.bf16 %v1097, %v1091
    %v1620 = vpack.c.bf16 %v1098, %v1092
    %v1621 = vpack.c.bf16 %v1099, %v1093
    %v1622 = vpack.c.bf16 %v1106, %v1100
    %v1623 = vpack.c.bf16 %v1107, %v1101
    %v1624 = vpack.c.bf16 %v1108, %v1102
    %v1625 = vpack.c.bf16 %v1109, %v1103
    %v1626 = vpack.c.bf16 %v1110, %v1104
    %v1627 = vpack.c.bf16 %v1111, %v1105
    %v1628 = vpack.c.bf16 %v1118, %v1112
    %v1629 = vpack.c.bf16 %v1119, %v1113
    %v1630 = vpack.c.bf16 %v1120, %v1114
    %v1631 = vpack.c.bf16 %v1121, %v1115
    %v1632 = vpack.c.bf16 %v1122, %v1116
    %v1633 = vpack.c.bf16 %v1123, %v1117
    %v1634 = vpack.c.bf16 %v1130, %v1124
    %v1635 = vpack.c.bf16 %v1131, %v1125
    %v1636 = vpack.c.bf16 %v1132, %v1126
    %v1637 = vpack.c.bf16 %v1133, %v1127
    %v1638 = vpack.c.bf16 %v1134, %v1128
    %v1639 = vpack.c.bf16 %v1135, %v1129
    %v1640 = vpack.c.bf16 %v1142, %v1136
    %v1641 = vpack.c.bf16 %v1143, %v1137
    %v1642 = vpack.c.bf16 %v1144, %v1138
    %v1643 = vpack.c.bf16 %v1145, %v1139
    %v1644 = vpack.c.bf16 %v1146, %v1140
    %v1645 = vpack.c.bf16 %v1147, %v1141
    %v1646 = vpack.c.bf16 %v1154, %v1148
    %v1647 = vpack.c.bf16 %v1155, %v1149
    %v1648 = vpack.c.bf16 %v1156, %v1150
    %v1649 = vpack.c.bf16 %v1157, %v1151
    %v1650 = vpack.c.bf16 %v1158, %v1152
    %v1651 = vpack.c.bf16 %v1159, %v1153
    %v1652 = vpack.c.bf16 %v1166, %v1160
    %v1653 = vpack.c.bf16 %v1167, %v1161
    %v1654 = vpack.c.bf16 %v1168, %v1162
    %v1655 = vpack.c.bf16 %v1169, %v1163
    %v1656 = vpack.c.bf16 %v1170, %v1164
    %v1657 = vpack.c.bf16 %v1171, %v1165
    %v1658 = vpack.c.bf16 %v1178, %v1172
    %v1659 = vpack.c.bf16 %v1179, %v1173
    %v1660 = vpack.c.bf16 %v1180, %v1174
    %v1661 = vpack.c.bf16 %v1181, %v1175
    %v1662 = vpack.c.bf16 %v1182, %v1176
    %v1663 = vpack.c.bf16 %v1183, %v1177
    %v1664 = vpack.c.bf16 %v1190, %v1184
    %v1665 = vpack.c.bf16 %v1191, %v1185
    %v1666 = vpack.c.bf16 %v1192, %v1186
    %v1667 = vpack.c.bf16 %v1193, %v1187
    %v1668 = vpack.c.bf16 %v1194, %v1188
    %v1669 = vpack.c.bf16 %v1195, %v1189
    %v1670 = vpack.c.bf16 %v1202, %v1196
    %v1671 = vpack.c.bf16 %v1203, %v1197
    %v1672 = vpack.c.bf16 %v1204, %v1198
    %v1673 = vpack.c.bf16 %v1205, %v1199
    %v1674 = vpack.c.bf16 %v1206, %v1200
    %v1675 = vpack.c.bf16 %v1207, %v1201
    %v1676 = vpack.c.bf16 %v1214, %v1208
    %v1677 = vpack.c.bf16 %v1215, %v1209
    %v1678 = vpack.c.bf16 %v1216, %v1210
    %v1679 = vpack.c.bf16 %v1217, %v1211
    %v1680 = vpack.c.bf16 %v1218, %v1212
    %v1681 = vpack.c.bf16 %v1219, %v1213
    %v1682 = vpack.c.bf16 %v1226, %v1220
    %v1683 = vpack.c.bf16 %v1227, %v1221
    %v1684 = vpack.c.bf16 %v1228, %v1222
    %v1685 = vpack.c.bf16 %v1229, %v1223
    %v1686 = vpack.c.bf16 %v1230, %v1224
    %v1687 = vpack.c.bf16 %v1231, %v1225
    %v1688 = vpack.c.bf16 %v1238, %v1232
    %v1689 = vpack.c.bf16 %v1239, %v1233
    %v1690 = vpack.c.bf16 %v1240, %v1234
    %v1691 = vpack.c.bf16 %v1241, %v1235
    %v1692 = vpack.c.bf16 %v1242, %v1236
    %v1693 = vpack.c.bf16 %v1243, %v1237
    %v1694 = vpack.c.bf16 %v1250, %v1244
    %v1695 = vpack.c.bf16 %v1251, %v1245
    %v1696 = vpack.c.bf16 %v1252, %v1246
    %v1697 = vpack.c.bf16 %v1253, %v1247
    %v1698 = vpack.c.bf16 %v1254, %v1248
    %v1699 = vpack.c.bf16 %v1255, %v1249
    %v1700 = vpack.c.bf16 %v1262, %v1256
    %v1701 = vpack.c.bf16 %v1263, %v1257
    %v1702 = vpack.c.bf16 %v1264, %v1258
    %v1703 = vpack.c.bf16 %v1265, %v1259
    %v1704 = vpack.c.bf16 %v1266, %v1260
    %v1705 = vpack.c.bf16 %v1267, %v1261
    %v1706 = vpack.c.bf16 %v1274, %v1268
    %v1707 = vpack.c.bf16 %v1275, %v1269
    %v1708 = vpack.c.bf16 %v1276, %v1270
    %v1709 = vpack.c.bf16 %v1277, %v1271
    %v1710 = vpack.c.bf16 %v1278, %v1272
    %v1711 = vpack.c.bf16 %v1279, %v1273
    %v1712 = vpack.c.bf16 %v1286, %v1280
    %v1713 = vpack.c.bf16 %v1287, %v1281
    %v1714 = vpack.c.bf16 %v1288, %v1282
    %v1715 = vpack.c.bf16 %v1289, %v1283
    %v1716 = vpack.c.bf16 %v1290, %v1284
    %v1717 = vpack.c.bf16 %v1291, %v1285
    %v1718 = vpack.c.bf16 %v1298, %v1292
    %v1719 = vpack.c.bf16 %v1299, %v1293
    %v1720 = vpack.c.bf16 %v1300, %v1294
    %v1721 = vpack.c.bf16 %v1301, %v1295
    %v1722 = vpack.c.bf16 %v1302, %v1296
    %v1723 = vpack.c.bf16 %v1303, %v1297
    %v1724 = vpack.c.bf16 %v1310, %v1304
    %v1725 = vpack.c.bf16 %v1311, %v1305
    %v1726 = vpack.c.bf16 %v1312, %v1306
    %v1727 = vpack.c.bf16 %v1313, %v1307
    %v1728 = vpack.c.bf16 %v1314, %v1308
    %v1729 = vpack.c.bf16 %v1315, %v1309
    %v1730 = vpack.c.bf16 %v1322, %v1316
    %v1731 = vpack.c.bf16 %v1323, %v1317
    %v1732 = vpack.c.bf16 %v1324, %v1318
    %v1733 = vpack.c.bf16 %v1325, %v1319
    %v1734 = vpack.c.bf16 %v1326, %v1320
    %v1735 = vpack.c.bf16 %v1327, %v1321
    %v1736 = vpack.c.bf16 %v1334, %v1328
    %v1737 = vpack.c.bf16 %v1335, %v1329
    %v1738 = vpack.c.bf16 %v1336, %v1330
    %v1739 = vpack.c.bf16 %v1337, %v1331
    %v1740 = vpack.c.bf16 %v1338, %v1332
    %v1741 = vpack.c.bf16 %v1339, %v1333
    %v1742 = vpack.c.bf16 %v1346, %v1340
    %v1743 = vpack.c.bf16 %v1347, %v1341
    %v1744 = vpack.c.bf16 %v1348, %v1342
    %v1745 = vpack.c.bf16 %v1349, %v1343
    %v1746 = vpack.c.bf16 %v1350, %v1344
    %v1747 = vpack.c.bf16 %v1351, %v1345
    %v1748 = vpack.c.bf16 %v1358, %v1352
    %v1749 = vpack.c.bf16 %v1359, %v1353
    %v1750 = vpack.c.bf16 %v1360, %v1354
    %v1751 = vpack.c.bf16 %v1361, %v1355
    %v1752 = vpack.c.bf16 %v1362, %v1356
    %v1753 = vpack.c.bf16 %v1363, %v1357
    %v1754 = vpack.c.bf16 %v1370, %v1364
    %v1755 = vpack.c.bf16 %v1371, %v1365
    %v1756 = vpack.c.bf16 %v1372, %v1366
    %v1757 = vpack.c.bf16 %v1373, %v1367
    %v1758 = vpack.c.bf16 %v1374, %v1368
    %v1759 = vpack.c.bf16 %v1375, %v1369
    %v1760 = vpack.c.bf16 %v1382, %v1376
    %v1761 = vpack.c.bf16 %v1383, %v1377
    %v1762 = vpack.c.bf16 %v1384, %v1378
    %v1763 = vpack.c.bf16 %v1385, %v1379
    %v1764 = vpack.c.bf16 %v1386, %v1380
    %v1765 = vpack.c.bf16 %v1387, %v1381
    %v1766 = vpack.c.bf16 %v1394, %v1388
    %v1767 = vpack.c.bf16 %v1395, %v1389
    %v1768 = vpack.c.bf16 %v1396, %v1390
    %v1769 = vpack.c.bf16 %v1397, %v1391
    %v1770 = vpack.c.bf16 %v1398, %v1392
    %v1771 = vpack.c.bf16 %v1399, %v1393
    %v1772 = vpack.c.bf16 %v1406, %v1400
    %v1773 = vpack.c.bf16 %v1407, %v1401
    %v1774 = vpack.c.bf16 %v1408, %v1402
    %v1775 = vpack.c.bf16 %v1409, %v1403
    %v1776 = vpack.c.bf16 %v1410, %v1404
    %v1777 = vpack.c.bf16 %v1411, %v1405
    %v1778 = vpack.c.bf16 %v1418, %v1412
    %v1779 = vpack.c.bf16 %v1419, %v1413
    %v1780 = vpack.c.bf16 %v1420, %v1414
    %v1781 = vpack.c.bf16 %v1421, %v1415
    %v1782 = vpack.c.bf16 %v1422, %v1416
    %v1783 = vpack.c.bf16 %v1423, %v1417
    %v1784 = vpack.c.bf16 %v1430, %v1424
    %v1785 = vpack.c.bf16 %v1431, %v1425
    %v1786 = vpack.c.bf16 %v1432, %v1426
    %v1787 = vpack.c.bf16 %v1433, %v1427
    %v1788 = vpack.c.bf16 %v1434, %v1428
    %v1789 = vpack.c.bf16 %v1435, %v1429
    %v1790 = vpack.c.bf16 %v1442, %v1436
    %v1791 = vpack.c.bf16 %v1443, %v1437
    %v1792 = vpack.c.bf16 %v1444, %v1438
    %v1793 = vpack.c.bf16 %v1445, %v1439
    %v1794 = vpack.c.bf16 %v1446, %v1440
    %v1795 = vpack.c.bf16 %v1447, %v1441
    %v1796 = vpack.c.bf16 %v1454, %v1448
    %v1797 = vpack.c.bf16 %v1455, %v1449
    %v1798 = vpack.c.bf16 %v1456, %v1450
    %v1799 = vpack.c.bf16 %v1457, %v1451
    %v1800 = vpack.c.bf16 %v1458, %v1452
    %v1801 = vpack.c.bf16 %v1459, %v1453
    %v1802 = vpack.c.bf16 %v1466, %v1460
    %v1803 = vpack.c.bf16 %v1467, %v1461
    %v1804 = vpack.c.bf16 %v1468, %v1462
    %v1805 = vpack.c.bf16 %v1469, %v1463
    %v1806 = vpack.c.bf16 %v1470, %v1464
    %v1807 = vpack.c.bf16 %v1471, %v1465
    %v1808 = vpack.c.bf16 %v1478, %v1472
    %v1809 = vpack.c.bf16 %v1479, %v1473
    %v1810 = vpack.c.bf16 %v1480, %v1474
    %v1811 = vpack.c.bf16 %v1481, %v1475
    %v1812 = vpack.c.bf16 %v1482, %v1476
    %v1813 = vpack.c.bf16 %v1483, %v1477
    %v1814 = vpack.c.bf16 %v1490, %v1484
    %v1815 = vpack.c.bf16 %v1491, %v1485
    %v1816 = vpack.c.bf16 %v1492, %v1486
    %v1817 = vpack.c.bf16 %v1493, %v1487
    %v1818 = vpack.c.bf16 %v1494, %v1488
    %v1819 = vpack.c.bf16 %v1495, %v1489
    %v1820 = vpack.c.bf16 %v1502, %v1496
    %v1821 = vpack.c.bf16 %v1503, %v1497
    %v1822 = vpack.c.bf16 %v1504, %v1498
    %v1823 = vpack.c.bf16 %v1505, %v1499
    %v1824 = vpack.c.bf16 %v1506, %v1500
    %v1825 = vpack.c.bf16 %v1507, %v1501
    %v1826 = vpack.c.bf16 %v1514, %v1508
    %v1827 = vpack.c.bf16 %v1515, %v1509
    %v1828 = vpack.c.bf16 %v1516, %v1510
    %v1829 = vpack.c.bf16 %v1517, %v1511
    %v1830 = vpack.c.bf16 %v1518, %v1512
    %v1831 = vpack.c.bf16 %v1519, %v1513
    %v1832 = vpack.c.bf16 %v1526, %v1520
    %v1833 = vpack.c.bf16 %v1527, %v1521
    %v1834 = vpack.c.bf16 %v1528, %v1522
    %v1835 = vpack.c.bf16 %v1529, %v1523
    %v1836 = vpack.c.bf16 %v1530, %v1524
    %v1837 = vpack.c.bf16 %v1531, %v1525
    %v1838 = vpack.c.bf16 %v1538, %v1532
    %v1839 = vpack.c.bf16 %v1539, %v1533
    %v1840 = vpack.c.bf16 %v1540, %v1534
    %v1841 = vpack.c.bf16 %v1541, %v1535
    %v1842 = vpack.c.bf16 %v1542, %v1536
    %v1843 = vpack.c.bf16 %v1543, %v1537
    %v1844 = vpack.c.bf16 %v1550, %v1544
    %v1845 = vpack.c.bf16 %v1551, %v1545
    %v1846 = vpack.c.bf16 %v1552, %v1546
    %v1847 = vpack.c.bf16 %v1553, %v1547
    %v1848 = vpack.c.bf16 %v1554, %v1548
    %v1849 = vpack.c.bf16 %v1555, %v1549
    %v1850 = vpack.c.bf16 %v1562, %v1556
    %v1851 = vpack.c.bf16 %v1563, %v1557
    %v1852 = vpack.c.bf16 %v1564, %v1558
    %v1853 = vpack.c.bf16 %v1565, %v1559
    %v1854 = vpack.c.bf16 %v1566, %v1560
    %v1855 = vpack.c.bf16 %v1567, %v1561
    %1856 = vmatpush.bf16.msra.mxu0 %v1610
    %1857 = vmatpush.bf16.msra.mxu0 %v1604
    %1858 = vmatpush.bf16.msra.mxu0 %v1598
    %1859 = vmatpush.bf16.msra.mxu0 %v1592
    %1860 = vmatpush.bf16.msra.mxu0 %v1586
    %1861 = vmatpush.bf16.msra.mxu0 %v1580
    %1862 = vmatpush.bf16.msra.mxu0 %v1574
    %1863 = vmatpush.bf16.msra.mxu0 %v1568
    %1864 = vmatmul.bf16.gmra.mxu0 %v266
    %v1865 = vpop.f32.mrf.mxu0
    %v1866 = vadd.f32 0.0, %v1865
    %v1867 = vpop.f32.mrf.mxu0
    %1868 = vdwg.mxu0
    %1869 = vmatpush.bf16.msra.mxu0 %v1658
    %1870 = vmatpush.bf16.msra.mxu0 %v1652
    %1871 = vmatpush.bf16.msra.mxu0 %v1646
    %1872 = vmatpush.bf16.msra.mxu0 %v1640
    %1873 = vmatpush.bf16.msra.mxu0 %v1634
    %1874 = vmatpush.bf16.msra.mxu0 %v1628
    %1875 = vmatpush.bf16.msra.mxu0 %v1622
    %1876 = vmatpush.bf16.msra.mxu0 %v1616
    %1877 = vmatmul.bf16.gmra.mxu0 %v267
    %v1878 = vpop.f32.mrf.mxu0
    %v1879 = vadd.f32 %v1866, %v1878
    %v1880 = vpop.f32.mrf.mxu0
    %1881 = vdwg.mxu0
    %1882 = vmatpush.bf16.msra.mxu0 %v1706
    %1883 = vmatpush.bf16.msra.mxu0 %v1700
    %1884 = vmatpush.bf16.msra.mxu0 %v1694
    %1885 = vmatpush.bf16.msra.mxu0 %v1688
    %1886 = vmatpush.bf16.msra.mxu0 %v1682
    %1887 = vmatpush.bf16.msra.mxu0 %v1676
    %1888 = vmatpush.bf16.msra.mxu0 %v1670
    %1889 = vmatpush.bf16.msra.mxu0 %v1664
    %1890 = vmatmul.bf16.gmra.mxu0 %v268
    %v1891 = vpop.f32.mrf.mxu0
    %v1892 = vadd.f32 %v1879, %v1891
    %v1893 = vpop.f32.mrf.mxu0
    %1894 = vdwg.mxu0
    %1895 = vmatpush.bf16.msra.mxu0 %v1754
    %1896 = vmatpush.bf16.msra.mxu0 %v1748
    %1897 = vmatpush.bf16.msra.mxu0 %v1742
    %1898 = vmatpush.bf16.msra.mxu0 %v1736
    %1899 = vmatpush.bf16.msra.mxu0 %v1730
    %1900 = vmatpush.bf16.msra.mxu0 %v1724
    %1901 = vmatpush.bf16.msra.mxu0 %v1718
    %1902 = vmatpush.bf16.msra.mxu0 %v1712
    %1903 = vmatmul.bf16.gmra.mxu0 %v269
    %v1904 = vpop.f32.mrf.mxu0
    %v1905 = vadd.f32 %v1892, %v1904
    %v1906 = vpop.f32.mrf.mxu0
    %1907 = vdwg.mxu0
    %1908 = vmatpush.bf16.msra.mxu0 %v1802
    %1909 = vmatpush.bf16.msra.mxu0 %v1796
    %1910 = vmatpush.bf16.msra.mxu0 %v1790
    %1911 = vmatpush.bf16.msra.mxu0 %v1784
    %1912 = vmatpush.bf16.msra.mxu0 %v1778
    %1913 = vmatpush.bf16.msra.mxu0 %v1772
    %1914 = vmatpush.bf16.msra.mxu0 %v1766
    %1915 = vmatpush.bf16.msra.mxu0 %v1760
    %1916 = vmatmul.bf16.gmra.mxu0 %v270
    %v1917 = vpop.f32.mrf.mxu0
    %v1918 = vadd.f32 %v1905, %v1917
    %v1919 = vpop.f32.mrf.mxu0
    %1920 = vdwg.mxu0
    %1921 = vmatpush.bf16.msra.mxu0 %v1850
    %1922 = vmatpush.bf16.msra.mxu0 %v1844
    %1923 = vmatpush.bf16.msra.mxu0 %v1838
    %1924 = vmatpush.bf16.msra.mxu0 %v1832
    %1925 = vmatpush.bf16.msra.mxu0 %v1826
    %1926 = vmatpush.bf16.msra.mxu0 %v1820
    %1927 = vmatpush.bf16.msra.mxu0 %v1814
    %1928 = vmatpush.bf16.msra.mxu0 %v1808
    %1929 = vmatmul.bf16.gmra.mxu0 %v271
    %v1930 = vpop.f32.mrf.mxu0
    %v1931 = vadd.f32 %v1918, %v1930
    %v1932 = vpop.f32.mrf.mxu0
    %1933 = vdwg.mxu0
    %1934 = vmatpush.bf16.msra.mxu0 %v1611
    %1935 = vmatpush.bf16.msra.mxu0 %v1605
    %1936 = vmatpush.bf16.msra.mxu0 %v1599
    %1937 = vmatpush.bf16.msra.mxu0 %v1593
    %1938 = vmatpush.bf16.msra.mxu0 %v1587
    %1939 = vmatpush.bf16.msra.mxu0 %v1581
    %1940 = vmatpush.bf16.msra.mxu0 %v1575
    %1941 = vmatpush.bf16.msra.mxu0 %v1569
    %1942 = vmatmul.bf16.gmra.mxu0 %v266
    %v1943 = vpop.f32.mrf.mxu0
    %v1944 = vadd.f32 0.0, %v1943
    %v1945 = vpop.f32.mrf.mxu0
    %1946 = vdwg.mxu0
    %1947 = vmatpush.bf16.msra.mxu0 %v1659
    %1948 = vmatpush.bf16.msra.mxu0 %v1653
    %1949 = vmatpush.bf16.msra.mxu0 %v1647
    %1950 = vmatpush.bf16.msra.mxu0 %v1641
    %1951 = vmatpush.bf16.msra.mxu0 %v1635
    %1952 = vmatpush.bf16.msra.mxu0 %v1629
    %1953 = vmatpush.bf16.msra.mxu0 %v1623
    %1954 = vmatpush.bf16.msra.mxu0 %v1617
    %1955 = vmatmul.bf16.gmra.mxu0 %v267
    %v1956 = vpop.f32.mrf.mxu0
    %v1957 = vadd.f32 %v1944, %v1956
    %v1958 = vpop.f32.mrf.mxu0
    %1959 = vdwg.mxu0
    %1960 = vmatpush.bf16.msra.mxu0 %v1707
    %1961 = vmatpush.bf16.msra.mxu0 %v1701
    %1962 = vmatpush.bf16.msra.mxu0 %v1695
    %1963 = vmatpush.bf16.msra.mxu0 %v1689
    %1964 = vmatpush.bf16.msra.mxu0 %v1683
    %1965 = vmatpush.bf16.msra.mxu0 %v1677
    %1966 = vmatpush.bf16.msra.mxu0 %v1671
    %1967 = vmatpush.bf16.msra.mxu0 %v1665
    %1968 = vmatmul.bf16.gmra.mxu0 %v268
    %v1969 = vpop.f32.mrf.mxu0
    %v1970 = vadd.f32 %v1957, %v1969
    %v1971 = vpop.f32.mrf.mxu0
    %1972 = vdwg.mxu0
    %1973 = vmatpush.bf16.msra.mxu0 %v1755
    %1974 = vmatpush.bf16.msra.mxu0 %v1749
    %1975 = vmatpush.bf16.msra.mxu0 %v1743
    %1976 = vmatpush.bf16.msra.mxu0 %v1737
    %1977 = vmatpush.bf16.msra.mxu0 %v1731
    %1978 = vmatpush.bf16.msra.mxu0 %v1725
    %1979 = vmatpush.bf16.msra.mxu0 %v1719
    %1980 = vmatpush.bf16.msra.mxu0 %v1713
    %1981 = vmatmul.bf16.gmra.mxu0 %v269
    %v1982 = vpop.f32.mrf.mxu0
    %v1983 = vadd.f32 %v1970, %v1982
    %v1984 = vpop.f32.mrf.mxu0
    %1985 = vdwg.mxu0
    %1986 = vmatpush.bf16.msra.mxu0 %v1803
    %1987 = vmatpush.bf16.msra.mxu0 %v1797
    %1988 = vmatpush.bf16.msra.mxu0 %v1791
    %1989 = vmatpush.bf16.msra.mxu0 %v1785
    %1990 = vmatpush.bf16.msra.mxu0 %v1779
    %1991 = vmatpush.bf16.msra.mxu0 %v1773
    %1992 = vmatpush.bf16.msra.mxu0 %v1767
    %1993 = vmatpush.bf16.msra.mxu0 %v1761
    %1994 = vmatmul.bf16.gmra.mxu0 %v270
    %v1995 = vpop.f32.mrf.mxu0
    %v1996 = vadd.f32 %v1983, %v1995
    %v1997 = vpop.f32.mrf.mxu0
    %1998 = vdwg.mxu0
    %1999 = vmatpush.bf16.msra.mxu0 %v1851
    %2000 = vmatpush.bf16.msra.mxu0 %v1845
    %2001 = vmatpush.bf16.msra.mxu0 %v1839
    %2002 = vmatpush.bf16.msra.mxu0 %v1833
    %2003 = vmatpush.bf16.msra.mxu0 %v1827
    %2004 = vmatpush.bf16.msra.mxu0 %v1821
    %2005 = vmatpush.bf16.msra.mxu0 %v1815
    %2006 = vmatpush.bf16.msra.mxu0 %v1809
    %2007 = vmatmul.bf16.gmra.mxu0 %v271
    %v2008 = vpop.f32.mrf.mxu0
    %v2009 = vadd.f32 %v1996, %v2008
    %v2010 = vpop.f32.mrf.mxu0
    %2011 = vdwg.mxu0
    %2012 = vmatpush.bf16.msra.mxu0 %v1612
    %2013 = vmatpush.bf16.msra.mxu0 %v1606
    %2014 = vmatpush.bf16.msra.mxu0 %v1600
    %2015 = vmatpush.bf16.msra.mxu0 %v1594
    %2016 = vmatpush.bf16.msra.mxu0 %v1588
    %2017 = vmatpush.bf16.msra.mxu0 %v1582
    %2018 = vmatpush.bf16.msra.mxu0 %v1576
    %2019 = vmatpush.bf16.msra.mxu0 %v1570
    %2020 = vmatmul.bf16.gmra.mxu0 %v266
    %v2021 = vpop.f32.mrf.mxu0
    %v2022 = vadd.f32 0.0, %v2021
    %v2023 = vpop.f32.mrf.mxu0
    %2024 = vdwg.mxu0
    %2025 = vmatpush.bf16.msra.mxu0 %v1660
    %2026 = vmatpush.bf16.msra.mxu0 %v1654
    %2027 = vmatpush.bf16.msra.mxu0 %v1648
    %2028 = vmatpush.bf16.msra.mxu0 %v1642
    %2029 = vmatpush.bf16.msra.mxu0 %v1636
    %2030 = vmatpush.bf16.msra.mxu0 %v1630
    %2031 = vmatpush.bf16.msra.mxu0 %v1624
    %2032 = vmatpush.bf16.msra.mxu0 %v1618
    %2033 = vmatmul.bf16.gmra.mxu0 %v267
    %v2034 = vpop.f32.mrf.mxu0
    %v2035 = vadd.f32 %v2022, %v2034
    %v2036 = vpop.f32.mrf.mxu0
    %2037 = vdwg.mxu0
    %2038 = vmatpush.bf16.msra.mxu0 %v1708
    %2039 = vmatpush.bf16.msra.mxu0 %v1702
    %2040 = vmatpush.bf16.msra.mxu0 %v1696
    %2041 = vmatpush.bf16.msra.mxu0 %v1690
    %2042 = vmatpush.bf16.msra.mxu0 %v1684
    %2043 = vmatpush.bf16.msra.mxu0 %v1678
    %2044 = vmatpush.bf16.msra.mxu0 %v1672
    %2045 = vmatpush.bf16.msra.mxu0 %v1666
    %2046 = vmatmul.bf16.gmra.mxu0 %v268
    %v2047 = vpop.f32.mrf.mxu0
    %v2048 = vadd.f32 %v2035, %v2047
    %v2049 = vpop.f32.mrf.mxu0
    %2050 = vdwg.mxu0
    %2051 = vmatpush.bf16.msra.mxu0 %v1756
    %2052 = vmatpush.bf16.msra.mxu0 %v1750
    %2053 = vmatpush.bf16.msra.mxu0 %v1744
    %2054 = vmatpush.bf16.msra.mxu0 %v1738
    %2055 = vmatpush.bf16.msra.mxu0 %v1732
    %2056 = vmatpush.bf16.msra.mxu0 %v1726
    %2057 = vmatpush.bf16.msra.mxu0 %v1720
    %2058 = vmatpush.bf16.msra.mxu0 %v1714
    %2059 = vmatmul.bf16.gmra.mxu0 %v269
    %v2060 = vpop.f32.mrf.mxu0
    %v2061 = vadd.f32 %v2048, %v2060
    %v2062 = vpop.f32.mrf.mxu0
    %2063 = vdwg.mxu0
    %2064 = vmatpush.bf16.msra.mxu0 %v1804
    %2065 = vmatpush.bf16.msra.mxu0 %v1798
    %2066 = vmatpush.bf16.msra.mxu0 %v1792
    %2067 = vmatpush.bf16.msra.mxu0 %v1786
    %2068 = vmatpush.bf16.msra.mxu0 %v1780
    %2069 = vmatpush.bf16.msra.mxu0 %v1774
    %2070 = vmatpush.bf16.msra.mxu0 %v1768
    %2071 = vmatpush.bf16.msra.mxu0 %v1762
    %2072 = vmatmul.bf16.gmra.mxu0 %v270
    %v2073 = vpop.f32.mrf.mxu0
    %v2074 = vadd.f32 %v2061, %v2073
    %v2075 = vpop.f32.mrf.mxu0
    %2076 = vdwg.mxu0
    %2077 = vmatpush.bf16.msra.mxu0 %v1852
    %2078 = vmatpush.bf16.msra.mxu0 %v1846
    %2079 = vmatpush.bf16.msra.mxu0 %v1840
    %2080 = vmatpush.bf16.msra.mxu0 %v1834
    %2081 = vmatpush.bf16.msra.mxu0 %v1828
    %2082 = vmatpush.bf16.msra.mxu0 %v1822
    %2083 = vmatpush.bf16.msra.mxu0 %v1816
    %2084 = vmatpush.bf16.msra.mxu0 %v1810
    %2085 = vmatmul.bf16.gmra.mxu0 %v271
    %v2086 = vpop.f32.mrf.mxu0
    %v2087 = vadd.f32 %v2074, %v2086
    %v2088 = vpop.f32.mrf.mxu0
    %2089 = vdwg.mxu0
    %2090 = vmatpush.bf16.msra.mxu0 %v1613
    %2091 = vmatpush.bf16.msra.mxu0 %v1607
    %2092 = vmatpush.bf16.msra.mxu0 %v1601
    %2093 = vmatpush.bf16.msra.mxu0 %v1595
    %2094 = vmatpush.bf16.msra.mxu0 %v1589
    %2095 = vmatpush.bf16.msra.mxu0 %v1583
    %2096 = vmatpush.bf16.msra.mxu0 %v1577
    %2097 = vmatpush.bf16.msra.mxu0 %v1571
    %2098 = vmatmul.bf16.gmra.mxu0 %v266
    %v2099 = vpop.f32.mrf.mxu0
    %v2100 = vadd.f32 0.0, %v2099
    %v2101 = vpop.f32.mrf.mxu0
    %2102 = vdwg.mxu0
    %2103 = vmatpush.bf16.msra.mxu0 %v1661
    %2104 = vmatpush.bf16.msra.mxu0 %v1655
    %2105 = vmatpush.bf16.msra.mxu0 %v1649
    %2106 = vmatpush.bf16.msra.mxu0 %v1643
    %2107 = vmatpush.bf16.msra.mxu0 %v1637
    %2108 = vmatpush.bf16.msra.mxu0 %v1631
    %2109 = vmatpush.bf16.msra.mxu0 %v1625
    %2110 = vmatpush.bf16.msra.mxu0 %v1619
    %2111 = vmatmul.bf16.gmra.mxu0 %v267
    %v2112 = vpop.f32.mrf.mxu0
    %v2113 = vadd.f32 %v2100, %v2112
    %v2114 = vpop.f32.mrf.mxu0
    %2115 = vdwg.mxu0
    %2116 = vmatpush.bf16.msra.mxu0 %v1709
    %2117 = vmatpush.bf16.msra.mxu0 %v1703
    %2118 = vmatpush.bf16.msra.mxu0 %v1697
    %2119 = vmatpush.bf16.msra.mxu0 %v1691
    %2120 = vmatpush.bf16.msra.mxu0 %v1685
    %2121 = vmatpush.bf16.msra.mxu0 %v1679
    %2122 = vmatpush.bf16.msra.mxu0 %v1673
    %2123 = vmatpush.bf16.msra.mxu0 %v1667
    %2124 = vmatmul.bf16.gmra.mxu0 %v268
    %v2125 = vpop.f32.mrf.mxu0
    %v2126 = vadd.f32 %v2113, %v2125
    %v2127 = vpop.f32.mrf.mxu0
    %2128 = vdwg.mxu0
    %2129 = vmatpush.bf16.msra.mxu0 %v1757
    %2130 = vmatpush.bf16.msra.mxu0 %v1751
    %2131 = vmatpush.bf16.msra.mxu0 %v1745
    %2132 = vmatpush.bf16.msra.mxu0 %v1739
    %2133 = vmatpush.bf16.msra.mxu0 %v1733
    %2134 = vmatpush.bf16.msra.mxu0 %v1727
    %2135 = vmatpush.bf16.msra.mxu0 %v1721
    %2136 = vmatpush.bf16.msra.mxu0 %v1715
    %2137 = vmatmul.bf16.gmra.mxu0 %v269
    %v2138 = vpop.f32.mrf.mxu0
    %v2139 = vadd.f32 %v2126, %v2138
    %v2140 = vpop.f32.mrf.mxu0
    %2141 = vdwg.mxu0
    %2142 = vmatpush.bf16.msra.mxu0 %v1805
    %2143 = vmatpush.bf16.msra.mxu0 %v1799
    %2144 = vmatpush.bf16.msra.mxu0 %v1793
    %2145 = vmatpush.bf16.msra.mxu0 %v1787
    %2146 = vmatpush.bf16.msra.mxu0 %v1781
    %2147 = vmatpush.bf16.msra.mxu0 %v1775
    %2148 = vmatpush.bf16.msra.mxu0 %v1769
    %2149 = vmatpush.bf16.msra.mxu0 %v1763
    %2150 = vmatmul.bf16.gmra.mxu0 %v270
    %v2151 = vpop.f32.mrf.mxu0
    %v2152 = vadd.f32 %v2139, %v2151
    %v2153 = vpop.f32.mrf.mxu0
    %2154 = vdwg.mxu0
    %2155 = vmatpush.bf16.msra.mxu0 %v1853
    %2156 = vmatpush.bf16.msra.mxu0 %v1847
    %2157 = vmatpush.bf16.msra.mxu0 %v1841
    %2158 = vmatpush.bf16.msra.mxu0 %v1835
    %2159 = vmatpush.bf16.msra.mxu0 %v1829
    %2160 = vmatpush.bf16.msra.mxu0 %v1823
    %2161 = vmatpush.bf16.msra.mxu0 %v1817
    %2162 = vmatpush.bf16.msra.mxu0 %v1811
    %2163 = vmatmul.bf16.gmra.mxu0 %v271
    %v2164 = vpop.f32.mrf.mxu0
    %v2165 = vadd.f32 %v2152, %v2164
    %v2166 = vpop.f32.mrf.mxu0
    %2167 = vdwg.mxu0
    %2168 = vmatpush.bf16.msra.mxu0 %v1614
    %2169 = vmatpush.bf16.msra.mxu0 %v1608
    %2170 = vmatpush.bf16.msra.mxu0 %v1602
    %2171 = vmatpush.bf16.msra.mxu0 %v1596
    %2172 = vmatpush.bf16.msra.mxu0 %v1590
    %2173 = vmatpush.bf16.msra.mxu0 %v1584
    %2174 = vmatpush.bf16.msra.mxu0 %v1578
    %2175 = vmatpush.bf16.msra.mxu0 %v1572
    %2176 = vmatmul.bf16.gmra.mxu0 %v266
    %v2177 = vpop.f32.mrf.mxu0
    %v2178 = vadd.f32 0.0, %v2177
    %v2179 = vpop.f32.mrf.mxu0
    %2180 = vdwg.mxu0
    %2181 = vmatpush.bf16.msra.mxu0 %v1662
    %2182 = vmatpush.bf16.msra.mxu0 %v1656
    %2183 = vmatpush.bf16.msra.mxu0 %v1650
    %2184 = vmatpush.bf16.msra.mxu0 %v1644
    %2185 = vmatpush.bf16.msra.mxu0 %v1638
    %2186 = vmatpush.bf16.msra.mxu0 %v1632
    %2187 = vmatpush.bf16.msra.mxu0 %v1626
    %2188 = vmatpush.bf16.msra.mxu0 %v1620
    %2189 = vmatmul.bf16.gmra.mxu0 %v267
    %v2190 = vpop.f32.mrf.mxu0
    %v2191 = vadd.f32 %v2178, %v2190
    %v2192 = vpop.f32.mrf.mxu0
    %2193 = vdwg.mxu0
    %2194 = vmatpush.bf16.msra.mxu0 %v1710
    %2195 = vmatpush.bf16.msra.mxu0 %v1704
    %2196 = vmatpush.bf16.msra.mxu0 %v1698
    %2197 = vmatpush.bf16.msra.mxu0 %v1692
    %2198 = vmatpush.bf16.msra.mxu0 %v1686
    %2199 = vmatpush.bf16.msra.mxu0 %v1680
    %2200 = vmatpush.bf16.msra.mxu0 %v1674
    %2201 = vmatpush.bf16.msra.mxu0 %v1668
    %2202 = vmatmul.bf16.gmra.mxu0 %v268
    %v2203 = vpop.f32.mrf.mxu0
    %v2204 = vadd.f32 %v2191, %v2203
    %v2205 = vpop.f32.mrf.mxu0
    %2206 = vdwg.mxu0
    %2207 = vmatpush.bf16.msra.mxu0 %v1758
    %2208 = vmatpush.bf16.msra.mxu0 %v1752
    %2209 = vmatpush.bf16.msra.mxu0 %v1746
    %2210 = vmatpush.bf16.msra.mxu0 %v1740
    %2211 = vmatpush.bf16.msra.mxu0 %v1734
    %2212 = vmatpush.bf16.msra.mxu0 %v1728
    %2213 = vmatpush.bf16.msra.mxu0 %v1722
    %2214 = vmatpush.bf16.msra.mxu0 %v1716
    %2215 = vmatmul.bf16.gmra.mxu0 %v269
    %v2216 = vpop.f32.mrf.mxu0
    %v2217 = vadd.f32 %v2204, %v2216
    %v2218 = vpop.f32.mrf.mxu0
    %2219 = vdwg.mxu0
    %2220 = vmatpush.bf16.msra.mxu0 %v1806
    %2221 = vmatpush.bf16.msra.mxu0 %v1800
    %2222 = vmatpush.bf16.msra.mxu0 %v1794
    %2223 = vmatpush.bf16.msra.mxu0 %v1788
    %2224 = vmatpush.bf16.msra.mxu0 %v1782
    %2225 = vmatpush.bf16.msra.mxu0 %v1776
    %2226 = vmatpush.bf16.msra.mxu0 %v1770
    %2227 = vmatpush.bf16.msra.mxu0 %v1764
    %2228 = vmatmul.bf16.gmra.mxu0 %v270
    %v2229 = vpop.f32.mrf.mxu0
    %v2230 = vadd.f32 %v2217, %v2229
    %v2231 = vpop.f32.mrf.mxu0
    %2232 = vdwg.mxu0
    %2233 = vmatpush.bf16.msra.mxu0 %v1854
    %2234 = vmatpush.bf16.msra.mxu0 %v1848
    %2235 = vmatpush.bf16.msra.mxu0 %v1842
    %2236 = vmatpush.bf16.msra.mxu0 %v1836
    %2237 = vmatpush.bf16.msra.mxu0 %v1830
    %2238 = vmatpush.bf16.msra.mxu0 %v1824
    %2239 = vmatpush.bf16.msra.mxu0 %v1818
    %2240 = vmatpush.bf16.msra.mxu0 %v1812
    %2241 = vmatmul.bf16.gmra.mxu0 %v271
    %v2242 = vpop.f32.mrf.mxu0
    %v2243 = vadd.f32 %v2230, %v2242
    %v2244 = vpop.f32.mrf.mxu0
    %2245 = vdwg.mxu0
    %2246 = vmatpush.bf16.msra.mxu0 %v1615
    %2247 = vmatpush.bf16.msra.mxu0 %v1609
    %2248 = vmatpush.bf16.msra.mxu0 %v1603
    %2249 = vmatpush.bf16.msra.mxu0 %v1597
    %2250 = vmatpush.bf16.msra.mxu0 %v1591
    %2251 = vmatpush.bf16.msra.mxu0 %v1585
    %2252 = vmatpush.bf16.msra.mxu0 %v1579
    %2253 = vmatpush.bf16.msra.mxu0 %v1573
    %2254 = vmatmul.bf16.gmra.mxu0 %v266
    %v2255 = vpop.f32.mrf.mxu0
    %v2256 = vadd.f32 0.0, %v2255
    %v2257 = vpop.f32.mrf.mxu0
    %2258 = vdwg.mxu0
    %2259 = vmatpush.bf16.msra.mxu0 %v1663
    %2260 = vmatpush.bf16.msra.mxu0 %v1657
    %2261 = vmatpush.bf16.msra.mxu0 %v1651
    %2262 = vmatpush.bf16.msra.mxu0 %v1645
    %2263 = vmatpush.bf16.msra.mxu0 %v1639
    %2264 = vmatpush.bf16.msra.mxu0 %v1633
    %2265 = vmatpush.bf16.msra.mxu0 %v1627
    %2266 = vmatpush.bf16.msra.mxu0 %v1621
    %2267 = vmatmul.bf16.gmra.mxu0 %v267
    %v2268 = vpop.f32.mrf.mxu0
    %v2269 = vadd.f32 %v2256, %v2268
    %v2270 = vpop.f32.mrf.mxu0
    %2271 = vdwg.mxu0
    %2272 = vmatpush.bf16.msra.mxu0 %v1711
    %2273 = vmatpush.bf16.msra.mxu0 %v1705
    %2274 = vmatpush.bf16.msra.mxu0 %v1699
    %2275 = vmatpush.bf16.msra.mxu0 %v1693
    %2276 = vmatpush.bf16.msra.mxu0 %v1687
    %2277 = vmatpush.bf16.msra.mxu0 %v1681
    %2278 = vmatpush.bf16.msra.mxu0 %v1675
    %2279 = vmatpush.bf16.msra.mxu0 %v1669
    %2280 = vmatmul.bf16.gmra.mxu0 %v268
    %v2281 = vpop.f32.mrf.mxu0
    %v2282 = vadd.f32 %v2269, %v2281
    %v2283 = vpop.f32.mrf.mxu0
    %2284 = vdwg.mxu0
    %2285 = vmatpush.bf16.msra.mxu0 %v1759
    %2286 = vmatpush.bf16.msra.mxu0 %v1753
    %2287 = vmatpush.bf16.msra.mxu0 %v1747
    %2288 = vmatpush.bf16.msra.mxu0 %v1741
    %2289 = vmatpush.bf16.msra.mxu0 %v1735
    %2290 = vmatpush.bf16.msra.mxu0 %v1729
    %2291 = vmatpush.bf16.msra.mxu0 %v1723
    %2292 = vmatpush.bf16.msra.mxu0 %v1717
    %2293 = vmatmul.bf16.gmra.mxu0 %v269
    %v2294 = vpop.f32.mrf.mxu0
    %v2295 = vadd.f32 %v2282, %v2294
    %v2296 = vpop.f32.mrf.mxu0
    %2297 = vdwg.mxu0
    %2298 = vmatpush.bf16.msra.mxu0 %v1807
    %2299 = vmatpush.bf16.msra.mxu0 %v1801
    %2300 = vmatpush.bf16.msra.mxu0 %v1795
    %2301 = vmatpush.bf16.msra.mxu0 %v1789
    %2302 = vmatpush.bf16.msra.mxu0 %v1783
    %2303 = vmatpush.bf16.msra.mxu0 %v1777
    %2304 = vmatpush.bf16.msra.mxu0 %v1771
    %2305 = vmatpush.bf16.msra.mxu0 %v1765
    %2306 = vmatmul.bf16.gmra.mxu0 %v270
    %v2307 = vpop.f32.mrf.mxu0
    %v2308 = vadd.f32 %v2295, %v2307
    %v2309 = vpop.f32.mrf.mxu0
    %2310 = vdwg.mxu0
    %2311 = vmatpush.bf16.msra.mxu0 %v1855
    %2312 = vmatpush.bf16.msra.mxu0 %v1849
    %2313 = vmatpush.bf16.msra.mxu0 %v1843
    %2314 = vmatpush.bf16.msra.mxu0 %v1837
    %2315 = vmatpush.bf16.msra.mxu0 %v1831
    %2316 = vmatpush.bf16.msra.mxu0 %v1825
    %2317 = vmatpush.bf16.msra.mxu0 %v1819
    %2318 = vmatpush.bf16.msra.mxu0 %v1813
    %2319 = vmatmul.bf16.gmra.mxu0 %v271
    %v2320 = vpop.f32.mrf.mxu0
    %v2321 = vadd.f32 %v2308, %v2320
    %v2322 = vpop.f32.mrf.mxu0
    %2323 = vdwg.mxu0
    %v2324 = vld [vmem:[%s5] sm:$0x3f]
    %v2326 = vperm.slane %v2324, 0
    %v2327 = vperm.slane %v2324, 1
    %v2328 = vperm.slane %v2324, 2
    %v2329 = vperm.slane %v2324, 3
    %v2330 = vperm.slane %v2324, 4
    %v2331 = vperm.slane %v2324, 5
    %v2338 = vmul.f32 %v1931, %v2326
    %v2339 = vmul.f32 %v2009, %v2327
    %v2340 = vmul.f32 %v2087, %v2328
    %v2341 = vmul.f32 %v2165, %v2329
    %v2342 = vmul.f32 %v2243, %v2330
    %v2343 = vmul.f32 %v2321, %v2331
    %v2344 = vld [vmem:[%s6] sm:$0x3f]
    %v2346 = vperm.slane %v2344, 0
    %v2347 = vperm.slane %v2344, 1
    %v2348 = vperm.slane %v2344, 2
    %v2349 = vperm.slane %v2344, 3
    %v2350 = vperm.slane %v2344, 4
    %v2351 = vperm.slane %v2344, 5
    %v2358 = vadd.f32 %v2338, %v2346
    %v2359 = vadd.f32 %v2339, %v2347
    %v2360 = vadd.f32 %v2340, %v2348
    %v2361 = vadd.f32 %v2341, %v2349
    %v2362 = vadd.f32 %v2342, %v2350
    %v2363 = vadd.f32 %v2343, %v2351
    %v2364 = vmax.f32 %v2358, 0.0
    %v2365 = vmax.f32 %v2359, 0.0
    %v2366 = vmax.f32 %v2360, 0.0
    %v2367 = vmax.f32 %v2361, 0.0
    %v2368 = vmax.f32 %v2362, 0.0
    %v2369 = vmax.f32 %v2363, 0.0
    %v2370 = vpack.c.bf16 %v2364, %v2364
    %v2371 = vpack.c.bf16 %v2365, %v2365
    %v2372 = vpack.c.bf16 %v2366, %v2366
    %v2373 = vpack.c.bf16 %v2367, %v2367
    %v2374 = vpack.c.bf16 %v2368, %v2368
    %v2375 = vpack.c.bf16 %v2369, %v2369
    %v2376 = vld [vmem:[%s7] sm:$0xf]
    %v2377 = vld [vmem:[%s7 + $0x4] sm:$0xf]
    %v2378 = vld [vmem:[%s7 + $0x8] sm:$0xf]
    %v2379 = vld [vmem:[%s7 + $0xc] sm:$0xf]
    %v2380 = vld [vmem:[%s7 + $0x10] sm:$0xf]
    %v2381 = vld [vmem:[%s7 + $0x14] sm:$0xf]
    %v2382 = vld [vmem:[%s7 + $0x18] sm:$0xf]
    %v2383 = vld [vmem:[%s7 + $0x1c] sm:$0xf]
    %v2384 = vld [vmem:[%s7 + $0x20] sm:$0xf]
    %v2385 = vld [vmem:[%s7 + $0x24] sm:$0xf]
    %v2386 = vld [vmem:[%s7 + $0x28] sm:$0xf]
    %v2387 = vld [vmem:[%s7 + $0x2c] sm:$0xf]
    %v2388 = vld [vmem:[%s7 + $0x30] sm:$0xf]
    %v2389 = vld [vmem:[%s7 + $0x34] sm:$0xf]
    %v2390 = vld [vmem:[%s7 + $0x38] sm:$0xf]
    %v2391 = vld [vmem:[%s7 + $0x3c] sm:$0xf]
    %v2392 = vld [vmem:[%s7 + $0x40] sm:$0xf]
    %v2393 = vld [vmem:[%s7 + $0x44] sm:$0xf]
    %v2394 = vld [vmem:[%s7 + $0x48] sm:$0xf]
    %v2395 = vld [vmem:[%s7 + $0x4c] sm:$0xf]
    %v2396 = vld [vmem:[%s7 + $0x50] sm:$0xf]
    %v2397 = vld [vmem:[%s7 + $0x54] sm:$0xf]
    %v2398 = vld [vmem:[%s7 + $0x58] sm:$0xf]
    %v2399 = vld [vmem:[%s7 + $0x5c] sm:$0xf]
    %v2400 = vld [vmem:[%s7 + $0x60] sm:$0xf]
    %v2401 = vld [vmem:[%s7 + $0x64] sm:$0xf]
    %v2402 = vld [vmem:[%s7 + $0x68] sm:$0xf]
    %v2403 = vld [vmem:[%s7 + $0x6c] sm:$0xf]
    %v2404 = vld [vmem:[%s7 + $0x70] sm:$0xf]
    %v2405 = vld [vmem:[%s7 + $0x74] sm:$0xf]
    %v2406 = vld [vmem:[%s7 + $0x78] sm:$0xf]
    %v2407 = vld [vmem:[%s7 + $0x7c] sm:$0xf]
    %v2408 = vld [vmem:[%s7 + $0x80] sm:$0xf]
    %v2409 = vld [vmem:[%s7 + $0x84] sm:$0xf]
    %v2410 = vld [vmem:[%s7 + $0x88] sm:$0xf]
    %v2411 = vld [vmem:[%s7 + $0x8c] sm:$0xf]
    %v2412 = vld [vmem:[%s7 + $0x90] sm:$0xf]
    %v2413 = vld [vmem:[%s7 + $0x94] sm:$0xf]
    %v2414 = vld [vmem:[%s7 + $0x98] sm:$0xf]
    %v2415 = vld [vmem:[%s7 + $0x9c] sm:$0xf]
    %v2416 = vld [vmem:[%s7 + $0xa0] sm:$0xf]
    %v2417 = vld [vmem:[%s7 + $0xa4] sm:$0xf]
    %v2418 = vld [vmem:[%s7 + $0xa8] sm:$0xf]
    %v2419 = vld [vmem:[%s7 + $0xac] sm:$0xf]
    %v2420 = vld [vmem:[%s7 + $0xb0] sm:$0xf]
    %v2421 = vld [vmem:[%s7 + $0xb4] sm:$0xf]
    %v2422 = vld [vmem:[%s7 + $0xb8] sm:$0xf]
    %v2423 = vld [vmem:[%s7 + $0xbc] sm:$0xf]
    %v2424 = vld [vmem:[%s7 + $0xc0] sm:$0xf]
    %v2425 = vld [vmem:[%s7 + $0xc4] sm:$0xf]
    %v2426 = vld [vmem:[%s7 + $0xc8] sm:$0xf]
    %v2427 = vld [vmem:[%s7 + $0xcc] sm:$0xf]
    %v2428 = vld [vmem:[%s7 + $0xd0] sm:$0xf]
    %v2429 = vld [vmem:[%s7 + $0xd4] sm:$0xf]
    %v2430 = vld [vmem:[%s7 + $0xd8] sm:$0xf]
    %v2431 = vld [vmem:[%s7 + $0xdc] sm:$0xf]
    %v2432 = vld [vmem:[%s7 + $0xe0] sm:$0xf]
    %v2433 = vld [vmem:[%s7 + $0xe4] sm:$0xf]
    %v2434 = vld [vmem:[%s7 + $0xe8] sm:$0xf]
    %v2435 = vld [vmem:[%s7 + $0xec] sm:$0xf]
    %v2436 = vld [vmem:[%s7 + $0xf0] sm:$0xf]
    %v2437 = vld [vmem:[%s7 + $0xf4] sm:$0xf]
    %v2438 = vld [vmem:[%s7 + $0xf8] sm:$0xf]
    %v2439 = vld [vmem:[%s7 + $0xfc] sm:$0xf]
    %v2440 = vld [vmem:[%s7 + $0x100] sm:$0xf]
    %v2441 = vld [vmem:[%s7 + $0x104] sm:$0xf]
    %v2442 = vld [vmem:[%s7 + $0x108] sm:$0xf]
    %v2443 = vld [vmem:[%s7 + $0x10c] sm:$0xf]
    %v2444 = vld [vmem:[%s7 + $0x110] sm:$0xf]
    %v2445 = vld [vmem:[%s7 + $0x114] sm:$0xf]
    %v2446 = vld [vmem:[%s7 + $0x118] sm:$0xf]
    %v2447 = vld [vmem:[%s7 + $0x11c] sm:$0xf]
    %v2448 = vld [vmem:[%s7 + $0x120] sm:$0xf]
    %v2449 = vld [vmem:[%s7 + $0x124] sm:$0xf]
    %v2450 = vld [vmem:[%s7 + $0x128] sm:$0xf]
    %v2451 = vld [vmem:[%s7 + $0x12c] sm:$0xf]
    %v2452 = vld [vmem:[%s7 + $0x130] sm:$0xf]
    %v2453 = vld [vmem:[%s7 + $0x134] sm:$0xf]
    %v2454 = vld [vmem:[%s7 + $0x138] sm:$0xf]
    %v2455 = vld [vmem:[%s7 + $0x13c] sm:$0xf]
    %v2456 = vld [vmem:[%s7 + $0x140] sm:$0xf]
    %v2457 = vld [vmem:[%s7 + $0x144] sm:$0xf]
    %v2458 = vld [vmem:[%s7 + $0x148] sm:$0xf]
    %v2459 = vld [vmem:[%s7 + $0x14c] sm:$0xf]
    %v2460 = vld [vmem:[%s7 + $0x150] sm:$0xf]
    %v2461 = vld [vmem:[%s7 + $0x154] sm:$0xf]
    %v2462 = vld [vmem:[%s7 + $0x158] sm:$0xf]
    %v2463 = vld [vmem:[%s7 + $0x15c] sm:$0xf]
    %v2464 = vld [vmem:[%s7 + $0x160] sm:$0xf]
    %v2465 = vld [vmem:[%s7 + $0x164] sm:$0xf]
    %v2466 = vld [vmem:[%s7 + $0x168] sm:$0xf]
    %v2467 = vld [vmem:[%s7 + $0x16c] sm:$0xf]
    %v2468 = vld [vmem:[%s7 + $0x170] sm:$0xf]
    %v2469 = vld [vmem:[%s7 + $0x174] sm:$0xf]
    %v2470 = vld [vmem:[%s7 + $0x178] sm:$0xf]
    %v2471 = vld [vmem:[%s7 + $0x17c] sm:$0xf]
    %v2472 = vld [vmem:[%s8] sm:$0x1]
    %v2474 = vperm.slane %v2472, 0
    %v2572 = vunpack.c.l.b16 %v2376
    %v2573 = vunpack.c.l.b16 %v2377
    %v2574 = vunpack.c.l.b16 %v2378
    %v2575 = vunpack.c.l.b16 %v2379
    %v2576 = vunpack.c.l.b16 %v2380
    %v2577 = vunpack.c.l.b16 %v2381
    %v2578 = vunpack.c.l.b16 %v2382
    %v2579 = vunpack.c.l.b16 %v2383
    %v2580 = vunpack.c.l.b16 %v2384
    %v2581 = vunpack.c.l.b16 %v2385
    %v2582 = vunpack.c.l.b16 %v2386
    %v2583 = vunpack.c.l.b16 %v2387
    %v2584 = vunpack.c.l.b16 %v2388
    %v2585 = vunpack.c.l.b16 %v2389
    %v2586 = vunpack.c.l.b16 %v2390
    %v2587 = vunpack.c.l.b16 %v2391
    %v2588 = vunpack.c.l.b16 %v2392
    %v2589 = vunpack.c.l.b16 %v2393
    %v2590 = vunpack.c.l.b16 %v2394
    %v2591 = vunpack.c.l.b16 %v2395
    %v2592 = vunpack.c.l.b16 %v2396
    %v2593 = vunpack.c.l.b16 %v2397
    %v2594 = vunpack.c.l.b16 %v2398
    %v2595 = vunpack.c.l.b16 %v2399
    %v2596 = vunpack.c.l.b16 %v2400
    %v2597 = vunpack.c.l.b16 %v2401
    %v2598 = vunpack.c.l.b16 %v2402
    %v2599 = vunpack.c.l.b16 %v2403
    %v2600 = vunpack.c.l.b16 %v2404
    %v2601 = vunpack.c.l.b16 %v2405
    %v2602 = vunpack.c.l.b16 %v2406
    %v2603 = vunpack.c.l.b16 %v2407
    %v2604 = vunpack.c.l.b16 %v2408
    %v2605 = vunpack.c.l.b16 %v2409
    %v2606 = vunpack.c.l.b16 %v2410
    %v2607 = vunpack.c.l.b16 %v2411
    %v2608 = vunpack.c.l.b16 %v2412
    %v2609 = vunpack.c.l.b16 %v2413
    %v2610 = vunpack.c.l.b16 %v2414
    %v2611 = vunpack.c.l.b16 %v2415
    %v2612 = vunpack.c.l.b16 %v2416
    %v2613 = vunpack.c.l.b16 %v2417
    %v2614 = vunpack.c.l.b16 %v2418
    %v2615 = vunpack.c.l.b16 %v2419
    %v2616 = vunpack.c.l.b16 %v2420
    %v2617 = vunpack.c.l.b16 %v2421
    %v2618 = vunpack.c.l.b16 %v2422
    %v2619 = vunpack.c.l.b16 %v2423
    %v2620 = vunpack.c.l.b16 %v2424
    %v2621 = vunpack.c.l.b16 %v2425
    %v2622 = vunpack.c.l.b16 %v2426
    %v2623 = vunpack.c.l.b16 %v2427
    %v2624 = vunpack.c.l.b16 %v2428
    %v2625 = vunpack.c.l.b16 %v2429
    %v2626 = vunpack.c.l.b16 %v2430
    %v2627 = vunpack.c.l.b16 %v2431
    %v2628 = vunpack.c.l.b16 %v2432
    %v2629 = vunpack.c.l.b16 %v2433
    %v2630 = vunpack.c.l.b16 %v2434
    %v2631 = vunpack.c.l.b16 %v2435
    %v2632 = vunpack.c.l.b16 %v2436
    %v2633 = vunpack.c.l.b16 %v2437
    %v2634 = vunpack.c.l.b16 %v2438
    %v2635 = vunpack.c.l.b16 %v2439
    %v2636 = vunpack.c.l.b16 %v2440
    %v2637 = vunpack.c.l.b16 %v2441
    %v2638 = vunpack.c.l.b16 %v2442
    %v2639 = vunpack.c.l.b16 %v2443
    %v2640 = vunpack.c.l.b16 %v2444
    %v2641 = vunpack.c.l.b16 %v2445
    %v2642 = vunpack.c.l.b16 %v2446
    %v2643 = vunpack.c.l.b16 %v2447
    %v2644 = vunpack.c.l.b16 %v2448
    %v2645 = vunpack.c.l.b16 %v2449
    %v2646 = vunpack.c.l.b16 %v2450
    %v2647 = vunpack.c.l.b16 %v2451
    %v2648 = vunpack.c.l.b16 %v2452
    %v2649 = vunpack.c.l.b16 %v2453
    %v2650 = vunpack.c.l.b16 %v2454
    %v2651 = vunpack.c.l.b16 %v2455
    %v2652 = vunpack.c.l.b16 %v2456
    %v2653 = vunpack.c.l.b16 %v2457
    %v2654 = vunpack.c.l.b16 %v2458
    %v2655 = vunpack.c.l.b16 %v2459
    %v2656 = vunpack.c.l.b16 %v2460
    %v2657 = vunpack.c.l.b16 %v2461
    %v2658 = vunpack.c.l.b16 %v2462
    %v2659 = vunpack.c.l.b16 %v2463
    %v2660 = vunpack.c.l.b16 %v2464
    %v2661 = vunpack.c.l.b16 %v2465
    %v2662 = vunpack.c.l.b16 %v2466
    %v2663 = vunpack.c.l.b16 %v2467
    %v2664 = vunpack.c.l.b16 %v2468
    %v2665 = vunpack.c.l.b16 %v2469
    %v2666 = vunpack.c.l.b16 %v2470
    %v2667 = vunpack.c.l.b16 %v2471
    %v2668 = vpack.c.b16 %v2573, %v2572
    %v2669 = vpack.c.b16 %v2575, %v2574
    %v2670 = vpack.c.b16 %v2577, %v2576
    %v2671 = vpack.c.b16 %v2579, %v2578
    %v2672 = vpack.c.b16 %v2581, %v2580
    %v2673 = vpack.c.b16 %v2583, %v2582
    %v2674 = vpack.c.b16 %v2585, %v2584
    %v2675 = vpack.c.b16 %v2587, %v2586
    %v2676 = vpack.c.b16 %v2589, %v2588
    %v2677 = vpack.c.b16 %v2591, %v2590
    %v2678 = vpack.c.b16 %v2593, %v2592
    %v2679 = vpack.c.b16 %v2595, %v2594
    %v2680 = vpack.c.b16 %v2597, %v2596
    %v2681 = vpack.c.b16 %v2599, %v2598
    %v2682 = vpack.c.b16 %v2601, %v2600
    %v2683 = vpack.c.b16 %v2603, %v2602
    %v2684 = vpack.c.b16 %v2605, %v2604
    %v2685 = vpack.c.b16 %v2607, %v2606
    %v2686 = vpack.c.b16 %v2609, %v2608
    %v2687 = vpack.c.b16 %v2611, %v2610
    %v2688 = vpack.c.b16 %v2613, %v2612
    %v2689 = vpack.c.b16 %v2615, %v2614
    %v2690 = vpack.c.b16 %v2617, %v2616
    %v2691 = vpack.c.b16 %v2619, %v2618
    %v2692 = vpack.c.b16 %v2621, %v2620
    %v2693 = vpack.c.b16 %v2623, %v2622
    %v2694 = vpack.c.b16 %v2625, %v2624
    %v2695 = vpack.c.b16 %v2627, %v2626
    %v2696 = vpack.c.b16 %v2629, %v2628
    %v2697 = vpack.c.b16 %v2631, %v2630
    %v2698 = vpack.c.b16 %v2633, %v2632
    %v2699 = vpack.c.b16 %v2635, %v2634
    %v2700 = vpack.c.b16 %v2637, %v2636
    %v2701 = vpack.c.b16 %v2639, %v2638
    %v2702 = vpack.c.b16 %v2641, %v2640
    %v2703 = vpack.c.b16 %v2643, %v2642
    %v2704 = vpack.c.b16 %v2645, %v2644
    %v2705 = vpack.c.b16 %v2647, %v2646
    %v2706 = vpack.c.b16 %v2649, %v2648
    %v2707 = vpack.c.b16 %v2651, %v2650
    %v2708 = vpack.c.b16 %v2653, %v2652
    %v2709 = vpack.c.b16 %v2655, %v2654
    %v2710 = vpack.c.b16 %v2657, %v2656
    %v2711 = vpack.c.b16 %v2659, %v2658
    %v2712 = vpack.c.b16 %v2661, %v2660
    %v2713 = vpack.c.b16 %v2663, %v2662
    %v2714 = vpack.c.b16 %v2665, %v2664
    %v2715 = vpack.c.b16 %v2667, %v2666
    %2764 = vmatpush.bf16.msra.mxu0 %v2675
    %2765 = vmatpush.bf16.msra.mxu0 %v2674
    %2766 = vmatpush.bf16.msra.mxu0 %v2673
    %2767 = vmatpush.bf16.msra.mxu0 %v2672
    %2768 = vmatpush.bf16.msra.mxu0 %v2671
    %2769 = vmatpush.bf16.msra.mxu0 %v2670
    %2770 = vmatpush.bf16.msra.mxu0 %v2669
    %2771 = vmatpush.bf16.msra.mxu0 %v2668
    %2772 = vmatmul.bf16.gmra.mxu0 %v2370
    %v2773 = vpop.f32.mrf.mxu0
    %v2774 = vadd.f32 %v2474, %v2773
    %v2775 = vpop.f32.mrf.mxu0
    %2776 = vdwg.mxu0
    %2777 = vmatpush.bf16.msra.mxu0 %v2683
    %2778 = vmatpush.bf16.msra.mxu0 %v2682
    %2779 = vmatpush.bf16.msra.mxu0 %v2681
    %2780 = vmatpush.bf16.msra.mxu0 %v2680
    %2781 = vmatpush.bf16.msra.mxu0 %v2679
    %2782 = vmatpush.bf16.msra.mxu0 %v2678
    %2783 = vmatpush.bf16.msra.mxu0 %v2677
    %2784 = vmatpush.bf16.msra.mxu0 %v2676
    %2785 = vmatmul.bf16.gmra.mxu0 %v2371
    %v2786 = vpop.f32.mrf.mxu0
    %v2787 = vadd.f32 %v2774, %v2786
    %v2788 = vpop.f32.mrf.mxu0
    %2789 = vdwg.mxu0
    %2790 = vmatpush.bf16.msra.mxu0 %v2691
    %2791 = vmatpush.bf16.msra.mxu0 %v2690
    %2792 = vmatpush.bf16.msra.mxu0 %v2689
    %2793 = vmatpush.bf16.msra.mxu0 %v2688
    %2794 = vmatpush.bf16.msra.mxu0 %v2687
    %2795 = vmatpush.bf16.msra.mxu0 %v2686
    %2796 = vmatpush.bf16.msra.mxu0 %v2685
    %2797 = vmatpush.bf16.msra.mxu0 %v2684
    %2798 = vmatmul.bf16.gmra.mxu0 %v2372
    %v2799 = vpop.f32.mrf.mxu0
    %v2800 = vadd.f32 %v2787, %v2799
    %v2801 = vpop.f32.mrf.mxu0
    %2802 = vdwg.mxu0
    %2803 = vmatpush.bf16.msra.mxu0 %v2699
    %2804 = vmatpush.bf16.msra.mxu0 %v2698
    %2805 = vmatpush.bf16.msra.mxu0 %v2697
    %2806 = vmatpush.bf16.msra.mxu0 %v2696
    %2807 = vmatpush.bf16.msra.mxu0 %v2695
    %2808 = vmatpush.bf16.msra.mxu0 %v2694
    %2809 = vmatpush.bf16.msra.mxu0 %v2693
    %2810 = vmatpush.bf16.msra.mxu0 %v2692
    %2811 = vmatmul.bf16.gmra.mxu0 %v2373
    %v2812 = vpop.f32.mrf.mxu0
    %v2813 = vadd.f32 %v2800, %v2812
    %v2814 = vpop.f32.mrf.mxu0
    %2815 = vdwg.mxu0
    %2816 = vmatpush.bf16.msra.mxu0 %v2707
    %2817 = vmatpush.bf16.msra.mxu0 %v2706
    %2818 = vmatpush.bf16.msra.mxu0 %v2705
    %2819 = vmatpush.bf16.msra.mxu0 %v2704
    %2820 = vmatpush.bf16.msra.mxu0 %v2703
    %2821 = vmatpush.bf16.msra.mxu0 %v2702
    %2822 = vmatpush.bf16.msra.mxu0 %v2701
    %2823 = vmatpush.bf16.msra.mxu0 %v2700
    %2824 = vmatmul.bf16.gmra.mxu0 %v2374
    %v2825 = vpop.f32.mrf.mxu0
    %v2826 = vadd.f32 %v2813, %v2825
    %v2827 = vpop.f32.mrf.mxu0
    %2828 = vdwg.mxu0
    %2829 = vmatpush.bf16.msra.mxu0 %v2715
    %2830 = vmatpush.bf16.msra.mxu0 %v2714
    %2831 = vmatpush.bf16.msra.mxu0 %v2713
    %2832 = vmatpush.bf16.msra.mxu0 %v2712
    %2833 = vmatpush.bf16.msra.mxu0 %v2711
    %2834 = vmatpush.bf16.msra.mxu0 %v2710
    %2835 = vmatpush.bf16.msra.mxu0 %v2709
    %2836 = vmatpush.bf16.msra.mxu0 %v2708
    %2837 = vmatmul.bf16.gmra.mxu0 %v2375
    %v2838 = vpop.f32.mrf.mxu0
    %v2839 = vadd.f32 %v2826, %v2838
    %v2840 = vpop.f32.mrf.mxu0
    %2841 = vdwg.mxu0
    %v2842 = vmax.f32 %v2839, -4.0
    %v2843 = vmin.f32 %v2842, 15.0
    %v2844 = vmul.f32 %v2843, 1.442695
    %v2845 = vpow.pop %v2844
    %v2846 = vld [vmem:[%s1] sm:$0xff]
    %2848 = vrot.lane.b32.xlu0 %v2846, 12
    %v2849 = vpop.permute.xlu0 %2848
    %v2851 = vmul.f32 %v2845, %v2849
    %2853 = vrot.lane.b32.xlu0 %v2851, 116
    %v2854 = vpop.permute.xlu0 %2853
    %v2856 = vadd.f32 %v2839, %v2854
    %v2857 = vld [vmem:[%s9] sm:$0xff]
    %v2858 = vld [vmem:[%s9 + $0x8] sm:$0xff]
    %v2859 = vld [vmem:[%s9 + $0x10] sm:$0xff]
    %v2860 = vld [vmem:[%s9 + $0x18] sm:$0xff]
    %v2861 = vld [vmem:[%s9 + $0x20] sm:$0xff]
    %v2862 = vld [vmem:[%s9 + $0x28] sm:$0xff]
    %v2863 = vld [vmem:[%s9 + $0x30] sm:$0xff]
    %v2864 = vld [vmem:[%s9 + $0x38] sm:$0xff]
    %v2865 = vld [vmem:[%s9 + $0x40] sm:$0xff]
    %v2866 = vpack.c.bf16 %v2856, %v2856
    %v2867 = vld [vmem:[%s10] sm:$0xff]
    %v2868 = vld [vmem:[%s10 + $0x8] sm:$0xff]
    %v2869 = vld [vmem:[%s10 + $0x10] sm:$0xff]
    %v2870 = vld [vmem:[%s10 + $0x18] sm:$0x33]
    %v2871 = vld [vmem:[%s10 + $0x20] sm:$0x33]
    %v2872 = vld [vmem:[%s10 + $0x28] sm:$0x33]
    %v2879 = vunpack.c.l.b16 %v2867
    %v2880 = vunpack.c.h.b16 %v2867
    %v2881 = vunpack.c.l.b16 %v2868
    %v2882 = vunpack.c.h.b16 %v2868
    %v2883 = vunpack.c.l.b16 %v2869
    %v2884 = vunpack.c.h.b16 %v2869
    %v2885 = vunpack.c.l.b16 %v2870
    %v2886 = vunpack.c.h.b16 %v2870
    %v2887 = vunpack.c.l.b16 %v2871
    %v2888 = vunpack.c.h.b16 %v2871
    %v2889 = vunpack.c.l.b16 %v2872
    %v2890 = vunpack.c.h.b16 %v2872
    %v2891 = vpack.c.b16 %v2885, %v2879
    %v2892 = vpack.c.b16 %v2886, %v2880
    %v2893 = vpack.c.b16 %v2887, %v2881
    %v2894 = vpack.c.b16 %v2888, %v2882
    %v2895 = vpack.c.b16 %v2889, %v2883
    %v2896 = vpack.c.b16 %v2890, %v2884
    %vm2897 = vcmask 97280
    %v2899 = vsel %vm2897, %v2866, 0
    %vm2901 = vcmask 1045504
    %v2903 = vsel %vm2901, %v2891, 0
    %v2906 = vsel %vm2901, %v2892, 0
    %v2909 = vsel %vm2901, %v2893, 0
    %v2912 = vsel %vm2901, %v2894, 0
    %v2915 = vsel %vm2901, %v2895, 0
    %v2918 = vsel %vm2901, %v2896, 0
    %2920 = vmatpush.bf16.msra.mxu0 0
    %2921 = vmatpush.bf16.msra.mxu0 0
    %2922 = vmatpush.bf16.msra.mxu0 0
    %2923 = vmatpush.bf16.msra.mxu0 0
    %2924 = vmatpush.bf16.msra.mxu0 0
    %2925 = vmatpush.bf16.msra.mxu0 0
    %2926 = vmatpush.bf16.msra.mxu0 0
    %2927 = vmatpush.bf16.msra.mxu0 %v2903
    %2928 = vmatmul.bf16.gmra.mxu0 %v2899
    %v2929 = vpop.f32.mrf.mxu0
    %v2930 = vadd.f32 0.0, %v2929
    %v2931 = vpop.f32.mrf.mxu0
    %2932 = vdwg.mxu0
    %2933 = vmatpush.bf16.msra.mxu0 0
    %2934 = vmatpush.bf16.msra.mxu0 0
    %2935 = vmatpush.bf16.msra.mxu0 0
    %2936 = vmatpush.bf16.msra.mxu0 0
    %2937 = vmatpush.bf16.msra.mxu0 0
    %2938 = vmatpush.bf16.msra.mxu0 0
    %2939 = vmatpush.bf16.msra.mxu0 0
    %2940 = vmatpush.bf16.msra.mxu0 %v2906
    %2941 = vmatmul.bf16.gmra.mxu0 %v2899
    %v2942 = vpop.f32.mrf.mxu0
    %v2943 = vadd.f32 0.0, %v2942
    %v2944 = vpop.f32.mrf.mxu0
    %2945 = vdwg.mxu0
    %2946 = vmatpush.bf16.msra.mxu0 0
    %2947 = vmatpush.bf16.msra.mxu0 0
    %2948 = vmatpush.bf16.msra.mxu0 0
    %2949 = vmatpush.bf16.msra.mxu0 0
    %2950 = vmatpush.bf16.msra.mxu0 0
    %2951 = vmatpush.bf16.msra.mxu0 0
    %2952 = vmatpush.bf16.msra.mxu0 0
    %2953 = vmatpush.bf16.msra.mxu0 %v2909
    %2954 = vmatmul.bf16.gmra.mxu0 %v2899
    %v2955 = vpop.f32.mrf.mxu0
    %v2956 = vadd.f32 0.0, %v2955
    %v2957 = vpop.f32.mrf.mxu0
    %2958 = vdwg.mxu0
    %2959 = vmatpush.bf16.msra.mxu0 0
    %2960 = vmatpush.bf16.msra.mxu0 0
    %2961 = vmatpush.bf16.msra.mxu0 0
    %2962 = vmatpush.bf16.msra.mxu0 0
    %2963 = vmatpush.bf16.msra.mxu0 0
    %2964 = vmatpush.bf16.msra.mxu0 0
    %2965 = vmatpush.bf16.msra.mxu0 0
    %2966 = vmatpush.bf16.msra.mxu0 %v2912
    %2967 = vmatmul.bf16.gmra.mxu0 %v2899
    %v2968 = vpop.f32.mrf.mxu0
    %v2969 = vadd.f32 0.0, %v2968
    %v2970 = vpop.f32.mrf.mxu0
    %2971 = vdwg.mxu0
    %2972 = vmatpush.bf16.msra.mxu0 0
    %2973 = vmatpush.bf16.msra.mxu0 0
    %2974 = vmatpush.bf16.msra.mxu0 0
    %2975 = vmatpush.bf16.msra.mxu0 0
    %2976 = vmatpush.bf16.msra.mxu0 0
    %2977 = vmatpush.bf16.msra.mxu0 0
    %2978 = vmatpush.bf16.msra.mxu0 0
    %2979 = vmatpush.bf16.msra.mxu0 %v2915
    %2980 = vmatmul.bf16.gmra.mxu0 %v2899
    %v2981 = vpop.f32.mrf.mxu0
    %v2982 = vadd.f32 0.0, %v2981
    %v2983 = vpop.f32.mrf.mxu0
    %2984 = vdwg.mxu0
    %2985 = vmatpush.bf16.msra.mxu0 0
    %2986 = vmatpush.bf16.msra.mxu0 0
    %2987 = vmatpush.bf16.msra.mxu0 0
    %2988 = vmatpush.bf16.msra.mxu0 0
    %2989 = vmatpush.bf16.msra.mxu0 0
    %2990 = vmatpush.bf16.msra.mxu0 0
    %2991 = vmatpush.bf16.msra.mxu0 0
    %2992 = vmatpush.bf16.msra.mxu0 %v2918
    %2993 = vmatmul.bf16.gmra.mxu0 %v2899
    %v2994 = vpop.f32.mrf.mxu0
    %v2995 = vadd.f32 0.0, %v2994
    %v2996 = vpop.f32.mrf.mxu0
    %2997 = vdwg.mxu0
    %v3007 = vunpack.c.l.b16 %v2857
    %v3008 = vunpack.c.h.b16 %v2857
    %v3009 = vunpack.c.l.b16 %v2858
    %v3010 = vunpack.c.h.b16 %v2858
    %v3011 = vunpack.c.l.b16 %v2859
    %v3012 = vunpack.c.h.b16 %v2859
    %v3013 = vunpack.c.l.b16 %v2860
    %v3014 = vunpack.c.h.b16 %v2860
    %v3015 = vunpack.c.l.b16 %v2861
    %v3016 = vunpack.c.h.b16 %v2861
    %v3017 = vunpack.c.l.b16 %v2862
    %v3018 = vunpack.c.h.b16 %v2862
    %v3019 = vunpack.c.l.b16 %v2863
    %v3020 = vunpack.c.h.b16 %v2863
    %v3021 = vunpack.c.l.b16 %v2864
    %v3022 = vunpack.c.h.b16 %v2864
    %v3023 = vunpack.c.l.b16 %v2865
    %v3024 = vunpack.c.h.b16 %v2865
    %v3025 = vpack.c.b16 %v3013, %v3007
    %v3026 = vpack.c.b16 %v3014, %v3008
    %v3027 = vpack.c.b16 %v3015, %v3009
    %v3028 = vpack.c.b16 %v3016, %v3010
    %v3029 = vpack.c.b16 %v3017, %v3011
    %v3030 = vpack.c.b16 %v3018, %v3012
    %v3031 = vpack.c.b16 %v3019, %v3019
    %v3032 = vpack.c.b16 %v3020, %v3020
    %v3033 = vpack.c.b16 %v3021, %v3021
    %v3034 = vpack.c.b16 %v3022, %v3022
    %v3035 = vpack.c.b16 %v3023, %v3023
    %v3036 = vpack.c.b16 %v3024, %v3024
    %v3044 = vsel %vm163, %v3031, 0
    %v3047 = vsel %vm163, %v3032, 0
    %v3050 = vsel %vm163, %v3033, 0
    %v3053 = vsel %vm163, %v3034, 0
    %v3056 = vsel %vm163, %v3035, 0
    %v3059 = vsel %vm163, %v3036, 0
    %3061 = vmatpush.bf16.msra.mxu0 0
    %3062 = vmatpush.bf16.msra.mxu0 0
    %3063 = vmatpush.bf16.msra.mxu0 0
    %3064 = vmatpush.bf16.msra.mxu0 0
    %3065 = vmatpush.bf16.msra.mxu0 0
    %3066 = vmatpush.bf16.msra.mxu0 0
    %3067 = vmatpush.bf16.msra.mxu0 %v3044
    %3068 = vmatpush.bf16.msra.mxu0 %v3025
    %3069 = vmatmul.bf16.gmra.mxu0 %v161
    %v3070 = vpop.f32.mrf.mxu0
    %v3071 = vadd.f32 %v2930, %v3070
    %v3072 = vpop.f32.mrf.mxu0
    %3073 = vdwg.mxu0
    %3074 = vmatpush.bf16.msra.mxu0 0
    %3075 = vmatpush.bf16.msra.mxu0 0
    %3076 = vmatpush.bf16.msra.mxu0 0
    %3077 = vmatpush.bf16.msra.mxu0 0
    %3078 = vmatpush.bf16.msra.mxu0 0
    %3079 = vmatpush.bf16.msra.mxu0 0
    %3080 = vmatpush.bf16.msra.mxu0 %v3047
    %3081 = vmatpush.bf16.msra.mxu0 %v3026
    %3082 = vmatmul.bf16.gmra.mxu0 %v161
    %v3083 = vpop.f32.mrf.mxu0
    %v3084 = vadd.f32 %v2943, %v3083
    %v3085 = vpop.f32.mrf.mxu0
    %3086 = vdwg.mxu0
    %3087 = vmatpush.bf16.msra.mxu0 0
    %3088 = vmatpush.bf16.msra.mxu0 0
    %3089 = vmatpush.bf16.msra.mxu0 0
    %3090 = vmatpush.bf16.msra.mxu0 0
    %3091 = vmatpush.bf16.msra.mxu0 0
    %3092 = vmatpush.bf16.msra.mxu0 0
    %3093 = vmatpush.bf16.msra.mxu0 %v3050
    %3094 = vmatpush.bf16.msra.mxu0 %v3027
    %3095 = vmatmul.bf16.gmra.mxu0 %v161
    %v3096 = vpop.f32.mrf.mxu0
    %v3097 = vadd.f32 %v2956, %v3096
    %v3098 = vpop.f32.mrf.mxu0
    %3099 = vdwg.mxu0
    %3100 = vmatpush.bf16.msra.mxu0 0
    %3101 = vmatpush.bf16.msra.mxu0 0
    %3102 = vmatpush.bf16.msra.mxu0 0
    %3103 = vmatpush.bf16.msra.mxu0 0
    %3104 = vmatpush.bf16.msra.mxu0 0
    %3105 = vmatpush.bf16.msra.mxu0 0
    %3106 = vmatpush.bf16.msra.mxu0 %v3053
    %3107 = vmatpush.bf16.msra.mxu0 %v3028
    %3108 = vmatmul.bf16.gmra.mxu0 %v161
    %v3109 = vpop.f32.mrf.mxu0
    %v3110 = vadd.f32 %v2969, %v3109
    %v3111 = vpop.f32.mrf.mxu0
    %3112 = vdwg.mxu0
    %3113 = vmatpush.bf16.msra.mxu0 0
    %3114 = vmatpush.bf16.msra.mxu0 0
    %3115 = vmatpush.bf16.msra.mxu0 0
    %3116 = vmatpush.bf16.msra.mxu0 0
    %3117 = vmatpush.bf16.msra.mxu0 0
    %3118 = vmatpush.bf16.msra.mxu0 0
    %3119 = vmatpush.bf16.msra.mxu0 %v3056
    %3120 = vmatpush.bf16.msra.mxu0 %v3029
    %3121 = vmatmul.bf16.gmra.mxu0 %v161
    %v3122 = vpop.f32.mrf.mxu0
    %v3123 = vadd.f32 %v2982, %v3122
    %v3124 = vpop.f32.mrf.mxu0
    %3125 = vdwg.mxu0
    %3126 = vmatpush.bf16.msra.mxu0 0
    %3127 = vmatpush.bf16.msra.mxu0 0
    %3128 = vmatpush.bf16.msra.mxu0 0
    %3129 = vmatpush.bf16.msra.mxu0 0
    %3130 = vmatpush.bf16.msra.mxu0 0
    %3131 = vmatpush.bf16.msra.mxu0 0
    %3132 = vmatpush.bf16.msra.mxu0 %v3059
    %3133 = vmatpush.bf16.msra.mxu0 %v3030
    %3134 = vmatmul.bf16.gmra.mxu0 %v161
    %v3135 = vpop.f32.mrf.mxu0
    %v3136 = vadd.f32 %v2995, %v3135
    %v3137 = vpop.f32.mrf.mxu0
    %3138 = vdwg.mxu0
    %v3139 = vld [vmem:[%s11] sm:$0x3f]
    %v3141 = vperm.slane %v3139, 0
    %v3142 = vperm.slane %v3139, 1
    %v3143 = vperm.slane %v3139, 2
    %v3144 = vperm.slane %v3139, 3
    %v3145 = vperm.slane %v3139, 4
    %v3146 = vperm.slane %v3139, 5
    %v3153 = vadd.f32 %v3071, %v3141
    %v3154 = vadd.f32 %v3084, %v3142
    %v3155 = vadd.f32 %v3097, %v3143
    %v3156 = vadd.f32 %v3110, %v3144
    %v3157 = vadd.f32 %v3123, %v3145
    %v3158 = vadd.f32 %v3136, %v3146
    %v3159 = vmax.f32 %v3153, 0.0
    %v3160 = vmax.f32 %v3154, 0.0
    %v3161 = vmax.f32 %v3155, 0.0
    %v3162 = vmax.f32 %v3156, 0.0
    %v3163 = vmax.f32 %v3157, 0.0
    %v3164 = vmax.f32 %v3158, 0.0
    %v3165 = vpack.c.bf16 %v3159, %v3159
    %v3166 = vpack.c.bf16 %v3160, %v3160
    %v3167 = vpack.c.bf16 %v3161, %v3161
    %v3168 = vpack.c.bf16 %v3162, %v3162
    %v3169 = vpack.c.bf16 %v3163, %v3163
    %v3170 = vpack.c.bf16 %v3164, %v3164
    %v3171 = vld [vmem:[#allocation5] sm:$0xff]
    %v3172 = vld [vmem:[#allocation5 + $0x8] sm:$0xff]
    %v3173 = vld [vmem:[#allocation5 + $0x10] sm:$0xff]
    %v3174 = vld [vmem:[#allocation5 + $0x18] sm:$0xff]
    %v3175 = vld [vmem:[#allocation5 + $0x20] sm:$0xff]
    %v3176 = vld [vmem:[#allocation5 + $0x28] sm:$0xff]
    %v3177 = vld [vmem:[#allocation5 + $0x30] sm:$0xff]
    %v3178 = vld [vmem:[#allocation5 + $0x38] sm:$0xff]
    %v3179 = vld [vmem:[#allocation5 + $0x40] sm:$0xff]
    %v3180 = vld [vmem:[#allocation5 + $0x48] sm:$0xff]
    %v3181 = vld [vmem:[#allocation5 + $0x50] sm:$0xff]
    %v3182 = vld [vmem:[#allocation5 + $0x58] sm:$0xff]
    %v3183 = vld [vmem:[#allocation5 + $0x60] sm:$0xff]
    %v3184 = vld [vmem:[#allocation5 + $0x68] sm:$0xff]
    %v3185 = vld [vmem:[#allocation5 + $0x70] sm:$0xff]
    %v3186 = vld [vmem:[#allocation5 + $0x78] sm:$0xff]
    %v3187 = vld [vmem:[#allocation5 + $0x80] sm:$0xff]
    %v3188 = vld [vmem:[#allocation5 + $0x88] sm:$0xff]
    %v3189 = vld [vmem:[#allocation5 + $0x90] sm:$0xff]
    %v3190 = vld [vmem:[#allocation5 + $0x98] sm:$0xff]
    %v3191 = vld [vmem:[#allocation5 + $0xa0] sm:$0xff]
    %v3192 = vld [vmem:[#allocation5 + $0xa8] sm:$0xff]
    %v3193 = vld [vmem:[#allocation5 + $0xb0] sm:$0xff]
    %v3194 = vld [vmem:[#allocation5 + $0xb8] sm:$0xff]
    %v3195 = vld [vmem:[#allocation5 + $0xc0] sm:$0xff]
    %v3196 = vld [vmem:[#allocation5 + $0xc8] sm:$0xff]
    %v3197 = vld [vmem:[#allocation5 + $0xd0] sm:$0xff]
    %v3198 = vld [vmem:[#allocation5 + $0xd8] sm:$0xff]
    %v3199 = vld [vmem:[#allocation5 + $0xe0] sm:$0xff]
    %v3200 = vld [vmem:[#allocation5 + $0xe8] sm:$0xff]
    %v3201 = vld [vmem:[#allocation5 + $0xf0] sm:$0xff]
    %v3202 = vld [vmem:[#allocation5 + $0xf8] sm:$0xff]
    %v3203 = vld [vmem:[#allocation5 + $0x100] sm:$0xff]
    %v3204 = vld [vmem:[#allocation5 + $0x108] sm:$0xff]
    %v3205 = vld [vmem:[#allocation5 + $0x110] sm:$0xff]
    %v3206 = vld [vmem:[#allocation5 + $0x118] sm:$0xff]
    %v3207 = vld [vmem:[#allocation5 + $0x120] sm:$0xff]
    %v3208 = vld [vmem:[#allocation5 + $0x128] sm:$0xff]
    %v3209 = vld [vmem:[#allocation5 + $0x130] sm:$0xff]
    %v3210 = vld [vmem:[#allocation5 + $0x138] sm:$0xff]
    %v3211 = vld [vmem:[#allocation5 + $0x140] sm:$0xff]
    %v3212 = vld [vmem:[#allocation5 + $0x148] sm:$0xff]
    %v3213 = vld [vmem:[#allocation5 + $0x150] sm:$0xff]
    %v3214 = vld [vmem:[#allocation5 + $0x158] sm:$0xff]
    %v3215 = vld [vmem:[#allocation5 + $0x160] sm:$0xff]
    %v3216 = vld [vmem:[#allocation5 + $0x168] sm:$0xff]
    %v3217 = vld [vmem:[#allocation5 + $0x170] sm:$0xff]
    %v3218 = vld [vmem:[#allocation5 + $0x178] sm:$0xff]
    %v3219 = vld [vmem:[#allocation5 + $0x180] sm:$0xff]
    %v3220 = vld [vmem:[#allocation5 + $0x188] sm:$0xff]
    %v3221 = vld [vmem:[#allocation5 + $0x190] sm:$0xff]
    %v3222 = vld [vmem:[#allocation5 + $0x198] sm:$0xff]
    %v3223 = vld [vmem:[#allocation5 + $0x1a0] sm:$0xff]
    %v3224 = vld [vmem:[#allocation5 + $0x1a8] sm:$0xff]
    %v3225 = vld [vmem:[#allocation5 + $0x1b0] sm:$0xff]
    %v3226 = vld [vmem:[#allocation5 + $0x1b8] sm:$0xff]
    %v3227 = vld [vmem:[#allocation5 + $0x1c0] sm:$0xff]
    %v3228 = vld [vmem:[#allocation5 + $0x1c8] sm:$0xff]
    %v3229 = vld [vmem:[#allocation5 + $0x1d0] sm:$0xff]
    %v3230 = vld [vmem:[#allocation5 + $0x1d8] sm:$0xff]
    %v3231 = vld [vmem:[#allocation5 + $0x1e0] sm:$0xff]
    %v3232 = vld [vmem:[#allocation5 + $0x1e8] sm:$0xff]
    %v3233 = vld [vmem:[#allocation5 + $0x1f0] sm:$0xff]
    %v3234 = vld [vmem:[#allocation5 + $0x1f8] sm:$0xff]
    %v3235 = vld [vmem:[#allocation5 + $0x200] sm:$0xff]
    %v3236 = vld [vmem:[#allocation5 + $0x208] sm:$0xff]
    %v3237 = vld [vmem:[#allocation5 + $0x210] sm:$0xff]
    %v3238 = vld [vmem:[#allocation5 + $0x218] sm:$0xff]
    %v3239 = vld [vmem:[#allocation5 + $0x220] sm:$0xff]
    %v3240 = vld [vmem:[#allocation5 + $0x228] sm:$0xff]
    %v3241 = vld [vmem:[#allocation5 + $0x230] sm:$0xff]
    %v3242 = vld [vmem:[#allocation5 + $0x238] sm:$0xff]
    %v3243 = vld [vmem:[#allocation5 + $0x240] sm:$0xff]
    %v3244 = vld [vmem:[#allocation5 + $0x248] sm:$0xff]
    %v3245 = vld [vmem:[#allocation5 + $0x250] sm:$0xff]
    %v3246 = vld [vmem:[#allocation5 + $0x258] sm:$0xff]
    %v3247 = vld [vmem:[#allocation5 + $0x260] sm:$0xff]
    %v3248 = vld [vmem:[#allocation5 + $0x268] sm:$0xff]
    %v3249 = vld [vmem:[#allocation5 + $0x270] sm:$0xff]
    %v3250 = vld [vmem:[#allocation5 + $0x278] sm:$0xff]
    %v3251 = vld [vmem:[#allocation5 + $0x280] sm:$0xff]
    %v3252 = vld [vmem:[#allocation5 + $0x288] sm:$0xff]
    %v3253 = vld [vmem:[#allocation5 + $0x290] sm:$0xff]
    %v3254 = vld [vmem:[#allocation5 + $0x298] sm:$0xff]
    %v3255 = vld [vmem:[#allocation5 + $0x2a0] sm:$0xff]
    %v3256 = vld [vmem:[#allocation5 + $0x2a8] sm:$0xff]
    %v3257 = vld [vmem:[#allocation5 + $0x2b0] sm:$0xff]
    %v3258 = vld [vmem:[#allocation5 + $0x2b8] sm:$0xff]
    %v3259 = vld [vmem:[#allocation5 + $0x2c0] sm:$0xff]
    %v3260 = vld [vmem:[#allocation5 + $0x2c8] sm:$0xff]
    %v3261 = vld [vmem:[#allocation5 + $0x2d0] sm:$0xff]
    %v3262 = vld [vmem:[#allocation5 + $0x2d8] sm:$0xff]
    %v3263 = vld [vmem:[#allocation5 + $0x2e0] sm:$0xff]
    %v3264 = vld [vmem:[#allocation5 + $0x2e8] sm:$0xff]
    %v3265 = vld [vmem:[#allocation5 + $0x2f0] sm:$0xff]
    %v3266 = vld [vmem:[#allocation5 + $0x2f8] sm:$0xff]
    %v3267 = vld [vmem:[#allocation5 + $0x300] sm:$0xff]
    %v3268 = vld [vmem:[#allocation5 + $0x308] sm:$0xff]
    %v3269 = vld [vmem:[#allocation5 + $0x310] sm:$0xff]
    %v3270 = vld [vmem:[#allocation5 + $0x318] sm:$0xff]
    %v3271 = vld [vmem:[#allocation5 + $0x320] sm:$0xff]
    %v3272 = vld [vmem:[#allocation5 + $0x328] sm:$0xff]
    %v3273 = vld [vmem:[#allocation5 + $0x330] sm:$0xff]
    %v3274 = vld [vmem:[#allocation5 + $0x338] sm:$0xff]
    %v3275 = vld [vmem:[#allocation5 + $0x340] sm:$0xff]
    %v3276 = vld [vmem:[#allocation5 + $0x348] sm:$0xff]
    %v3277 = vld [vmem:[#allocation5 + $0x350] sm:$0xff]
    %v3278 = vld [vmem:[#allocation5 + $0x358] sm:$0xff]
    %v3279 = vld [vmem:[#allocation5 + $0x360] sm:$0xff]
    %v3280 = vld [vmem:[#allocation5 + $0x368] sm:$0xff]
    %v3281 = vld [vmem:[#allocation5 + $0x370] sm:$0xff]
    %v3282 = vld [vmem:[#allocation5 + $0x378] sm:$0xff]
    %v3283 = vld [vmem:[#allocation5 + $0x380] sm:$0xff]
    %v3284 = vld [vmem:[#allocation5 + $0x388] sm:$0xff]
    %v3285 = vld [vmem:[#allocation5 + $0x390] sm:$0xff]
    %v3286 = vld [vmem:[#allocation5 + $0x398] sm:$0xff]
    %v3287 = vld [vmem:[#allocation5 + $0x3a0] sm:$0xff]
    %v3288 = vld [vmem:[#allocation5 + $0x3a8] sm:$0xff]
    %v3289 = vld [vmem:[#allocation5 + $0x3b0] sm:$0xff]
    %v3290 = vld [vmem:[#allocation5 + $0x3b8] sm:$0xff]
    %v3291 = vld [vmem:[#allocation5 + $0x3c0] sm:$0xff]
    %v3292 = vld [vmem:[#allocation5 + $0x3c8] sm:$0xff]
    %v3293 = vld [vmem:[#allocation5 + $0x3d0] sm:$0xff]
    %v3294 = vld [vmem:[#allocation5 + $0x3d8] sm:$0xff]
    %v3295 = vld [vmem:[#allocation5 + $0x3e0] sm:$0xff]
    %v3296 = vld [vmem:[#allocation5 + $0x3e8] sm:$0xff]
    %v3297 = vld [vmem:[#allocation5 + $0x3f0] sm:$0xff]
    %v3298 = vld [vmem:[#allocation5 + $0x3f8] sm:$0xff]
    %v3299 = vld [vmem:[#allocation5 + $0x400] sm:$0xff]
    %v3300 = vld [vmem:[#allocation5 + $0x408] sm:$0xff]
    %v3301 = vld [vmem:[#allocation5 + $0x410] sm:$0xff]
    %v3302 = vld [vmem:[#allocation5 + $0x418] sm:$0xff]
    %v3303 = vld [vmem:[#allocation5 + $0x420] sm:$0xff]
    %v3304 = vld [vmem:[#allocation5 + $0x428] sm:$0xff]
    %v3305 = vld [vmem:[#allocation5 + $0x430] sm:$0xff]
    %v3306 = vld [vmem:[#allocation5 + $0x438] sm:$0xff]
    %v3307 = vld [vmem:[#allocation5 + $0x440] sm:$0xff]
    %v3308 = vld [vmem:[#allocation5 + $0x448] sm:$0xff]
    %v3309 = vld [vmem:[#allocation5 + $0x450] sm:$0xff]
    %v3310 = vld [vmem:[#allocation5 + $0x458] sm:$0xff]
    %v3311 = vld [vmem:[#allocation5 + $0x460] sm:$0xff]
    %v3312 = vld [vmem:[#allocation5 + $0x468] sm:$0xff]
    %v3313 = vld [vmem:[#allocation5 + $0x470] sm:$0xff]
    %v3314 = vld [vmem:[#allocation5 + $0x478] sm:$0xff]
    %v3315 = vunpack.c.0.s8 %v3171
    %v3316 = vunpack.c.0.s8 %v3172
    %v3317 = vunpack.c.0.s8 %v3173
    %v3318 = vunpack.c.0.s8 %v3174
    %v3319 = vunpack.c.0.s8 %v3175
    %v3320 = vunpack.c.0.s8 %v3176
    %v3321 = vunpack.c.1.s8 %v3171
    %v3322 = vunpack.c.1.s8 %v3172
    %v3323 = vunpack.c.1.s8 %v3173
    %v3324 = vunpack.c.1.s8 %v3174
    %v3325 = vunpack.c.1.s8 %v3175
    %v3326 = vunpack.c.1.s8 %v3176
    %v3327 = vunpack.c.2.s8 %v3171
    %v3328 = vunpack.c.2.s8 %v3172
    %v3329 = vunpack.c.2.s8 %v3173
    %v3330 = vunpack.c.2.s8 %v3174
    %v3331 = vunpack.c.2.s8 %v3175
    %v3332 = vunpack.c.2.s8 %v3176
    %v3333 = vunpack.c.3.s8 %v3171
    %v3334 = vunpack.c.3.s8 %v3172
    %v3335 = vunpack.c.3.s8 %v3173
    %v3336 = vunpack.c.3.s8 %v3174
    %v3337 = vunpack.c.3.s8 %v3175
    %v3338 = vunpack.c.3.s8 %v3176
    %v3339 = vunpack.c.0.s8 %v3177
    %v3340 = vunpack.c.0.s8 %v3178
    %v3341 = vunpack.c.0.s8 %v3179
    %v3342 = vunpack.c.0.s8 %v3180
    %v3343 = vunpack.c.0.s8 %v3181
    %v3344 = vunpack.c.0.s8 %v3182
    %v3345 = vunpack.c.1.s8 %v3177
    %v3346 = vunpack.c.1.s8 %v3178
    %v3347 = vunpack.c.1.s8 %v3179
    %v3348 = vunpack.c.1.s8 %v3180
    %v3349 = vunpack.c.1.s8 %v3181
    %v3350 = vunpack.c.1.s8 %v3182
    %v3351 = vunpack.c.2.s8 %v3177
    %v3352 = vunpack.c.2.s8 %v3178
    %v3353 = vunpack.c.2.s8 %v3179
    %v3354 = vunpack.c.2.s8 %v3180
    %v3355 = vunpack.c.2.s8 %v3181
    %v3356 = vunpack.c.2.s8 %v3182
    %v3357 = vunpack.c.3.s8 %v3177
    %v3358 = vunpack.c.3.s8 %v3178
    %v3359 = vunpack.c.3.s8 %v3179
    %v3360 = vunpack.c.3.s8 %v3180
    %v3361 = vunpack.c.3.s8 %v3181
    %v3362 = vunpack.c.3.s8 %v3182
    %v3363 = vunpack.c.0.s8 %v3183
    %v3364 = vunpack.c.0.s8 %v3184
    %v3365 = vunpack.c.0.s8 %v3185
    %v3366 = vunpack.c.0.s8 %v3186
    %v3367 = vunpack.c.0.s8 %v3187
    %v3368 = vunpack.c.0.s8 %v3188
    %v3369 = vunpack.c.1.s8 %v3183
    %v3370 = vunpack.c.1.s8 %v3184
    %v3371 = vunpack.c.1.s8 %v3185
    %v3372 = vunpack.c.1.s8 %v3186
    %v3373 = vunpack.c.1.s8 %v3187
    %v3374 = vunpack.c.1.s8 %v3188
    %v3375 = vunpack.c.2.s8 %v3183
    %v3376 = vunpack.c.2.s8 %v3184
    %v3377 = vunpack.c.2.s8 %v3185
    %v3378 = vunpack.c.2.s8 %v3186
    %v3379 = vunpack.c.2.s8 %v3187
    %v3380 = vunpack.c.2.s8 %v3188
    %v3381 = vunpack.c.3.s8 %v3183
    %v3382 = vunpack.c.3.s8 %v3184
    %v3383 = vunpack.c.3.s8 %v3185
    %v3384 = vunpack.c.3.s8 %v3186
    %v3385 = vunpack.c.3.s8 %v3187
    %v3386 = vunpack.c.3.s8 %v3188
    %v3387 = vunpack.c.0.s8 %v3189
    %v3388 = vunpack.c.0.s8 %v3190
    %v3389 = vunpack.c.0.s8 %v3191
    %v3390 = vunpack.c.0.s8 %v3192
    %v3391 = vunpack.c.0.s8 %v3193
    %v3392 = vunpack.c.0.s8 %v3194
    %v3393 = vunpack.c.1.s8 %v3189
    %v3394 = vunpack.c.1.s8 %v3190
    %v3395 = vunpack.c.1.s8 %v3191
    %v3396 = vunpack.c.1.s8 %v3192
    %v3397 = vunpack.c.1.s8 %v3193
    %v3398 = vunpack.c.1.s8 %v3194
    %v3399 = vunpack.c.2.s8 %v3189
    %v3400 = vunpack.c.2.s8 %v3190
    %v3401 = vunpack.c.2.s8 %v3191
    %v3402 = vunpack.c.2.s8 %v3192
    %v3403 = vunpack.c.2.s8 %v3193
    %v3404 = vunpack.c.2.s8 %v3194
    %v3405 = vunpack.c.3.s8 %v3189
    %v3406 = vunpack.c.3.s8 %v3190
    %v3407 = vunpack.c.3.s8 %v3191
    %v3408 = vunpack.c.3.s8 %v3192
    %v3409 = vunpack.c.3.s8 %v3193
    %v3410 = vunpack.c.3.s8 %v3194
    %v3411 = vunpack.c.0.s8 %v3195
    %v3412 = vunpack.c.0.s8 %v3196
    %v3413 = vunpack.c.0.s8 %v3197
    %v3414 = vunpack.c.0.s8 %v3198
    %v3415 = vunpack.c.0.s8 %v3199
    %v3416 = vunpack.c.0.s8 %v3200
    %v3417 = vunpack.c.1.s8 %v3195
    %v3418 = vunpack.c.1.s8 %v3196
    %v3419 = vunpack.c.1.s8 %v3197
    %v3420 = vunpack.c.1.s8 %v3198
    %v3421 = vunpack.c.1.s8 %v3199
    %v3422 = vunpack.c.1.s8 %v3200
    %v3423 = vunpack.c.2.s8 %v3195
    %v3424 = vunpack.c.2.s8 %v3196
    %v3425 = vunpack.c.2.s8 %v3197
    %v3426 = vunpack.c.2.s8 %v3198
    %v3427 = vunpack.c.2.s8 %v3199
    %v3428 = vunpack.c.2.s8 %v3200
    %v3429 = vunpack.c.3.s8 %v3195
    %v3430 = vunpack.c.3.s8 %v3196
    %v3431 = vunpack.c.3.s8 %v3197
    %v3432 = vunpack.c.3.s8 %v3198
    %v3433 = vunpack.c.3.s8 %v3199
    %v3434 = vunpack.c.3.s8 %v3200
    %v3435 = vunpack.c.0.s8 %v3201
    %v3436 = vunpack.c.0.s8 %v3202
    %v3437 = vunpack.c.0.s8 %v3203
    %v3438 = vunpack.c.0.s8 %v3204
    %v3439 = vunpack.c.0.s8 %v3205
    %v3440 = vunpack.c.0.s8 %v3206
    %v3441 = vunpack.c.1.s8 %v3201
    %v3442 = vunpack.c.1.s8 %v3202
    %v3443 = vunpack.c.1.s8 %v3203
    %v3444 = vunpack.c.1.s8 %v3204
    %v3445 = vunpack.c.1.s8 %v3205
    %v3446 = vunpack.c.1.s8 %v3206
    %v3447 = vunpack.c.2.s8 %v3201
    %v3448 = vunpack.c.2.s8 %v3202
    %v3449 = vunpack.c.2.s8 %v3203
    %v3450 = vunpack.c.2.s8 %v3204
    %v3451 = vunpack.c.2.s8 %v3205
    %v3452 = vunpack.c.2.s8 %v3206
    %v3453 = vunpack.c.3.s8 %v3201
    %v3454 = vunpack.c.3.s8 %v3202
    %v3455 = vunpack.c.3.s8 %v3203
    %v3456 = vunpack.c.3.s8 %v3204
    %v3457 = vunpack.c.3.s8 %v3205
    %v3458 = vunpack.c.3.s8 %v3206
    %v3459 = vunpack.c.0.s8 %v3207
    %v3460 = vunpack.c.0.s8 %v3208
    %v3461 = vunpack.c.0.s8 %v3209
    %v3462 = vunpack.c.0.s8 %v3210
    %v3463 = vunpack.c.0.s8 %v3211
    %v3464 = vunpack.c.0.s8 %v3212
    %v3465 = vunpack.c.1.s8 %v3207
    %v3466 = vunpack.c.1.s8 %v3208
    %v3467 = vunpack.c.1.s8 %v3209
    %v3468 = vunpack.c.1.s8 %v3210
    %v3469 = vunpack.c.1.s8 %v3211
    %v3470 = vunpack.c.1.s8 %v3212
    %v3471 = vunpack.c.2.s8 %v3207
    %v3472 = vunpack.c.2.s8 %v3208
    %v3473 = vunpack.c.2.s8 %v3209
    %v3474 = vunpack.c.2.s8 %v3210
    %v3475 = vunpack.c.2.s8 %v3211
    %v3476 = vunpack.c.2.s8 %v3212
    %v3477 = vunpack.c.3.s8 %v3207
    %v3478 = vunpack.c.3.s8 %v3208
    %v3479 = vunpack.c.3.s8 %v3209
    %v3480 = vunpack.c.3.s8 %v3210
    %v3481 = vunpack.c.3.s8 %v3211
    %v3482 = vunpack.c.3.s8 %v3212
    %v3483 = vunpack.c.0.s8 %v3213
    %v3484 = vunpack.c.0.s8 %v3214
    %v3485 = vunpack.c.0.s8 %v3215
    %v3486 = vunpack.c.0.s8 %v3216
    %v3487 = vunpack.c.0.s8 %v3217
    %v3488 = vunpack.c.0.s8 %v3218
    %v3489 = vunpack.c.1.s8 %v3213
    %v3490 = vunpack.c.1.s8 %v3214
    %v3491 = vunpack.c.1.s8 %v3215
    %v3492 = vunpack.c.1.s8 %v3216
    %v3493 = vunpack.c.1.s8 %v3217
    %v3494 = vunpack.c.1.s8 %v3218
    %v3495 = vunpack.c.2.s8 %v3213
    %v3496 = vunpack.c.2.s8 %v3214
    %v3497 = vunpack.c.2.s8 %v3215
    %v3498 = vunpack.c.2.s8 %v3216
    %v3499 = vunpack.c.2.s8 %v3217
    %v3500 = vunpack.c.2.s8 %v3218
    %v3501 = vunpack.c.3.s8 %v3213
    %v3502 = vunpack.c.3.s8 %v3214
    %v3503 = vunpack.c.3.s8 %v3215
    %v3504 = vunpack.c.3.s8 %v3216
    %v3505 = vunpack.c.3.s8 %v3217
    %v3506 = vunpack.c.3.s8 %v3218
    %v3507 = vunpack.c.0.s8 %v3219
    %v3508 = vunpack.c.0.s8 %v3220
    %v3509 = vunpack.c.0.s8 %v3221
    %v3510 = vunpack.c.0.s8 %v3222
    %v3511 = vunpack.c.0.s8 %v3223
    %v3512 = vunpack.c.0.s8 %v3224
    %v3513 = vunpack.c.1.s8 %v3219
    %v3514 = vunpack.c.1.s8 %v3220
    %v3515 = vunpack.c.1.s8 %v3221
    %v3516 = vunpack.c.1.s8 %v3222
    %v3517 = vunpack.c.1.s8 %v3223
    %v3518 = vunpack.c.1.s8 %v3224
    %v3519 = vunpack.c.2.s8 %v3219
    %v3520 = vunpack.c.2.s8 %v3220
    %v3521 = vunpack.c.2.s8 %v3221
    %v3522 = vunpack.c.2.s8 %v3222
    %v3523 = vunpack.c.2.s8 %v3223
    %v3524 = vunpack.c.2.s8 %v3224
    %v3525 = vunpack.c.3.s8 %v3219
    %v3526 = vunpack.c.3.s8 %v3220
    %v3527 = vunpack.c.3.s8 %v3221
    %v3528 = vunpack.c.3.s8 %v3222
    %v3529 = vunpack.c.3.s8 %v3223
    %v3530 = vunpack.c.3.s8 %v3224
    %v3531 = vunpack.c.0.s8 %v3225
    %v3532 = vunpack.c.0.s8 %v3226
    %v3533 = vunpack.c.0.s8 %v3227
    %v3534 = vunpack.c.0.s8 %v3228
    %v3535 = vunpack.c.0.s8 %v3229
    %v3536 = vunpack.c.0.s8 %v3230
    %v3537 = vunpack.c.1.s8 %v3225
    %v3538 = vunpack.c.1.s8 %v3226
    %v3539 = vunpack.c.1.s8 %v3227
    %v3540 = vunpack.c.1.s8 %v3228
    %v3541 = vunpack.c.1.s8 %v3229
    %v3542 = vunpack.c.1.s8 %v3230
    %v3543 = vunpack.c.2.s8 %v3225
    %v3544 = vunpack.c.2.s8 %v3226
    %v3545 = vunpack.c.2.s8 %v3227
    %v3546 = vunpack.c.2.s8 %v3228
    %v3547 = vunpack.c.2.s8 %v3229
    %v3548 = vunpack.c.2.s8 %v3230
    %v3549 = vunpack.c.3.s8 %v3225
    %v3550 = vunpack.c.3.s8 %v3226
    %v3551 = vunpack.c.3.s8 %v3227
    %v3552 = vunpack.c.3.s8 %v3228
    %v3553 = vunpack.c.3.s8 %v3229
    %v3554 = vunpack.c.3.s8 %v3230
    %v3555 = vunpack.c.0.s8 %v3231
    %v3556 = vunpack.c.0.s8 %v3232
    %v3557 = vunpack.c.0.s8 %v3233
    %v3558 = vunpack.c.0.s8 %v3234
    %v3559 = vunpack.c.0.s8 %v3235
    %v3560 = vunpack.c.0.s8 %v3236
    %v3561 = vunpack.c.1.s8 %v3231
    %v3562 = vunpack.c.1.s8 %v3232
    %v3563 = vunpack.c.1.s8 %v3233
    %v3564 = vunpack.c.1.s8 %v3234
    %v3565 = vunpack.c.1.s8 %v3235
    %v3566 = vunpack.c.1.s8 %v3236
    %v3567 = vunpack.c.2.s8 %v3231
    %v3568 = vunpack.c.2.s8 %v3232
    %v3569 = vunpack.c.2.s8 %v3233
    %v3570 = vunpack.c.2.s8 %v3234
    %v3571 = vunpack.c.2.s8 %v3235
    %v3572 = vunpack.c.2.s8 %v3236
    %v3573 = vunpack.c.3.s8 %v3231
    %v3574 = vunpack.c.3.s8 %v3232
    %v3575 = vunpack.c.3.s8 %v3233
    %v3576 = vunpack.c.3.s8 %v3234
    %v3577 = vunpack.c.3.s8 %v3235
    %v3578 = vunpack.c.3.s8 %v3236
    %v3579 = vunpack.c.0.s8 %v3237
    %v3580 = vunpack.c.0.s8 %v3238
    %v3581 = vunpack.c.0.s8 %v3239
    %v3582 = vunpack.c.0.s8 %v3240
    %v3583 = vunpack.c.0.s8 %v3241
    %v3584 = vunpack.c.0.s8 %v3242
    %v3585 = vunpack.c.1.s8 %v3237
    %v3586 = vunpack.c.1.s8 %v3238
    %v3587 = vunpack.c.1.s8 %v3239
    %v3588 = vunpack.c.1.s8 %v3240
    %v3589 = vunpack.c.1.s8 %v3241
    %v3590 = vunpack.c.1.s8 %v3242
    %v3591 = vunpack.c.2.s8 %v3237
    %v3592 = vunpack.c.2.s8 %v3238
    %v3593 = vunpack.c.2.s8 %v3239
    %v3594 = vunpack.c.2.s8 %v3240
    %v3595 = vunpack.c.2.s8 %v3241
    %v3596 = vunpack.c.2.s8 %v3242
    %v3597 = vunpack.c.3.s8 %v3237
    %v3598 = vunpack.c.3.s8 %v3238
    %v3599 = vunpack.c.3.s8 %v3239
    %v3600 = vunpack.c.3.s8 %v3240
    %v3601 = vunpack.c.3.s8 %v3241
    %v3602 = vunpack.c.3.s8 %v3242
    %v3603 = vunpack.c.0.s8 %v3243
    %v3604 = vunpack.c.0.s8 %v3244
    %v3605 = vunpack.c.0.s8 %v3245
    %v3606 = vunpack.c.0.s8 %v3246
    %v3607 = vunpack.c.0.s8 %v3247
    %v3608 = vunpack.c.0.s8 %v3248
    %v3609 = vunpack.c.1.s8 %v3243
    %v3610 = vunpack.c.1.s8 %v3244
    %v3611 = vunpack.c.1.s8 %v3245
    %v3612 = vunpack.c.1.s8 %v3246
    %v3613 = vunpack.c.1.s8 %v3247
    %v3614 = vunpack.c.1.s8 %v3248
    %v3615 = vunpack.c.2.s8 %v3243
    %v3616 = vunpack.c.2.s8 %v3244
    %v3617 = vunpack.c.2.s8 %v3245
    %v3618 = vunpack.c.2.s8 %v3246
    %v3619 = vunpack.c.2.s8 %v3247
    %v3620 = vunpack.c.2.s8 %v3248
    %v3621 = vunpack.c.3.s8 %v3243
    %v3622 = vunpack.c.3.s8 %v3244
    %v3623 = vunpack.c.3.s8 %v3245
    %v3624 = vunpack.c.3.s8 %v3246
    %v3625 = vunpack.c.3.s8 %v3247
    %v3626 = vunpack.c.3.s8 %v3248
    %v3627 = vunpack.c.0.s8 %v3249
    %v3628 = vunpack.c.0.s8 %v3250
    %v3629 = vunpack.c.0.s8 %v3251
    %v3630 = vunpack.c.0.s8 %v3252
    %v3631 = vunpack.c.0.s8 %v3253
    %v3632 = vunpack.c.0.s8 %v3254
    %v3633 = vunpack.c.1.s8 %v3249
    %v3634 = vunpack.c.1.s8 %v3250
    %v3635 = vunpack.c.1.s8 %v3251
    %v3636 = vunpack.c.1.s8 %v3252
    %v3637 = vunpack.c.1.s8 %v3253
    %v3638 = vunpack.c.1.s8 %v3254
    %v3639 = vunpack.c.2.s8 %v3249
    %v3640 = vunpack.c.2.s8 %v3250
    %v3641 = vunpack.c.2.s8 %v3251
    %v3642 = vunpack.c.2.s8 %v3252
    %v3643 = vunpack.c.2.s8 %v3253
    %v3644 = vunpack.c.2.s8 %v3254
    %v3645 = vunpack.c.3.s8 %v3249
    %v3646 = vunpack.c.3.s8 %v3250
    %v3647 = vunpack.c.3.s8 %v3251
    %v3648 = vunpack.c.3.s8 %v3252
    %v3649 = vunpack.c.3.s8 %v3253
    %v3650 = vunpack.c.3.s8 %v3254
    %v3651 = vunpack.c.0.s8 %v3255
    %v3652 = vunpack.c.0.s8 %v3256
    %v3653 = vunpack.c.0.s8 %v3257
    %v3654 = vunpack.c.0.s8 %v3258
    %v3655 = vunpack.c.0.s8 %v3259
    %v3656 = vunpack.c.0.s8 %v3260
    %v3657 = vunpack.c.1.s8 %v3255
    %v3658 = vunpack.c.1.s8 %v3256
    %v3659 = vunpack.c.1.s8 %v3257
    %v3660 = vunpack.c.1.s8 %v3258
    %v3661 = vunpack.c.1.s8 %v3259
    %v3662 = vunpack.c.1.s8 %v3260
    %v3663 = vunpack.c.2.s8 %v3255
    %v3664 = vunpack.c.2.s8 %v3256
    %v3665 = vunpack.c.2.s8 %v3257
    %v3666 = vunpack.c.2.s8 %v3258
    %v3667 = vunpack.c.2.s8 %v3259
    %v3668 = vunpack.c.2.s8 %v3260
    %v3669 = vunpack.c.3.s8 %v3255
    %v3670 = vunpack.c.3.s8 %v3256
    %v3671 = vunpack.c.3.s8 %v3257
    %v3672 = vunpack.c.3.s8 %v3258
    %v3673 = vunpack.c.3.s8 %v3259
    %v3674 = vunpack.c.3.s8 %v3260
    %v3675 = vunpack.c.0.s8 %v3261
    %v3676 = vunpack.c.0.s8 %v3262
    %v3677 = vunpack.c.0.s8 %v3263
    %v3678 = vunpack.c.0.s8 %v3264
    %v3679 = vunpack.c.0.s8 %v3265
    %v3680 = vunpack.c.0.s8 %v3266
    %v3681 = vunpack.c.1.s8 %v3261
    %v3682 = vunpack.c.1.s8 %v3262
    %v3683 = vunpack.c.1.s8 %v3263
    %v3684 = vunpack.c.1.s8 %v3264
    %v3685 = vunpack.c.1.s8 %v3265
    %v3686 = vunpack.c.1.s8 %v3266
    %v3687 = vunpack.c.2.s8 %v3261
    %v3688 = vunpack.c.2.s8 %v3262
    %v3689 = vunpack.c.2.s8 %v3263
    %v3690 = vunpack.c.2.s8 %v3264
    %v3691 = vunpack.c.2.s8 %v3265
    %v3692 = vunpack.c.2.s8 %v3266
    %v3693 = vunpack.c.3.s8 %v3261
    %v3694 = vunpack.c.3.s8 %v3262
    %v3695 = vunpack.c.3.s8 %v3263
    %v3696 = vunpack.c.3.s8 %v3264
    %v3697 = vunpack.c.3.s8 %v3265
    %v3698 = vunpack.c.3.s8 %v3266
    %v3699 = vunpack.c.0.s8 %v3267
    %v3700 = vunpack.c.0.s8 %v3268
    %v3701 = vunpack.c.0.s8 %v3269
    %v3702 = vunpack.c.0.s8 %v3270
    %v3703 = vunpack.c.0.s8 %v3271
    %v3704 = vunpack.c.0.s8 %v3272
    %v3705 = vunpack.c.1.s8 %v3267
    %v3706 = vunpack.c.1.s8 %v3268
    %v3707 = vunpack.c.1.s8 %v3269
    %v3708 = vunpack.c.1.s8 %v3270
    %v3709 = vunpack.c.1.s8 %v3271
    %v3710 = vunpack.c.1.s8 %v3272
    %v3711 = vunpack.c.2.s8 %v3267
    %v3712 = vunpack.c.2.s8 %v3268
    %v3713 = vunpack.c.2.s8 %v3269
    %v3714 = vunpack.c.2.s8 %v3270
    %v3715 = vunpack.c.2.s8 %v3271
    %v3716 = vunpack.c.2.s8 %v3272
    %v3717 = vunpack.c.3.s8 %v3267
    %v3718 = vunpack.c.3.s8 %v3268
    %v3719 = vunpack.c.3.s8 %v3269
    %v3720 = vunpack.c.3.s8 %v3270
    %v3721 = vunpack.c.3.s8 %v3271
    %v3722 = vunpack.c.3.s8 %v3272
    %v3723 = vunpack.c.0.s8 %v3273
    %v3724 = vunpack.c.0.s8 %v3274
    %v3725 = vunpack.c.0.s8 %v3275
    %v3726 = vunpack.c.0.s8 %v3276
    %v3727 = vunpack.c.0.s8 %v3277
    %v3728 = vunpack.c.0.s8 %v3278
    %v3729 = vunpack.c.1.s8 %v3273
    %v3730 = vunpack.c.1.s8 %v3274
    %v3731 = vunpack.c.1.s8 %v3275
    %v3732 = vunpack.c.1.s8 %v3276
    %v3733 = vunpack.c.1.s8 %v3277
    %v3734 = vunpack.c.1.s8 %v3278
    %v3735 = vunpack.c.2.s8 %v3273
    %v3736 = vunpack.c.2.s8 %v3274
    %v3737 = vunpack.c.2.s8 %v3275
    %v3738 = vunpack.c.2.s8 %v3276
    %v3739 = vunpack.c.2.s8 %v3277
    %v3740 = vunpack.c.2.s8 %v3278
    %v3741 = vunpack.c.3.s8 %v3273
    %v3742 = vunpack.c.3.s8 %v3274
    %v3743 = vunpack.c.3.s8 %v3275
    %v3744 = vunpack.c.3.s8 %v3276
    %v3745 = vunpack.c.3.s8 %v3277
    %v3746 = vunpack.c.3.s8 %v3278
    %v3747 = vunpack.c.0.s8 %v3279
    %v3748 = vunpack.c.0.s8 %v3280
    %v3749 = vunpack.c.0.s8 %v3281
    %v3750 = vunpack.c.0.s8 %v3282
    %v3751 = vunpack.c.0.s8 %v3283
    %v3752 = vunpack.c.0.s8 %v3284
    %v3753 = vunpack.c.1.s8 %v3279
    %v3754 = vunpack.c.1.s8 %v3280
    %v3755 = vunpack.c.1.s8 %v3281
    %v3756 = vunpack.c.1.s8 %v3282
    %v3757 = vunpack.c.1.s8 %v3283
    %v3758 = vunpack.c.1.s8 %v3284
    %v3759 = vunpack.c.2.s8 %v3279
    %v3760 = vunpack.c.2.s8 %v3280
    %v3761 = vunpack.c.2.s8 %v3281
    %v3762 = vunpack.c.2.s8 %v3282
    %v3763 = vunpack.c.2.s8 %v3283
    %v3764 = vunpack.c.2.s8 %v3284
    %v3765 = vunpack.c.3.s8 %v3279
    %v3766 = vunpack.c.3.s8 %v3280
    %v3767 = vunpack.c.3.s8 %v3281
    %v3768 = vunpack.c.3.s8 %v3282
    %v3769 = vunpack.c.3.s8 %v3283
    %v3770 = vunpack.c.3.s8 %v3284
    %v3771 = vunpack.c.0.s8 %v3285
    %v3772 = vunpack.c.0.s8 %v3286
    %v3773 = vunpack.c.0.s8 %v3287
    %v3774 = vunpack.c.0.s8 %v3288
    %v3775 = vunpack.c.0.s8 %v3289
    %v3776 = vunpack.c.0.s8 %v3290
    %v3777 = vunpack.c.1.s8 %v3285
    %v3778 = vunpack.c.1.s8 %v3286
    %v3779 = vunpack.c.1.s8 %v3287
    %v3780 = vunpack.c.1.s8 %v3288
    %v3781 = vunpack.c.1.s8 %v3289
    %v3782 = vunpack.c.1.s8 %v3290
    %v3783 = vunpack.c.2.s8 %v3285
    %v3784 = vunpack.c.2.s8 %v3286
    %v3785 = vunpack.c.2.s8 %v3287
    %v3786 = vunpack.c.2.s8 %v3288
    %v3787 = vunpack.c.2.s8 %v3289
    %v3788 = vunpack.c.2.s8 %v3290
    %v3789 = vunpack.c.3.s8 %v3285
    %v3790 = vunpack.c.3.s8 %v3286
    %v3791 = vunpack.c.3.s8 %v3287
    %v3792 = vunpack.c.3.s8 %v3288
    %v3793 = vunpack.c.3.s8 %v3289
    %v3794 = vunpack.c.3.s8 %v3290
    %v3795 = vunpack.c.0.s8 %v3291
    %v3796 = vunpack.c.0.s8 %v3292
    %v3797 = vunpack.c.0.s8 %v3293
    %v3798 = vunpack.c.0.s8 %v3294
    %v3799 = vunpack.c.0.s8 %v3295
    %v3800 = vunpack.c.0.s8 %v3296
    %v3801 = vunpack.c.1.s8 %v3291
    %v3802 = vunpack.c.1.s8 %v3292
    %v3803 = vunpack.c.1.s8 %v3293
    %v3804 = vunpack.c.1.s8 %v3294
    %v3805 = vunpack.c.1.s8 %v3295
    %v3806 = vunpack.c.1.s8 %v3296
    %v3807 = vunpack.c.2.s8 %v3291
    %v3808 = vunpack.c.2.s8 %v3292
    %v3809 = vunpack.c.2.s8 %v3293
    %v3810 = vunpack.c.2.s8 %v3294
    %v3811 = vunpack.c.2.s8 %v3295
    %v3812 = vunpack.c.2.s8 %v3296
    %v3813 = vunpack.c.3.s8 %v3291
    %v3814 = vunpack.c.3.s8 %v3292
    %v3815 = vunpack.c.3.s8 %v3293
    %v3816 = vunpack.c.3.s8 %v3294
    %v3817 = vunpack.c.3.s8 %v3295
    %v3818 = vunpack.c.3.s8 %v3296
    %v3819 = vunpack.c.0.s8 %v3297
    %v3820 = vunpack.c.0.s8 %v3298
    %v3821 = vunpack.c.0.s8 %v3299
    %v3822 = vunpack.c.0.s8 %v3300
    %v3823 = vunpack.c.0.s8 %v3301
    %v3824 = vunpack.c.0.s8 %v3302
    %v3825 = vunpack.c.1.s8 %v3297
    %v3826 = vunpack.c.1.s8 %v3298
    %v3827 = vunpack.c.1.s8 %v3299
    %v3828 = vunpack.c.1.s8 %v3300
    %v3829 = vunpack.c.1.s8 %v3301
    %v3830 = vunpack.c.1.s8 %v3302
    %v3831 = vunpack.c.2.s8 %v3297
    %v3832 = vunpack.c.2.s8 %v3298
    %v3833 = vunpack.c.2.s8 %v3299
    %v3834 = vunpack.c.2.s8 %v3300
    %v3835 = vunpack.c.2.s8 %v3301
    %v3836 = vunpack.c.2.s8 %v3302
    %v3837 = vunpack.c.3.s8 %v3297
    %v3838 = vunpack.c.3.s8 %v3298
    %v3839 = vunpack.c.3.s8 %v3299
    %v3840 = vunpack.c.3.s8 %v3300
    %v3841 = vunpack.c.3.s8 %v3301
    %v3842 = vunpack.c.3.s8 %v3302
    %v3843 = vunpack.c.0.s8 %v3303
    %v3844 = vunpack.c.0.s8 %v3304
    %v3845 = vunpack.c.0.s8 %v3305
    %v3846 = vunpack.c.0.s8 %v3306
    %v3847 = vunpack.c.0.s8 %v3307
    %v3848 = vunpack.c.0.s8 %v3308
    %v3849 = vunpack.c.1.s8 %v3303
    %v3850 = vunpack.c.1.s8 %v3304
    %v3851 = vunpack.c.1.s8 %v3305
    %v3852 = vunpack.c.1.s8 %v3306
    %v3853 = vunpack.c.1.s8 %v3307
    %v3854 = vunpack.c.1.s8 %v3308
    %v3855 = vunpack.c.2.s8 %v3303
    %v3856 = vunpack.c.2.s8 %v3304
    %v3857 = vunpack.c.2.s8 %v3305
    %v3858 = vunpack.c.2.s8 %v3306
    %v3859 = vunpack.c.2.s8 %v3307
    %v3860 = vunpack.c.2.s8 %v3308
    %v3861 = vunpack.c.3.s8 %v3303
    %v3862 = vunpack.c.3.s8 %v3304
    %v3863 = vunpack.c.3.s8 %v3305
    %v3864 = vunpack.c.3.s8 %v3306
    %v3865 = vunpack.c.3.s8 %v3307
    %v3866 = vunpack.c.3.s8 %v3308
    %v3867 = vunpack.c.0.s8 %v3309
    %v3868 = vunpack.c.0.s8 %v3310
    %v3869 = vunpack.c.0.s8 %v3311
    %v3870 = vunpack.c.0.s8 %v3312
    %v3871 = vunpack.c.0.s8 %v3313
    %v3872 = vunpack.c.0.s8 %v3314
    %v3873 = vunpack.c.1.s8 %v3309
    %v3874 = vunpack.c.1.s8 %v3310
    %v3875 = vunpack.c.1.s8 %v3311
    %v3876 = vunpack.c.1.s8 %v3312
    %v3877 = vunpack.c.1.s8 %v3313
    %v3878 = vunpack.c.1.s8 %v3314
    %v3879 = vunpack.c.2.s8 %v3309
    %v3880 = vunpack.c.2.s8 %v3310
    %v3881 = vunpack.c.2.s8 %v3311
    %v3882 = vunpack.c.2.s8 %v3312
    %v3883 = vunpack.c.2.s8 %v3313
    %v3884 = vunpack.c.2.s8 %v3314
    %v3885 = vunpack.c.3.s8 %v3309
    %v3886 = vunpack.c.3.s8 %v3310
    %v3887 = vunpack.c.3.s8 %v3311
    %v3888 = vunpack.c.3.s8 %v3312
    %v3889 = vunpack.c.3.s8 %v3313
    %v3890 = vunpack.c.3.s8 %v3314
    %v3891 = vcvt.s32.f32 %v3315
    %v3892 = vcvt.s32.f32 %v3316
    %v3893 = vcvt.s32.f32 %v3317
    %v3894 = vcvt.s32.f32 %v3318
    %v3895 = vcvt.s32.f32 %v3319
    %v3896 = vcvt.s32.f32 %v3320
    %v3897 = vcvt.s32.f32 %v3321
    %v3898 = vcvt.s32.f32 %v3322
    %v3899 = vcvt.s32.f32 %v3323
    %v3900 = vcvt.s32.f32 %v3324
    %v3901 = vcvt.s32.f32 %v3325
    %v3902 = vcvt.s32.f32 %v3326
    %v3903 = vcvt.s32.f32 %v3327
    %v3904 = vcvt.s32.f32 %v3328
    %v3905 = vcvt.s32.f32 %v3329
    %v3906 = vcvt.s32.f32 %v3330
    %v3907 = vcvt.s32.f32 %v3331
    %v3908 = vcvt.s32.f32 %v3332
    %v3909 = vcvt.s32.f32 %v3333
    %v3910 = vcvt.s32.f32 %v3334
    %v3911 = vcvt.s32.f32 %v3335
    %v3912 = vcvt.s32.f32 %v3336
    %v3913 = vcvt.s32.f32 %v3337
    %v3914 = vcvt.s32.f32 %v3338
    %v3915 = vcvt.s32.f32 %v3339
    %v3916 = vcvt.s32.f32 %v3340
    %v3917 = vcvt.s32.f32 %v3341
    %v3918 = vcvt.s32.f32 %v3342
    %v3919 = vcvt.s32.f32 %v3343
    %v3920 = vcvt.s32.f32 %v3344
    %v3921 = vcvt.s32.f32 %v3345
    %v3922 = vcvt.s32.f32 %v3346
    %v3923 = vcvt.s32.f32 %v3347
    %v3924 = vcvt.s32.f32 %v3348
    %v3925 = vcvt.s32.f32 %v3349
    %v3926 = vcvt.s32.f32 %v3350
    %v3927 = vcvt.s32.f32 %v3351
    %v3928 = vcvt.s32.f32 %v3352
    %v3929 = vcvt.s32.f32 %v3353
    %v3930 = vcvt.s32.f32 %v3354
    %v3931 = vcvt.s32.f32 %v3355
    %v3932 = vcvt.s32.f32 %v3356
    %v3933 = vcvt.s32.f32 %v3357
    %v3934 = vcvt.s32.f32 %v3358
    %v3935 = vcvt.s32.f32 %v3359
    %v3936 = vcvt.s32.f32 %v3360
    %v3937 = vcvt.s32.f32 %v3361
    %v3938 = vcvt.s32.f32 %v3362
    %v3939 = vcvt.s32.f32 %v3363
    %v3940 = vcvt.s32.f32 %v3364
    %v3941 = vcvt.s32.f32 %v3365
    %v3942 = vcvt.s32.f32 %v3366
    %v3943 = vcvt.s32.f32 %v3367
    %v3944 = vcvt.s32.f32 %v3368
    %v3945 = vcvt.s32.f32 %v3369
    %v3946 = vcvt.s32.f32 %v3370
    %v3947 = vcvt.s32.f32 %v3371
    %v3948 = vcvt.s32.f32 %v3372
    %v3949 = vcvt.s32.f32 %v3373
    %v3950 = vcvt.s32.f32 %v3374
    %v3951 = vcvt.s32.f32 %v3375
    %v3952 = vcvt.s32.f32 %v3376
    %v3953 = vcvt.s32.f32 %v3377
    %v3954 = vcvt.s32.f32 %v3378
    %v3955 = vcvt.s32.f32 %v3379
    %v3956 = vcvt.s32.f32 %v3380
    %v3957 = vcvt.s32.f32 %v3381
    %v3958 = vcvt.s32.f32 %v3382
    %v3959 = vcvt.s32.f32 %v3383
    %v3960 = vcvt.s32.f32 %v3384
    %v3961 = vcvt.s32.f32 %v3385
    %v3962 = vcvt.s32.f32 %v3386
    %v3963 = vcvt.s32.f32 %v3387
    %v3964 = vcvt.s32.f32 %v3388
    %v3965 = vcvt.s32.f32 %v3389
    %v3966 = vcvt.s32.f32 %v3390
    %v3967 = vcvt.s32.f32 %v3391
    %v3968 = vcvt.s32.f32 %v3392
    %v3969 = vcvt.s32.f32 %v3393
    %v3970 = vcvt.s32.f32 %v3394
    %v3971 = vcvt.s32.f32 %v3395
    %v3972 = vcvt.s32.f32 %v3396
    %v3973 = vcvt.s32.f32 %v3397
    %v3974 = vcvt.s32.f32 %v3398
    %v3975 = vcvt.s32.f32 %v3399
    %v3976 = vcvt.s32.f32 %v3400
    %v3977 = vcvt.s32.f32 %v3401
    %v3978 = vcvt.s32.f32 %v3402
    %v3979 = vcvt.s32.f32 %v3403
    %v3980 = vcvt.s32.f32 %v3404
    %v3981 = vcvt.s32.f32 %v3405
    %v3982 = vcvt.s32.f32 %v3406
    %v3983 = vcvt.s32.f32 %v3407
    %v3984 = vcvt.s32.f32 %v3408
    %v3985 = vcvt.s32.f32 %v3409
    %v3986 = vcvt.s32.f32 %v3410
    %v3987 = vcvt.s32.f32 %v3411
    %v3988 = vcvt.s32.f32 %v3412
    %v3989 = vcvt.s32.f32 %v3413
    %v3990 = vcvt.s32.f32 %v3414
    %v3991 = vcvt.s32.f32 %v3415
    %v3992 = vcvt.s32.f32 %v3416
    %v3993 = vcvt.s32.f32 %v3417
    %v3994 = vcvt.s32.f32 %v3418
    %v3995 = vcvt.s32.f32 %v3419
    %v3996 = vcvt.s32.f32 %v3420
    %v3997 = vcvt.s32.f32 %v3421
    %v3998 = vcvt.s32.f32 %v3422
    %v3999 = vcvt.s32.f32 %v3423
    %v4000 = vcvt.s32.f32 %v3424
    %v4001 = vcvt.s32.f32 %v3425
    %v4002 = vcvt.s32.f32 %v3426
    %v4003 = vcvt.s32.f32 %v3427
    %v4004 = vcvt.s32.f32 %v3428
    %v4005 = vcvt.s32.f32 %v3429
    %v4006 = vcvt.s32.f32 %v3430
    %v4007 = vcvt.s32.f32 %v3431
    %v4008 = vcvt.s32.f32 %v3432
    %v4009 = vcvt.s32.f32 %v3433
    %v4010 = vcvt.s32.f32 %v3434
    %v4011 = vcvt.s32.f32 %v3435
    %v4012 = vcvt.s32.f32 %v3436
    %v4013 = vcvt.s32.f32 %v3437
    %v4014 = vcvt.s32.f32 %v3438
    %v4015 = vcvt.s32.f32 %v3439
    %v4016 = vcvt.s32.f32 %v3440
    %v4017 = vcvt.s32.f32 %v3441
    %v4018 = vcvt.s32.f32 %v3442
    %v4019 = vcvt.s32.f32 %v3443
    %v4020 = vcvt.s32.f32 %v3444
    %v4021 = vcvt.s32.f32 %v3445
    %v4022 = vcvt.s32.f32 %v3446
    %v4023 = vcvt.s32.f32 %v3447
    %v4024 = vcvt.s32.f32 %v3448
    %v4025 = vcvt.s32.f32 %v3449
    %v4026 = vcvt.s32.f32 %v3450
    %v4027 = vcvt.s32.f32 %v3451
    %v4028 = vcvt.s32.f32 %v3452
    %v4029 = vcvt.s32.f32 %v3453
    %v4030 = vcvt.s32.f32 %v3454
    %v4031 = vcvt.s32.f32 %v3455
    %v4032 = vcvt.s32.f32 %v3456
    %v4033 = vcvt.s32.f32 %v3457
    %v4034 = vcvt.s32.f32 %v3458
    %v4035 = vcvt.s32.f32 %v3459
    %v4036 = vcvt.s32.f32 %v3460
    %v4037 = vcvt.s32.f32 %v3461
    %v4038 = vcvt.s32.f32 %v3462
    %v4039 = vcvt.s32.f32 %v3463
    %v4040 = vcvt.s32.f32 %v3464
    %v4041 = vcvt.s32.f32 %v3465
    %v4042 = vcvt.s32.f32 %v3466
    %v4043 = vcvt.s32.f32 %v3467
    %v4044 = vcvt.s32.f32 %v3468
    %v4045 = vcvt.s32.f32 %v3469
    %v4046 = vcvt.s32.f32 %v3470
    %v4047 = vcvt.s32.f32 %v3471
    %v4048 = vcvt.s32.f32 %v3472
    %v4049 = vcvt.s32.f32 %v3473
    %v4050 = vcvt.s32.f32 %v3474
    %v4051 = vcvt.s32.f32 %v3475
    %v4052 = vcvt.s32.f32 %v3476
    %v4053 = vcvt.s32.f32 %v3477
    %v4054 = vcvt.s32.f32 %v3478
    %v4055 = vcvt.s32.f32 %v3479
    %v4056 = vcvt.s32.f32 %v3480
    %v4057 = vcvt.s32.f32 %v3481
    %v4058 = vcvt.s32.f32 %v3482
    %v4059 = vcvt.s32.f32 %v3483
    %v4060 = vcvt.s32.f32 %v3484
    %v4061 = vcvt.s32.f32 %v3485
    %v4062 = vcvt.s32.f32 %v3486
    %v4063 = vcvt.s32.f32 %v3487
    %v4064 = vcvt.s32.f32 %v3488
    %v4065 = vcvt.s32.f32 %v3489
    %v4066 = vcvt.s32.f32 %v3490
    %v4067 = vcvt.s32.f32 %v3491
    %v4068 = vcvt.s32.f32 %v3492
    %v4069 = vcvt.s32.f32 %v3493
    %v4070 = vcvt.s32.f32 %v3494
    %v4071 = vcvt.s32.f32 %v3495
    %v4072 = vcvt.s32.f32 %v3496
    %v4073 = vcvt.s32.f32 %v3497
    %v4074 = vcvt.s32.f32 %v3498
    %v4075 = vcvt.s32.f32 %v3499
    %v4076 = vcvt.s32.f32 %v3500
    %v4077 = vcvt.s32.f32 %v3501
    %v4078 = vcvt.s32.f32 %v3502
    %v4079 = vcvt.s32.f32 %v3503
    %v4080 = vcvt.s32.f32 %v3504
    %v4081 = vcvt.s32.f32 %v3505
    %v4082 = vcvt.s32.f32 %v3506
    %v4083 = vcvt.s32.f32 %v3507
    %v4084 = vcvt.s32.f32 %v3508
    %v4085 = vcvt.s32.f32 %v3509
    %v4086 = vcvt.s32.f32 %v3510
    %v4087 = vcvt.s32.f32 %v3511
    %v4088 = vcvt.s32.f32 %v3512
    %v4089 = vcvt.s32.f32 %v3513
    %v4090 = vcvt.s32.f32 %v3514
    %v4091 = vcvt.s32.f32 %v3515
    %v4092 = vcvt.s32.f32 %v3516
    %v4093 = vcvt.s32.f32 %v3517
    %v4094 = vcvt.s32.f32 %v3518
    %v4095 = vcvt.s32.f32 %v3519
    %v4096 = vcvt.s32.f32 %v3520
    %v4097 = vcvt.s32.f32 %v3521
    %v4098 = vcvt.s32.f32 %v3522
    %v4099 = vcvt.s32.f32 %v3523
    %v4100 = vcvt.s32.f32 %v3524
    %v4101 = vcvt.s32.f32 %v3525
    %v4102 = vcvt.s32.f32 %v3526
    %v4103 = vcvt.s32.f32 %v3527
    %v4104 = vcvt.s32.f32 %v3528
    %v4105 = vcvt.s32.f32 %v3529
    %v4106 = vcvt.s32.f32 %v3530
    %v4107 = vcvt.s32.f32 %v3531
    %v4108 = vcvt.s32.f32 %v3532
    %v4109 = vcvt.s32.f32 %v3533
    %v4110 = vcvt.s32.f32 %v3534
    %v4111 = vcvt.s32.f32 %v3535
    %v4112 = vcvt.s32.f32 %v3536
    %v4113 = vcvt.s32.f32 %v3537
    %v4114 = vcvt.s32.f32 %v3538
    %v4115 = vcvt.s32.f32 %v3539
    %v4116 = vcvt.s32.f32 %v3540
    %v4117 = vcvt.s32.f32 %v3541
    %v4118 = vcvt.s32.f32 %v3542
    %v4119 = vcvt.s32.f32 %v3543
    %v4120 = vcvt.s32.f32 %v3544
    %v4121 = vcvt.s32.f32 %v3545
    %v4122 = vcvt.s32.f32 %v3546
    %v4123 = vcvt.s32.f32 %v3547
    %v4124 = vcvt.s32.f32 %v3548
    %v4125 = vcvt.s32.f32 %v3549
    %v4126 = vcvt.s32.f32 %v3550
    %v4127 = vcvt.s32.f32 %v3551
    %v4128 = vcvt.s32.f32 %v3552
    %v4129 = vcvt.s32.f32 %v3553
    %v4130 = vcvt.s32.f32 %v3554
    %v4131 = vcvt.s32.f32 %v3555
    %v4132 = vcvt.s32.f32 %v3556
    %v4133 = vcvt.s32.f32 %v3557
    %v4134 = vcvt.s32.f32 %v3558
    %v4135 = vcvt.s32.f32 %v3559
    %v4136 = vcvt.s32.f32 %v3560
    %v4137 = vcvt.s32.f32 %v3561
    %v4138 = vcvt.s32.f32 %v3562
    %v4139 = vcvt.s32.f32 %v3563
    %v4140 = vcvt.s32.f32 %v3564
    %v4141 = vcvt.s32.f32 %v3565
    %v4142 = vcvt.s32.f32 %v3566
    %v4143 = vcvt.s32.f32 %v3567
    %v4144 = vcvt.s32.f32 %v3568
    %v4145 = vcvt.s32.f32 %v3569
    %v4146 = vcvt.s32.f32 %v3570
    %v4147 = vcvt.s32.f32 %v3571
    %v4148 = vcvt.s32.f32 %v3572
    %v4149 = vcvt.s32.f32 %v3573
    %v4150 = vcvt.s32.f32 %v3574
    %v4151 = vcvt.s32.f32 %v3575
    %v4152 = vcvt.s32.f32 %v3576
    %v4153 = vcvt.s32.f32 %v3577
    %v4154 = vcvt.s32.f32 %v3578
    %v4155 = vcvt.s32.f32 %v3579
    %v4156 = vcvt.s32.f32 %v3580
    %v4157 = vcvt.s32.f32 %v3581
    %v4158 = vcvt.s32.f32 %v3582
    %v4159 = vcvt.s32.f32 %v3583
    %v4160 = vcvt.s32.f32 %v3584
    %v4161 = vcvt.s32.f32 %v3585
    %v4162 = vcvt.s32.f32 %v3586
    %v4163 = vcvt.s32.f32 %v3587
    %v4164 = vcvt.s32.f32 %v3588
    %v4165 = vcvt.s32.f32 %v3589
    %v4166 = vcvt.s32.f32 %v3590
    %v4167 = vcvt.s32.f32 %v3591
    %v4168 = vcvt.s32.f32 %v3592
    %v4169 = vcvt.s32.f32 %v3593
    %v4170 = vcvt.s32.f32 %v3594
    %v4171 = vcvt.s32.f32 %v3595
    %v4172 = vcvt.s32.f32 %v3596
    %v4173 = vcvt.s32.f32 %v3597
    %v4174 = vcvt.s32.f32 %v3598
    %v4175 = vcvt.s32.f32 %v3599
    %v4176 = vcvt.s32.f32 %v3600
    %v4177 = vcvt.s32.f32 %v3601
    %v4178 = vcvt.s32.f32 %v3602
    %v4179 = vcvt.s32.f32 %v3603
    %v4180 = vcvt.s32.f32 %v3604
    %v4181 = vcvt.s32.f32 %v3605
    %v4182 = vcvt.s32.f32 %v3606
    %v4183 = vcvt.s32.f32 %v3607
    %v4184 = vcvt.s32.f32 %v3608
    %v4185 = vcvt.s32.f32 %v3609
    %v4186 = vcvt.s32.f32 %v3610
    %v4187 = vcvt.s32.f32 %v3611
    %v4188 = vcvt.s32.f32 %v3612
    %v4189 = vcvt.s32.f32 %v3613
    %v4190 = vcvt.s32.f32 %v3614
    %v4191 = vcvt.s32.f32 %v3615
    %v4192 = vcvt.s32.f32 %v3616
    %v4193 = vcvt.s32.f32 %v3617
    %v4194 = vcvt.s32.f32 %v3618
    %v4195 = vcvt.s32.f32 %v3619
    %v4196 = vcvt.s32.f32 %v3620
    %v4197 = vcvt.s32.f32 %v3621
    %v4198 = vcvt.s32.f32 %v3622
    %v4199 = vcvt.s32.f32 %v3623
    %v4200 = vcvt.s32.f32 %v3624
    %v4201 = vcvt.s32.f32 %v3625
    %v4202 = vcvt.s32.f32 %v3626
    %v4203 = vcvt.s32.f32 %v3627
    %v4204 = vcvt.s32.f32 %v3628
    %v4205 = vcvt.s32.f32 %v3629
    %v4206 = vcvt.s32.f32 %v3630
    %v4207 = vcvt.s32.f32 %v3631
    %v4208 = vcvt.s32.f32 %v3632
    %v4209 = vcvt.s32.f32 %v3633
    %v4210 = vcvt.s32.f32 %v3634
    %v4211 = vcvt.s32.f32 %v3635
    %v4212 = vcvt.s32.f32 %v3636
    %v4213 = vcvt.s32.f32 %v3637
    %v4214 = vcvt.s32.f32 %v3638
    %v4215 = vcvt.s32.f32 %v3639
    %v4216 = vcvt.s32.f32 %v3640
    %v4217 = vcvt.s32.f32 %v3641
    %v4218 = vcvt.s32.f32 %v3642
    %v4219 = vcvt.s32.f32 %v3643
    %v4220 = vcvt.s32.f32 %v3644
    %v4221 = vcvt.s32.f32 %v3645
    %v4222 = vcvt.s32.f32 %v3646
    %v4223 = vcvt.s32.f32 %v3647
    %v4224 = vcvt.s32.f32 %v3648
    %v4225 = vcvt.s32.f32 %v3649
    %v4226 = vcvt.s32.f32 %v3650
    %v4227 = vcvt.s32.f32 %v3651
    %v4228 = vcvt.s32.f32 %v3652
    %v4229 = vcvt.s32.f32 %v3653
    %v4230 = vcvt.s32.f32 %v3654
    %v4231 = vcvt.s32.f32 %v3655
    %v4232 = vcvt.s32.f32 %v3656
    %v4233 = vcvt.s32.f32 %v3657
    %v4234 = vcvt.s32.f32 %v3658
    %v4235 = vcvt.s32.f32 %v3659
    %v4236 = vcvt.s32.f32 %v3660
    %v4237 = vcvt.s32.f32 %v3661
    %v4238 = vcvt.s32.f32 %v3662
    %v4239 = vcvt.s32.f32 %v3663
    %v4240 = vcvt.s32.f32 %v3664
    %v4241 = vcvt.s32.f32 %v3665
    %v4242 = vcvt.s32.f32 %v3666
    %v4243 = vcvt.s32.f32 %v3667
    %v4244 = vcvt.s32.f32 %v3668
    %v4245 = vcvt.s32.f32 %v3669
    %v4246 = vcvt.s32.f32 %v3670
    %v4247 = vcvt.s32.f32 %v3671
    %v4248 = vcvt.s32.f32 %v3672
    %v4249 = vcvt.s32.f32 %v3673
    %v4250 = vcvt.s32.f32 %v3674
    %v4251 = vcvt.s32.f32 %v3675
    %v4252 = vcvt.s32.f32 %v3676
    %v4253 = vcvt.s32.f32 %v3677
    %v4254 = vcvt.s32.f32 %v3678
    %v4255 = vcvt.s32.f32 %v3679
    %v4256 = vcvt.s32.f32 %v3680
    %v4257 = vcvt.s32.f32 %v3681
    %v4258 = vcvt.s32.f32 %v3682
    %v4259 = vcvt.s32.f32 %v3683
    %v4260 = vcvt.s32.f32 %v3684
    %v4261 = vcvt.s32.f32 %v3685
    %v4262 = vcvt.s32.f32 %v3686
    %v4263 = vcvt.s32.f32 %v3687
    %v4264 = vcvt.s32.f32 %v3688
    %v4265 = vcvt.s32.f32 %v3689
    %v4266 = vcvt.s32.f32 %v3690
    %v4267 = vcvt.s32.f32 %v3691
    %v4268 = vcvt.s32.f32 %v3692
    %v4269 = vcvt.s32.f32 %v3693
    %v4270 = vcvt.s32.f32 %v3694
    %v4271 = vcvt.s32.f32 %v3695
    %v4272 = vcvt.s32.f32 %v3696
    %v4273 = vcvt.s32.f32 %v3697
    %v4274 = vcvt.s32.f32 %v3698
    %v4275 = vcvt.s32.f32 %v3699
    %v4276 = vcvt.s32.f32 %v3700
    %v4277 = vcvt.s32.f32 %v3701
    %v4278 = vcvt.s32.f32 %v3702
    %v4279 = vcvt.s32.f32 %v3703
    %v4280 = vcvt.s32.f32 %v3704
    %v4281 = vcvt.s32.f32 %v3705
    %v4282 = vcvt.s32.f32 %v3706
    %v4283 = vcvt.s32.f32 %v3707
    %v4284 = vcvt.s32.f32 %v3708
    %v4285 = vcvt.s32.f32 %v3709
    %v4286 = vcvt.s32.f32 %v3710
    %v4287 = vcvt.s32.f32 %v3711
    %v4288 = vcvt.s32.f32 %v3712
    %v4289 = vcvt.s32.f32 %v3713
    %v4290 = vcvt.s32.f32 %v3714
    %v4291 = vcvt.s32.f32 %v3715
    %v4292 = vcvt.s32.f32 %v3716
    %v4293 = vcvt.s32.f32 %v3717
    %v4294 = vcvt.s32.f32 %v3718
    %v4295 = vcvt.s32.f32 %v3719
    %v4296 = vcvt.s32.f32 %v3720
    %v4297 = vcvt.s32.f32 %v3721
    %v4298 = vcvt.s32.f32 %v3722
    %v4299 = vcvt.s32.f32 %v3723
    %v4300 = vcvt.s32.f32 %v3724
    %v4301 = vcvt.s32.f32 %v3725
    %v4302 = vcvt.s32.f32 %v3726
    %v4303 = vcvt.s32.f32 %v3727
    %v4304 = vcvt.s32.f32 %v3728
    %v4305 = vcvt.s32.f32 %v3729
    %v4306 = vcvt.s32.f32 %v3730
    %v4307 = vcvt.s32.f32 %v3731
    %v4308 = vcvt.s32.f32 %v3732
    %v4309 = vcvt.s32.f32 %v3733
    %v4310 = vcvt.s32.f32 %v3734
    %v4311 = vcvt.s32.f32 %v3735
    %v4312 = vcvt.s32.f32 %v3736
    %v4313 = vcvt.s32.f32 %v3737
    %v4314 = vcvt.s32.f32 %v3738
    %v4315 = vcvt.s32.f32 %v3739
    %v4316 = vcvt.s32.f32 %v3740
    %v4317 = vcvt.s32.f32 %v3741
    %v4318 = vcvt.s32.f32 %v3742
    %v4319 = vcvt.s32.f32 %v3743
    %v4320 = vcvt.s32.f32 %v3744
    %v4321 = vcvt.s32.f32 %v3745
    %v4322 = vcvt.s32.f32 %v3746
    %v4323 = vcvt.s32.f32 %v3747
    %v4324 = vcvt.s32.f32 %v3748
    %v4325 = vcvt.s32.f32 %v3749
    %v4326 = vcvt.s32.f32 %v3750
    %v4327 = vcvt.s32.f32 %v3751
    %v4328 = vcvt.s32.f32 %v3752
    %v4329 = vcvt.s32.f32 %v3753
    %v4330 = vcvt.s32.f32 %v3754
    %v4331 = vcvt.s32.f32 %v3755
    %v4332 = vcvt.s32.f32 %v3756
    %v4333 = vcvt.s32.f32 %v3757
    %v4334 = vcvt.s32.f32 %v3758
    %v4335 = vcvt.s32.f32 %v3759
    %v4336 = vcvt.s32.f32 %v3760
    %v4337 = vcvt.s32.f32 %v3761
    %v4338 = vcvt.s32.f32 %v3762
    %v4339 = vcvt.s32.f32 %v3763
    %v4340 = vcvt.s32.f32 %v3764
    %v4341 = vcvt.s32.f32 %v3765
    %v4342 = vcvt.s32.f32 %v3766
    %v4343 = vcvt.s32.f32 %v3767
    %v4344 = vcvt.s32.f32 %v3768
    %v4345 = vcvt.s32.f32 %v3769
    %v4346 = vcvt.s32.f32 %v3770
    %v4347 = vcvt.s32.f32 %v3771
    %v4348 = vcvt.s32.f32 %v3772
    %v4349 = vcvt.s32.f32 %v3773
    %v4350 = vcvt.s32.f32 %v3774
    %v4351 = vcvt.s32.f32 %v3775
    %v4352 = vcvt.s32.f32 %v3776
    %v4353 = vcvt.s32.f32 %v3777
    %v4354 = vcvt.s32.f32 %v3778
    %v4355 = vcvt.s32.f32 %v3779
    %v4356 = vcvt.s32.f32 %v3780
    %v4357 = vcvt.s32.f32 %v3781
    %v4358 = vcvt.s32.f32 %v3782
    %v4359 = vcvt.s32.f32 %v3783
    %v4360 = vcvt.s32.f32 %v3784
    %v4361 = vcvt.s32.f32 %v3785
    %v4362 = vcvt.s32.f32 %v3786
    %v4363 = vcvt.s32.f32 %v3787
    %v4364 = vcvt.s32.f32 %v3788
    %v4365 = vcvt.s32.f32 %v3789
    %v4366 = vcvt.s32.f32 %v3790
    %v4367 = vcvt.s32.f32 %v3791
    %v4368 = vcvt.s32.f32 %v3792
    %v4369 = vcvt.s32.f32 %v3793
    %v4370 = vcvt.s32.f32 %v3794
    %v4371 = vcvt.s32.f32 %v3795
    %v4372 = vcvt.s32.f32 %v3796
    %v4373 = vcvt.s32.f32 %v3797
    %v4374 = vcvt.s32.f32 %v3798
    %v4375 = vcvt.s32.f32 %v3799
    %v4376 = vcvt.s32.f32 %v3800
    %v4377 = vcvt.s32.f32 %v3801
    %v4378 = vcvt.s32.f32 %v3802
    %v4379 = vcvt.s32.f32 %v3803
    %v4380 = vcvt.s32.f32 %v3804
    %v4381 = vcvt.s32.f32 %v3805
    %v4382 = vcvt.s32.f32 %v3806
    %v4383 = vcvt.s32.f32 %v3807
    %v4384 = vcvt.s32.f32 %v3808
    %v4385 = vcvt.s32.f32 %v3809
    %v4386 = vcvt.s32.f32 %v3810
    %v4387 = vcvt.s32.f32 %v3811
    %v4388 = vcvt.s32.f32 %v3812
    %v4389 = vcvt.s32.f32 %v3813
    %v4390 = vcvt.s32.f32 %v3814
    %v4391 = vcvt.s32.f32 %v3815
    %v4392 = vcvt.s32.f32 %v3816
    %v4393 = vcvt.s32.f32 %v3817
    %v4394 = vcvt.s32.f32 %v3818
    %v4395 = vcvt.s32.f32 %v3819
    %v4396 = vcvt.s32.f32 %v3820
    %v4397 = vcvt.s32.f32 %v3821
    %v4398 = vcvt.s32.f32 %v3822
    %v4399 = vcvt.s32.f32 %v3823
    %v4400 = vcvt.s32.f32 %v3824
    %v4401 = vcvt.s32.f32 %v3825
    %v4402 = vcvt.s32.f32 %v3826
    %v4403 = vcvt.s32.f32 %v3827
    %v4404 = vcvt.s32.f32 %v3828
    %v4405 = vcvt.s32.f32 %v3829
    %v4406 = vcvt.s32.f32 %v3830
    %v4407 = vcvt.s32.f32 %v3831
    %v4408 = vcvt.s32.f32 %v3832
    %v4409 = vcvt.s32.f32 %v3833
    %v4410 = vcvt.s32.f32 %v3834
    %v4411 = vcvt.s32.f32 %v3835
    %v4412 = vcvt.s32.f32 %v3836
    %v4413 = vcvt.s32.f32 %v3837
    %v4414 = vcvt.s32.f32 %v3838
    %v4415 = vcvt.s32.f32 %v3839
    %v4416 = vcvt.s32.f32 %v3840
    %v4417 = vcvt.s32.f32 %v3841
    %v4418 = vcvt.s32.f32 %v3842
    %v4419 = vcvt.s32.f32 %v3843
    %v4420 = vcvt.s32.f32 %v3844
    %v4421 = vcvt.s32.f32 %v3845
    %v4422 = vcvt.s32.f32 %v3846
    %v4423 = vcvt.s32.f32 %v3847
    %v4424 = vcvt.s32.f32 %v3848
    %v4425 = vcvt.s32.f32 %v3849
    %v4426 = vcvt.s32.f32 %v3850
    %v4427 = vcvt.s32.f32 %v3851
    %v4428 = vcvt.s32.f32 %v3852
    %v4429 = vcvt.s32.f32 %v3853
    %v4430 = vcvt.s32.f32 %v3854
    %v4431 = vcvt.s32.f32 %v3855
    %v4432 = vcvt.s32.f32 %v3856
    %v4433 = vcvt.s32.f32 %v3857
    %v4434 = vcvt.s32.f32 %v3858
    %v4435 = vcvt.s32.f32 %v3859
    %v4436 = vcvt.s32.f32 %v3860
    %v4437 = vcvt.s32.f32 %v3861
    %v4438 = vcvt.s32.f32 %v3862
    %v4439 = vcvt.s32.f32 %v3863
    %v4440 = vcvt.s32.f32 %v3864
    %v4441 = vcvt.s32.f32 %v3865
    %v4442 = vcvt.s32.f32 %v3866
    %v4443 = vcvt.s32.f32 %v3867
    %v4444 = vcvt.s32.f32 %v3868
    %v4445 = vcvt.s32.f32 %v3869
    %v4446 = vcvt.s32.f32 %v3870
    %v4447 = vcvt.s32.f32 %v3871
    %v4448 = vcvt.s32.f32 %v3872
    %v4449 = vcvt.s32.f32 %v3873
    %v4450 = vcvt.s32.f32 %v3874
    %v4451 = vcvt.s32.f32 %v3875
    %v4452 = vcvt.s32.f32 %v3876
    %v4453 = vcvt.s32.f32 %v3877
    %v4454 = vcvt.s32.f32 %v3878
    %v4455 = vcvt.s32.f32 %v3879
    %v4456 = vcvt.s32.f32 %v3880
    %v4457 = vcvt.s32.f32 %v3881
    %v4458 = vcvt.s32.f32 %v3882
    %v4459 = vcvt.s32.f32 %v3883
    %v4460 = vcvt.s32.f32 %v3884
    %v4461 = vcvt.s32.f32 %v3885
    %v4462 = vcvt.s32.f32 %v3886
    %v4463 = vcvt.s32.f32 %v3887
    %v4464 = vcvt.s32.f32 %v3888
    %v4465 = vcvt.s32.f32 %v3889
    %v4466 = vcvt.s32.f32 %v3890
    %v4467 = vpack.c.bf16 %v3897, %v3891
    %v4468 = vpack.c.bf16 %v3898, %v3892
    %v4469 = vpack.c.bf16 %v3899, %v3893
    %v4470 = vpack.c.bf16 %v3900, %v3894
    %v4471 = vpack.c.bf16 %v3901, %v3895
    %v4472 = vpack.c.bf16 %v3902, %v3896
    %v4473 = vpack.c.bf16 %v3909, %v3903
    %v4474 = vpack.c.bf16 %v3910, %v3904
    %v4475 = vpack.c.bf16 %v3911, %v3905
    %v4476 = vpack.c.bf16 %v3912, %v3906
    %v4477 = vpack.c.bf16 %v3913, %v3907
    %v4478 = vpack.c.bf16 %v3914, %v3908
    %v4479 = vpack.c.bf16 %v3921, %v3915
    %v4480 = vpack.c.bf16 %v3922, %v3916
    %v4481 = vpack.c.bf16 %v3923, %v3917
    %v4482 = vpack.c.bf16 %v3924, %v3918
    %v4483 = vpack.c.bf16 %v3925, %v3919
    %v4484 = vpack.c.bf16 %v3926, %v3920
    %v4485 = vpack.c.bf16 %v3933, %v3927
    %v4486 = vpack.c.bf16 %v3934, %v3928
    %v4487 = vpack.c.bf16 %v3935, %v3929
    %v4488 = vpack.c.bf16 %v3936, %v3930
    %v4489 = vpack.c.bf16 %v3937, %v3931
    %v4490 = vpack.c.bf16 %v3938, %v3932
    %v4491 = vpack.c.bf16 %v3945, %v3939
    %v4492 = vpack.c.bf16 %v3946, %v3940
    %v4493 = vpack.c.bf16 %v3947, %v3941
    %v4494 = vpack.c.bf16 %v3948, %v3942
    %v4495 = vpack.c.bf16 %v3949, %v3943
    %v4496 = vpack.c.bf16 %v3950, %v3944
    %v4497 = vpack.c.bf16 %v3957, %v3951
    %v4498 = vpack.c.bf16 %v3958, %v3952
    %v4499 = vpack.c.bf16 %v3959, %v3953
    %v4500 = vpack.c.bf16 %v3960, %v3954
    %v4501 = vpack.c.bf16 %v3961, %v3955
    %v4502 = vpack.c.bf16 %v3962, %v3956
    %v4503 = vpack.c.bf16 %v3969, %v3963
    %v4504 = vpack.c.bf16 %v3970, %v3964
    %v4505 = vpack.c.bf16 %v3971, %v3965
    %v4506 = vpack.c.bf16 %v3972, %v3966
    %v4507 = vpack.c.bf16 %v3973, %v3967
    %v4508 = vpack.c.bf16 %v3974, %v3968
    %v4509 = vpack.c.bf16 %v3981, %v3975
    %v4510 = vpack.c.bf16 %v3982, %v3976
    %v4511 = vpack.c.bf16 %v3983, %v3977
    %v4512 = vpack.c.bf16 %v3984, %v3978
    %v4513 = vpack.c.bf16 %v3985, %v3979
    %v4514 = vpack.c.bf16 %v3986, %v3980
    %v4515 = vpack.c.bf16 %v3993, %v3987
    %v4516 = vpack.c.bf16 %v3994, %v3988
    %v4517 = vpack.c.bf16 %v3995, %v3989
    %v4518 = vpack.c.bf16 %v3996, %v3990
    %v4519 = vpack.c.bf16 %v3997, %v3991
    %v4520 = vpack.c.bf16 %v3998, %v3992
    %v4521 = vpack.c.bf16 %v4005, %v3999
    %v4522 = vpack.c.bf16 %v4006, %v4000
    %v4523 = vpack.c.bf16 %v4007, %v4001
    %v4524 = vpack.c.bf16 %v4008, %v4002
    %v4525 = vpack.c.bf16 %v4009, %v4003
    %v4526 = vpack.c.bf16 %v4010, %v4004
    %v4527 = vpack.c.bf16 %v4017, %v4011
    %v4528 = vpack.c.bf16 %v4018, %v4012
    %v4529 = vpack.c.bf16 %v4019, %v4013
    %v4530 = vpack.c.bf16 %v4020, %v4014
    %v4531 = vpack.c.bf16 %v4021, %v4015
    %v4532 = vpack.c.bf16 %v4022, %v4016
    %v4533 = vpack.c.bf16 %v4029, %v4023
    %v4534 = vpack.c.bf16 %v4030, %v4024
    %v4535 = vpack.c.bf16 %v4031, %v4025
    %v4536 = vpack.c.bf16 %v4032, %v4026
    %v4537 = vpack.c.bf16 %v4033, %v4027
    %v4538 = vpack.c.bf16 %v4034, %v4028
    %v4539 = vpack.c.bf16 %v4041, %v4035
    %v4540 = vpack.c.bf16 %v4042, %v4036
    %v4541 = vpack.c.bf16 %v4043, %v4037
    %v4542 = vpack.c.bf16 %v4044, %v4038
    %v4543 = vpack.c.bf16 %v4045, %v4039
    %v4544 = vpack.c.bf16 %v4046, %v4040
    %v4545 = vpack.c.bf16 %v4053, %v4047
    %v4546 = vpack.c.bf16 %v4054, %v4048
    %v4547 = vpack.c.bf16 %v4055, %v4049
    %v4548 = vpack.c.bf16 %v4056, %v4050
    %v4549 = vpack.c.bf16 %v4057, %v4051
    %v4550 = vpack.c.bf16 %v4058, %v4052
    %v4551 = vpack.c.bf16 %v4065, %v4059
    %v4552 = vpack.c.bf16 %v4066, %v4060
    %v4553 = vpack.c.bf16 %v4067, %v4061
    %v4554 = vpack.c.bf16 %v4068, %v4062
    %v4555 = vpack.c.bf16 %v4069, %v4063
    %v4556 = vpack.c.bf16 %v4070, %v4064
    %v4557 = vpack.c.bf16 %v4077, %v4071
    %v4558 = vpack.c.bf16 %v4078, %v4072
    %v4559 = vpack.c.bf16 %v4079, %v4073
    %v4560 = vpack.c.bf16 %v4080, %v4074
    %v4561 = vpack.c.bf16 %v4081, %v4075
    %v4562 = vpack.c.bf16 %v4082, %v4076
    %v4563 = vpack.c.bf16 %v4089, %v4083
    %v4564 = vpack.c.bf16 %v4090, %v4084
    %v4565 = vpack.c.bf16 %v4091, %v4085
    %v4566 = vpack.c.bf16 %v4092, %v4086
    %v4567 = vpack.c.bf16 %v4093, %v4087
    %v4568 = vpack.c.bf16 %v4094, %v4088
    %v4569 = vpack.c.bf16 %v4101, %v4095
    %v4570 = vpack.c.bf16 %v4102, %v4096
    %v4571 = vpack.c.bf16 %v4103, %v4097
    %v4572 = vpack.c.bf16 %v4104, %v4098
    %v4573 = vpack.c.bf16 %v4105, %v4099
    %v4574 = vpack.c.bf16 %v4106, %v4100
    %v4575 = vpack.c.bf16 %v4113, %v4107
    %v4576 = vpack.c.bf16 %v4114, %v4108
    %v4577 = vpack.c.bf16 %v4115, %v4109
    %v4578 = vpack.c.bf16 %v4116, %v4110
    %v4579 = vpack.c.bf16 %v4117, %v4111
    %v4580 = vpack.c.bf16 %v4118, %v4112
    %v4581 = vpack.c.bf16 %v4125, %v4119
    %v4582 = vpack.c.bf16 %v4126, %v4120
    %v4583 = vpack.c.bf16 %v4127, %v4121
    %v4584 = vpack.c.bf16 %v4128, %v4122
    %v4585 = vpack.c.bf16 %v4129, %v4123
    %v4586 = vpack.c.bf16 %v4130, %v4124
    %v4587 = vpack.c.bf16 %v4137, %v4131
    %v4588 = vpack.c.bf16 %v4138, %v4132
    %v4589 = vpack.c.bf16 %v4139, %v4133
    %v4590 = vpack.c.bf16 %v4140, %v4134
    %v4591 = vpack.c.bf16 %v4141, %v4135
    %v4592 = vpack.c.bf16 %v4142, %v4136
    %v4593 = vpack.c.bf16 %v4149, %v4143
    %v4594 = vpack.c.bf16 %v4150, %v4144
    %v4595 = vpack.c.bf16 %v4151, %v4145
    %v4596 = vpack.c.bf16 %v4152, %v4146
    %v4597 = vpack.c.bf16 %v4153, %v4147
    %v4598 = vpack.c.bf16 %v4154, %v4148
    %v4599 = vpack.c.bf16 %v4161, %v4155
    %v4600 = vpack.c.bf16 %v4162, %v4156
    %v4601 = vpack.c.bf16 %v4163, %v4157
    %v4602 = vpack.c.bf16 %v4164, %v4158
    %v4603 = vpack.c.bf16 %v4165, %v4159
    %v4604 = vpack.c.bf16 %v4166, %v4160
    %v4605 = vpack.c.bf16 %v4173, %v4167
    %v4606 = vpack.c.bf16 %v4174, %v4168
    %v4607 = vpack.c.bf16 %v4175, %v4169
    %v4608 = vpack.c.bf16 %v4176, %v4170
    %v4609 = vpack.c.bf16 %v4177, %v4171
    %v4610 = vpack.c.bf16 %v4178, %v4172
    %v4611 = vpack.c.bf16 %v4185, %v4179
    %v4612 = vpack.c.bf16 %v4186, %v4180
    %v4613 = vpack.c.bf16 %v4187, %v4181
    %v4614 = vpack.c.bf16 %v4188, %v4182
    %v4615 = vpack.c.bf16 %v4189, %v4183
    %v4616 = vpack.c.bf16 %v4190, %v4184
    %v4617 = vpack.c.bf16 %v4197, %v4191
    %v4618 = vpack.c.bf16 %v4198, %v4192
    %v4619 = vpack.c.bf16 %v4199, %v4193
    %v4620 = vpack.c.bf16 %v4200, %v4194
    %v4621 = vpack.c.bf16 %v4201, %v4195
    %v4622 = vpack.c.bf16 %v4202, %v4196
    %v4623 = vpack.c.bf16 %v4209, %v4203
    %v4624 = vpack.c.bf16 %v4210, %v4204
    %v4625 = vpack.c.bf16 %v4211, %v4205
    %v4626 = vpack.c.bf16 %v4212, %v4206
    %v4627 = vpack.c.bf16 %v4213, %v4207
    %v4628 = vpack.c.bf16 %v4214, %v4208
    %v4629 = vpack.c.bf16 %v4221, %v4215
    %v4630 = vpack.c.bf16 %v4222, %v4216
    %v4631 = vpack.c.bf16 %v4223, %v4217
    %v4632 = vpack.c.bf16 %v4224, %v4218
    %v4633 = vpack.c.bf16 %v4225, %v4219
    %v4634 = vpack.c.bf16 %v4226, %v4220
    %v4635 = vpack.c.bf16 %v4233, %v4227
    %v4636 = vpack.c.bf16 %v4234, %v4228
    %v4637 = vpack.c.bf16 %v4235, %v4229
    %v4638 = vpack.c.bf16 %v4236, %v4230
    %v4639 = vpack.c.bf16 %v4237, %v4231
    %v4640 = vpack.c.bf16 %v4238, %v4232
    %v4641 = vpack.c.bf16 %v4245, %v4239
    %v4642 = vpack.c.bf16 %v4246, %v4240
    %v4643 = vpack.c.bf16 %v4247, %v4241
    %v4644 = vpack.c.bf16 %v4248, %v4242
    %v4645 = vpack.c.bf16 %v4249, %v4243
    %v4646 = vpack.c.bf16 %v4250, %v4244
    %v4647 = vpack.c.bf16 %v4257, %v4251
    %v4648 = vpack.c.bf16 %v4258, %v4252
    %v4649 = vpack.c.bf16 %v4259, %v4253
    %v4650 = vpack.c.bf16 %v4260, %v4254
    %v4651 = vpack.c.bf16 %v4261, %v4255
    %v4652 = vpack.c.bf16 %v4262, %v4256
    %v4653 = vpack.c.bf16 %v4269, %v4263
    %v4654 = vpack.c.bf16 %v4270, %v4264
    %v4655 = vpack.c.bf16 %v4271, %v4265
    %v4656 = vpack.c.bf16 %v4272, %v4266
    %v4657 = vpack.c.bf16 %v4273, %v4267
    %v4658 = vpack.c.bf16 %v4274, %v4268
    %v4659 = vpack.c.bf16 %v4281, %v4275
    %v4660 = vpack.c.bf16 %v4282, %v4276
    %v4661 = vpack.c.bf16 %v4283, %v4277
    %v4662 = vpack.c.bf16 %v4284, %v4278
    %v4663 = vpack.c.bf16 %v4285, %v4279
    %v4664 = vpack.c.bf16 %v4286, %v4280
    %v4665 = vpack.c.bf16 %v4293, %v4287
    %v4666 = vpack.c.bf16 %v4294, %v4288
    %v4667 = vpack.c.bf16 %v4295, %v4289
    %v4668 = vpack.c.bf16 %v4296, %v4290
    %v4669 = vpack.c.bf16 %v4297, %v4291
    %v4670 = vpack.c.bf16 %v4298, %v4292
    %v4671 = vpack.c.bf16 %v4305, %v4299
    %v4672 = vpack.c.bf16 %v4306, %v4300
    %v4673 = vpack.c.bf16 %v4307, %v4301
    %v4674 = vpack.c.bf16 %v4308, %v4302
    %v4675 = vpack.c.bf16 %v4309, %v4303
    %v4676 = vpack.c.bf16 %v4310, %v4304
    %v4677 = vpack.c.bf16 %v4317, %v4311
    %v4678 = vpack.c.bf16 %v4318, %v4312
    %v4679 = vpack.c.bf16 %v4319, %v4313
    %v4680 = vpack.c.bf16 %v4320, %v4314
    %v4681 = vpack.c.bf16 %v4321, %v4315
    %v4682 = vpack.c.bf16 %v4322, %v4316
    %v4683 = vpack.c.bf16 %v4329, %v4323
    %v4684 = vpack.c.bf16 %v4330, %v4324
    %v4685 = vpack.c.bf16 %v4331, %v4325
    %v4686 = vpack.c.bf16 %v4332, %v4326
    %v4687 = vpack.c.bf16 %v4333, %v4327
    %v4688 = vpack.c.bf16 %v4334, %v4328
    %v4689 = vpack.c.bf16 %v4341, %v4335
    %v4690 = vpack.c.bf16 %v4342, %v4336
    %v4691 = vpack.c.bf16 %v4343, %v4337
    %v4692 = vpack.c.bf16 %v4344, %v4338
    %v4693 = vpack.c.bf16 %v4345, %v4339
    %v4694 = vpack.c.bf16 %v4346, %v4340
    %v4695 = vpack.c.bf16 %v4353, %v4347
    %v4696 = vpack.c.bf16 %v4354, %v4348
    %v4697 = vpack.c.bf16 %v4355, %v4349
    %v4698 = vpack.c.bf16 %v4356, %v4350
    %v4699 = vpack.c.bf16 %v4357, %v4351
    %v4700 = vpack.c.bf16 %v4358, %v4352
    %v4701 = vpack.c.bf16 %v4365, %v4359
    %v4702 = vpack.c.bf16 %v4366, %v4360
    %v4703 = vpack.c.bf16 %v4367, %v4361
    %v4704 = vpack.c.bf16 %v4368, %v4362
    %v4705 = vpack.c.bf16 %v4369, %v4363
    %v4706 = vpack.c.bf16 %v4370, %v4364
    %v4707 = vpack.c.bf16 %v4377, %v4371
    %v4708 = vpack.c.bf16 %v4378, %v4372
    %v4709 = vpack.c.bf16 %v4379, %v4373
    %v4710 = vpack.c.bf16 %v4380, %v4374
    %v4711 = vpack.c.bf16 %v4381, %v4375
    %v4712 = vpack.c.bf16 %v4382, %v4376
    %v4713 = vpack.c.bf16 %v4389, %v4383
    %v4714 = vpack.c.bf16 %v4390, %v4384
    %v4715 = vpack.c.bf16 %v4391, %v4385
    %v4716 = vpack.c.bf16 %v4392, %v4386
    %v4717 = vpack.c.bf16 %v4393, %v4387
    %v4718 = vpack.c.bf16 %v4394, %v4388
    %v4719 = vpack.c.bf16 %v4401, %v4395
    %v4720 = vpack.c.bf16 %v4402, %v4396
    %v4721 = vpack.c.bf16 %v4403, %v4397
    %v4722 = vpack.c.bf16 %v4404, %v4398
    %v4723 = vpack.c.bf16 %v4405, %v4399
    %v4724 = vpack.c.bf16 %v4406, %v4400
    %v4725 = vpack.c.bf16 %v4413, %v4407
    %v4726 = vpack.c.bf16 %v4414, %v4408
    %v4727 = vpack.c.bf16 %v4415, %v4409
    %v4728 = vpack.c.bf16 %v4416, %v4410
    %v4729 = vpack.c.bf16 %v4417, %v4411
    %v4730 = vpack.c.bf16 %v4418, %v4412
    %v4731 = vpack.c.bf16 %v4425, %v4419
    %v4732 = vpack.c.bf16 %v4426, %v4420
    %v4733 = vpack.c.bf16 %v4427, %v4421
    %v4734 = vpack.c.bf16 %v4428, %v4422
    %v4735 = vpack.c.bf16 %v4429, %v4423
    %v4736 = vpack.c.bf16 %v4430, %v4424
    %v4737 = vpack.c.bf16 %v4437, %v4431
    %v4738 = vpack.c.bf16 %v4438, %v4432
    %v4739 = vpack.c.bf16 %v4439, %v4433
    %v4740 = vpack.c.bf16 %v4440, %v4434
    %v4741 = vpack.c.bf16 %v4441, %v4435
    %v4742 = vpack.c.bf16 %v4442, %v4436
    %v4743 = vpack.c.bf16 %v4449, %v4443
    %v4744 = vpack.c.bf16 %v4450, %v4444
    %v4745 = vpack.c.bf16 %v4451, %v4445
    %v4746 = vpack.c.bf16 %v4452, %v4446
    %v4747 = vpack.c.bf16 %v4453, %v4447
    %v4748 = vpack.c.bf16 %v4454, %v4448
    %v4749 = vpack.c.bf16 %v4461, %v4455
    %v4750 = vpack.c.bf16 %v4462, %v4456
    %v4751 = vpack.c.bf16 %v4463, %v4457
    %v4752 = vpack.c.bf16 %v4464, %v4458
    %v4753 = vpack.c.bf16 %v4465, %v4459
    %v4754 = vpack.c.bf16 %v4466, %v4460
    %4755 = vmatpush.bf16.msra.mxu0 %v4509
    %4756 = vmatpush.bf16.msra.mxu0 %v4503
    %4757 = vmatpush.bf16.msra.mxu0 %v4497
    %4758 = vmatpush.bf16.msra.mxu0 %v4491
    %4759 = vmatpush.bf16.msra.mxu0 %v4485
    %4760 = vmatpush.bf16.msra.mxu0 %v4479
    %4761 = vmatpush.bf16.msra.mxu0 %v4473
    %4762 = vmatpush.bf16.msra.mxu0 %v4467
    %4763 = vmatmul.bf16.gmra.mxu0 %v3165
    %v4764 = vpop.f32.mrf.mxu0
    %v4765 = vadd.f32 0.0, %v4764
    %v4766 = vpop.f32.mrf.mxu0
    %4767 = vdwg.mxu0
    %4768 = vmatpush.bf16.msra.mxu0 %v4557
    %4769 = vmatpush.bf16.msra.mxu0 %v4551
    %4770 = vmatpush.bf16.msra.mxu0 %v4545
    %4771 = vmatpush.bf16.msra.mxu0 %v4539
    %4772 = vmatpush.bf16.msra.mxu0 %v4533
    %4773 = vmatpush.bf16.msra.mxu0 %v4527
    %4774 = vmatpush.bf16.msra.mxu0 %v4521
    %4775 = vmatpush.bf16.msra.mxu0 %v4515
    %4776 = vmatmul.bf16.gmra.mxu0 %v3166
    %v4777 = vpop.f32.mrf.mxu0
    %v4778 = vadd.f32 %v4765, %v4777
    %v4779 = vpop.f32.mrf.mxu0
    %4780 = vdwg.mxu0
    %4781 = vmatpush.bf16.msra.mxu0 %v4605
    %4782 = vmatpush.bf16.msra.mxu0 %v4599
    %4783 = vmatpush.bf16.msra.mxu0 %v4593
    %4784 = vmatpush.bf16.msra.mxu0 %v4587
    %4785 = vmatpush.bf16.msra.mxu0 %v4581
    %4786 = vmatpush.bf16.msra.mxu0 %v4575
    %4787 = vmatpush.bf16.msra.mxu0 %v4569
    %4788 = vmatpush.bf16.msra.mxu0 %v4563
    %4789 = vmatmul.bf16.gmra.mxu0 %v3167
    %v4790 = vpop.f32.mrf.mxu0
    %v4791 = vadd.f32 %v4778, %v4790
    %v4792 = vpop.f32.mrf.mxu0
    %4793 = vdwg.mxu0
    %4794 = vmatpush.bf16.msra.mxu0 %v4653
    %4795 = vmatpush.bf16.msra.mxu0 %v4647
    %4796 = vmatpush.bf16.msra.mxu0 %v4641
    %4797 = vmatpush.bf16.msra.mxu0 %v4635
    %4798 = vmatpush.bf16.msra.mxu0 %v4629
    %4799 = vmatpush.bf16.msra.mxu0 %v4623
    %4800 = vmatpush.bf16.msra.mxu0 %v4617
    %4801 = vmatpush.bf16.msra.mxu0 %v4611
    %4802 = vmatmul.bf16.gmra.mxu0 %v3168
    %v4803 = vpop.f32.mrf.mxu0
    %v4804 = vadd.f32 %v4791, %v4803
    %v4805 = vpop.f32.mrf.mxu0
    %4806 = vdwg.mxu0
    %4807 = vmatpush.bf16.msra.mxu0 %v4701
    %4808 = vmatpush.bf16.msra.mxu0 %v4695
    %4809 = vmatpush.bf16.msra.mxu0 %v4689
    %4810 = vmatpush.bf16.msra.mxu0 %v4683
    %4811 = vmatpush.bf16.msra.mxu0 %v4677
    %4812 = vmatpush.bf16.msra.mxu0 %v4671
    %4813 = vmatpush.bf16.msra.mxu0 %v4665
    %4814 = vmatpush.bf16.msra.mxu0 %v4659
    %4815 = vmatmul.bf16.gmra.mxu0 %v3169
    %v4816 = vpop.f32.mrf.mxu0
    %v4817 = vadd.f32 %v4804, %v4816
    %v4818 = vpop.f32.mrf.mxu0
    %4819 = vdwg.mxu0
    %4820 = vmatpush.bf16.msra.mxu0 %v4749
    %4821 = vmatpush.bf16.msra.mxu0 %v4743
    %4822 = vmatpush.bf16.msra.mxu0 %v4737
    %4823 = vmatpush.bf16.msra.mxu0 %v4731
    %4824 = vmatpush.bf16.msra.mxu0 %v4725
    %4825 = vmatpush.bf16.msra.mxu0 %v4719
    %4826 = vmatpush.bf16.msra.mxu0 %v4713
    %4827 = vmatpush.bf16.msra.mxu0 %v4707
    %4828 = vmatmul.bf16.gmra.mxu0 %v3170
    %v4829 = vpop.f32.mrf.mxu0
    %v4830 = vadd.f32 %v4817, %v4829
    %v4831 = vpop.f32.mrf.mxu0
    %4832 = vdwg.mxu0
    %4833 = vmatpush.bf16.msra.mxu0 %v4510
    %4834 = vmatpush.bf16.msra.mxu0 %v4504
    %4835 = vmatpush.bf16.msra.mxu0 %v4498
    %4836 = vmatpush.bf16.msra.mxu0 %v4492
    %4837 = vmatpush.bf16.msra.mxu0 %v4486
    %4838 = vmatpush.bf16.msra.mxu0 %v4480
    %4839 = vmatpush.bf16.msra.mxu0 %v4474
    %4840 = vmatpush.bf16.msra.mxu0 %v4468
    %4841 = vmatmul.bf16.gmra.mxu0 %v3165
    %v4842 = vpop.f32.mrf.mxu0
    %v4843 = vadd.f32 0.0, %v4842
    %v4844 = vpop.f32.mrf.mxu0
    %4845 = vdwg.mxu0
    %4846 = vmatpush.bf16.msra.mxu0 %v4558
    %4847 = vmatpush.bf16.msra.mxu0 %v4552
    %4848 = vmatpush.bf16.msra.mxu0 %v4546
    %4849 = vmatpush.bf16.msra.mxu0 %v4540
    %4850 = vmatpush.bf16.msra.mxu0 %v4534
    %4851 = vmatpush.bf16.msra.mxu0 %v4528
    %4852 = vmatpush.bf16.msra.mxu0 %v4522
    %4853 = vmatpush.bf16.msra.mxu0 %v4516
    %4854 = vmatmul.bf16.gmra.mxu0 %v3166
    %v4855 = vpop.f32.mrf.mxu0
    %v4856 = vadd.f32 %v4843, %v4855
    %v4857 = vpop.f32.mrf.mxu0
    %4858 = vdwg.mxu0
    %4859 = vmatpush.bf16.msra.mxu0 %v4606
    %4860 = vmatpush.bf16.msra.mxu0 %v4600
    %4861 = vmatpush.bf16.msra.mxu0 %v4594
    %4862 = vmatpush.bf16.msra.mxu0 %v4588
    %4863 = vmatpush.bf16.msra.mxu0 %v4582
    %4864 = vmatpush.bf16.msra.mxu0 %v4576
    %4865 = vmatpush.bf16.msra.mxu0 %v4570
    %4866 = vmatpush.bf16.msra.mxu0 %v4564
    %4867 = vmatmul.bf16.gmra.mxu0 %v3167
    %v4868 = vpop.f32.mrf.mxu0
    %v4869 = vadd.f32 %v4856, %v4868
    %v4870 = vpop.f32.mrf.mxu0
    %4871 = vdwg.mxu0
    %4872 = vmatpush.bf16.msra.mxu0 %v4654
    %4873 = vmatpush.bf16.msra.mxu0 %v4648
    %4874 = vmatpush.bf16.msra.mxu0 %v4642
    %4875 = vmatpush.bf16.msra.mxu0 %v4636
    %4876 = vmatpush.bf16.msra.mxu0 %v4630
    %4877 = vmatpush.bf16.msra.mxu0 %v4624
    %4878 = vmatpush.bf16.msra.mxu0 %v4618
    %4879 = vmatpush.bf16.msra.mxu0 %v4612
    %4880 = vmatmul.bf16.gmra.mxu0 %v3168
    %v4881 = vpop.f32.mrf.mxu0
    %v4882 = vadd.f32 %v4869, %v4881
    %v4883 = vpop.f32.mrf.mxu0
    %4884 = vdwg.mxu0
    %4885 = vmatpush.bf16.msra.mxu0 %v4702
    %4886 = vmatpush.bf16.msra.mxu0 %v4696
    %4887 = vmatpush.bf16.msra.mxu0 %v4690
    %4888 = vmatpush.bf16.msra.mxu0 %v4684
    %4889 = vmatpush.bf16.msra.mxu0 %v4678
    %4890 = vmatpush.bf16.msra.mxu0 %v4672
    %4891 = vmatpush.bf16.msra.mxu0 %v4666
    %4892 = vmatpush.bf16.msra.mxu0 %v4660
    %4893 = vmatmul.bf16.gmra.mxu0 %v3169
    %v4894 = vpop.f32.mrf.mxu0
    %v4895 = vadd.f32 %v4882, %v4894
    %v4896 = vpop.f32.mrf.mxu0
    %4897 = vdwg.mxu0
    %4898 = vmatpush.bf16.msra.mxu0 %v4750
    %4899 = vmatpush.bf16.msra.mxu0 %v4744
    %4900 = vmatpush.bf16.msra.mxu0 %v4738
    %4901 = vmatpush.bf16.msra.mxu0 %v4732
    %4902 = vmatpush.bf16.msra.mxu0 %v4726
    %4903 = vmatpush.bf16.msra.mxu0 %v4720
    %4904 = vmatpush.bf16.msra.mxu0 %v4714
    %4905 = vmatpush.bf16.msra.mxu0 %v4708
    %4906 = vmatmul.bf16.gmra.mxu0 %v3170
    %v4907 = vpop.f32.mrf.mxu0
    %v4908 = vadd.f32 %v4895, %v4907
    %v4909 = vpop.f32.mrf.mxu0
    %4910 = vdwg.mxu0
    %4911 = vmatpush.bf16.msra.mxu0 %v4511
    %4912 = vmatpush.bf16.msra.mxu0 %v4505
    %4913 = vmatpush.bf16.msra.mxu0 %v4499
    %4914 = vmatpush.bf16.msra.mxu0 %v4493
    %4915 = vmatpush.bf16.msra.mxu0 %v4487
    %4916 = vmatpush.bf16.msra.mxu0 %v4481
    %4917 = vmatpush.bf16.msra.mxu0 %v4475
    %4918 = vmatpush.bf16.msra.mxu0 %v4469
    %4919 = vmatmul.bf16.gmra.mxu0 %v3165
    %v4920 = vpop.f32.mrf.mxu0
    %v4921 = vadd.f32 0.0, %v4920
    %v4922 = vpop.f32.mrf.mxu0
    %4923 = vdwg.mxu0
    %4924 = vmatpush.bf16.msra.mxu0 %v4559
    %4925 = vmatpush.bf16.msra.mxu0 %v4553
    %4926 = vmatpush.bf16.msra.mxu0 %v4547
    %4927 = vmatpush.bf16.msra.mxu0 %v4541
    %4928 = vmatpush.bf16.msra.mxu0 %v4535
    %4929 = vmatpush.bf16.msra.mxu0 %v4529
    %4930 = vmatpush.bf16.msra.mxu0 %v4523
    %4931 = vmatpush.bf16.msra.mxu0 %v4517
    %4932 = vmatmul.bf16.gmra.mxu0 %v3166
    %v4933 = vpop.f32.mrf.mxu0
    %v4934 = vadd.f32 %v4921, %v4933
    %v4935 = vpop.f32.mrf.mxu0
    %4936 = vdwg.mxu0
    %4937 = vmatpush.bf16.msra.mxu0 %v4607
    %4938 = vmatpush.bf16.msra.mxu0 %v4601
    %4939 = vmatpush.bf16.msra.mxu0 %v4595
    %4940 = vmatpush.bf16.msra.mxu0 %v4589
    %4941 = vmatpush.bf16.msra.mxu0 %v4583
    %4942 = vmatpush.bf16.msra.mxu0 %v4577
    %4943 = vmatpush.bf16.msra.mxu0 %v4571
    %4944 = vmatpush.bf16.msra.mxu0 %v4565
    %4945 = vmatmul.bf16.gmra.mxu0 %v3167
    %v4946 = vpop.f32.mrf.mxu0
    %v4947 = vadd.f32 %v4934, %v4946
    %v4948 = vpop.f32.mrf.mxu0
    %4949 = vdwg.mxu0
    %4950 = vmatpush.bf16.msra.mxu0 %v4655
    %4951 = vmatpush.bf16.msra.mxu0 %v4649
    %4952 = vmatpush.bf16.msra.mxu0 %v4643
    %4953 = vmatpush.bf16.msra.mxu0 %v4637
    %4954 = vmatpush.bf16.msra.mxu0 %v4631
    %4955 = vmatpush.bf16.msra.mxu0 %v4625
    %4956 = vmatpush.bf16.msra.mxu0 %v4619
    %4957 = vmatpush.bf16.msra.mxu0 %v4613
    %4958 = vmatmul.bf16.gmra.mxu0 %v3168
    %v4959 = vpop.f32.mrf.mxu0
    %v4960 = vadd.f32 %v4947, %v4959
    %v4961 = vpop.f32.mrf.mxu0
    %4962 = vdwg.mxu0
    %4963 = vmatpush.bf16.msra.mxu0 %v4703
    %4964 = vmatpush.bf16.msra.mxu0 %v4697
    %4965 = vmatpush.bf16.msra.mxu0 %v4691
    %4966 = vmatpush.bf16.msra.mxu0 %v4685
    %4967 = vmatpush.bf16.msra.mxu0 %v4679
    %4968 = vmatpush.bf16.msra.mxu0 %v4673
    %4969 = vmatpush.bf16.msra.mxu0 %v4667
    %4970 = vmatpush.bf16.msra.mxu0 %v4661
    %4971 = vmatmul.bf16.gmra.mxu0 %v3169
    %v4972 = vpop.f32.mrf.mxu0
    %v4973 = vadd.f32 %v4960, %v4972
    %v4974 = vpop.f32.mrf.mxu0
    %4975 = vdwg.mxu0
    %4976 = vmatpush.bf16.msra.mxu0 %v4751
    %4977 = vmatpush.bf16.msra.mxu0 %v4745
    %4978 = vmatpush.bf16.msra.mxu0 %v4739
    %4979 = vmatpush.bf16.msra.mxu0 %v4733
    %4980 = vmatpush.bf16.msra.mxu0 %v4727
    %4981 = vmatpush.bf16.msra.mxu0 %v4721
    %4982 = vmatpush.bf16.msra.mxu0 %v4715
    %4983 = vmatpush.bf16.msra.mxu0 %v4709
    %4984 = vmatmul.bf16.gmra.mxu0 %v3170
    %v4985 = vpop.f32.mrf.mxu0
    %v4986 = vadd.f32 %v4973, %v4985
    %v4987 = vpop.f32.mrf.mxu0
    %4988 = vdwg.mxu0
    %4989 = vmatpush.bf16.msra.mxu0 %v4512
    %4990 = vmatpush.bf16.msra.mxu0 %v4506
    %4991 = vmatpush.bf16.msra.mxu0 %v4500
    %4992 = vmatpush.bf16.msra.mxu0 %v4494
    %4993 = vmatpush.bf16.msra.mxu0 %v4488
    %4994 = vmatpush.bf16.msra.mxu0 %v4482
    %4995 = vmatpush.bf16.msra.mxu0 %v4476
    %4996 = vmatpush.bf16.msra.mxu0 %v4470
    %4997 = vmatmul.bf16.gmra.mxu0 %v3165
    %v4998 = vpop.f32.mrf.mxu0
    %v4999 = vadd.f32 0.0, %v4998
    %v5000 = vpop.f32.mrf.mxu0
    %5001 = vdwg.mxu0
    %5002 = vmatpush.bf16.msra.mxu0 %v4560
    %5003 = vmatpush.bf16.msra.mxu0 %v4554
    %5004 = vmatpush.bf16.msra.mxu0 %v4548
    %5005 = vmatpush.bf16.msra.mxu0 %v4542
    %5006 = vmatpush.bf16.msra.mxu0 %v4536
    %5007 = vmatpush.bf16.msra.mxu0 %v4530
    %5008 = vmatpush.bf16.msra.mxu0 %v4524
    %5009 = vmatpush.bf16.msra.mxu0 %v4518
    %5010 = vmatmul.bf16.gmra.mxu0 %v3166
    %v5011 = vpop.f32.mrf.mxu0
    %v5012 = vadd.f32 %v4999, %v5011
    %v5013 = vpop.f32.mrf.mxu0
    %5014 = vdwg.mxu0
    %5015 = vmatpush.bf16.msra.mxu0 %v4608
    %5016 = vmatpush.bf16.msra.mxu0 %v4602
    %5017 = vmatpush.bf16.msra.mxu0 %v4596
    %5018 = vmatpush.bf16.msra.mxu0 %v4590
    %5019 = vmatpush.bf16.msra.mxu0 %v4584
    %5020 = vmatpush.bf16.msra.mxu0 %v4578
    %5021 = vmatpush.bf16.msra.mxu0 %v4572
    %5022 = vmatpush.bf16.msra.mxu0 %v4566
    %5023 = vmatmul.bf16.gmra.mxu0 %v3167
    %v5024 = vpop.f32.mrf.mxu0
    %v5025 = vadd.f32 %v5012, %v5024
    %v5026 = vpop.f32.mrf.mxu0
    %5027 = vdwg.mxu0
    %5028 = vmatpush.bf16.msra.mxu0 %v4656
    %5029 = vmatpush.bf16.msra.mxu0 %v4650
    %5030 = vmatpush.bf16.msra.mxu0 %v4644
    %5031 = vmatpush.bf16.msra.mxu0 %v4638
    %5032 = vmatpush.bf16.msra.mxu0 %v4632
    %5033 = vmatpush.bf16.msra.mxu0 %v4626
    %5034 = vmatpush.bf16.msra.mxu0 %v4620
    %5035 = vmatpush.bf16.msra.mxu0 %v4614
    %5036 = vmatmul.bf16.gmra.mxu0 %v3168
    %v5037 = vpop.f32.mrf.mxu0
    %v5038 = vadd.f32 %v5025, %v5037
    %v5039 = vpop.f32.mrf.mxu0
    %5040 = vdwg.mxu0
    %5041 = vmatpush.bf16.msra.mxu0 %v4704
    %5042 = vmatpush.bf16.msra.mxu0 %v4698
    %5043 = vmatpush.bf16.msra.mxu0 %v4692
    %5044 = vmatpush.bf16.msra.mxu0 %v4686
    %5045 = vmatpush.bf16.msra.mxu0 %v4680
    %5046 = vmatpush.bf16.msra.mxu0 %v4674
    %5047 = vmatpush.bf16.msra.mxu0 %v4668
    %5048 = vmatpush.bf16.msra.mxu0 %v4662
    %5049 = vmatmul.bf16.gmra.mxu0 %v3169
    %v5050 = vpop.f32.mrf.mxu0
    %v5051 = vadd.f32 %v5038, %v5050
    %v5052 = vpop.f32.mrf.mxu0
    %5053 = vdwg.mxu0
    %5054 = vmatpush.bf16.msra.mxu0 %v4752
    %5055 = vmatpush.bf16.msra.mxu0 %v4746
    %5056 = vmatpush.bf16.msra.mxu0 %v4740
    %5057 = vmatpush.bf16.msra.mxu0 %v4734
    %5058 = vmatpush.bf16.msra.mxu0 %v4728
    %5059 = vmatpush.bf16.msra.mxu0 %v4722
    %5060 = vmatpush.bf16.msra.mxu0 %v4716
    %5061 = vmatpush.bf16.msra.mxu0 %v4710
    %5062 = vmatmul.bf16.gmra.mxu0 %v3170
    %v5063 = vpop.f32.mrf.mxu0
    %v5064 = vadd.f32 %v5051, %v5063
    %v5065 = vpop.f32.mrf.mxu0
    %5066 = vdwg.mxu0
    %5067 = vmatpush.bf16.msra.mxu0 %v4513
    %5068 = vmatpush.bf16.msra.mxu0 %v4507
    %5069 = vmatpush.bf16.msra.mxu0 %v4501
    %5070 = vmatpush.bf16.msra.mxu0 %v4495
    %5071 = vmatpush.bf16.msra.mxu0 %v4489
    %5072 = vmatpush.bf16.msra.mxu0 %v4483
    %5073 = vmatpush.bf16.msra.mxu0 %v4477
    %5074 = vmatpush.bf16.msra.mxu0 %v4471
    %5075 = vmatmul.bf16.gmra.mxu0 %v3165
    %v5076 = vpop.f32.mrf.mxu0
    %v5077 = vadd.f32 0.0, %v5076
    %v5078 = vpop.f32.mrf.mxu0
    %5079 = vdwg.mxu0
    %5080 = vmatpush.bf16.msra.mxu0 %v4561
    %5081 = vmatpush.bf16.msra.mxu0 %v4555
    %5082 = vmatpush.bf16.msra.mxu0 %v4549
    %5083 = vmatpush.bf16.msra.mxu0 %v4543
    %5084 = vmatpush.bf16.msra.mxu0 %v4537
    %5085 = vmatpush.bf16.msra.mxu0 %v4531
    %5086 = vmatpush.bf16.msra.mxu0 %v4525
    %5087 = vmatpush.bf16.msra.mxu0 %v4519
    %5088 = vmatmul.bf16.gmra.mxu0 %v3166
    %v5089 = vpop.f32.mrf.mxu0
    %v5090 = vadd.f32 %v5077, %v5089
    %v5091 = vpop.f32.mrf.mxu0
    %5092 = vdwg.mxu0
    %5093 = vmatpush.bf16.msra.mxu0 %v4609
    %5094 = vmatpush.bf16.msra.mxu0 %v4603
    %5095 = vmatpush.bf16.msra.mxu0 %v4597
    %5096 = vmatpush.bf16.msra.mxu0 %v4591
    %5097 = vmatpush.bf16.msra.mxu0 %v4585
    %5098 = vmatpush.bf16.msra.mxu0 %v4579
    %5099 = vmatpush.bf16.msra.mxu0 %v4573
    %5100 = vmatpush.bf16.msra.mxu0 %v4567
    %5101 = vmatmul.bf16.gmra.mxu0 %v3167
    %v5102 = vpop.f32.mrf.mxu0
    %v5103 = vadd.f32 %v5090, %v5102
    %v5104 = vpop.f32.mrf.mxu0
    %5105 = vdwg.mxu0
    %5106 = vmatpush.bf16.msra.mxu0 %v4657
    %5107 = vmatpush.bf16.msra.mxu0 %v4651
    %5108 = vmatpush.bf16.msra.mxu0 %v4645
    %5109 = vmatpush.bf16.msra.mxu0 %v4639
    %5110 = vmatpush.bf16.msra.mxu0 %v4633
    %5111 = vmatpush.bf16.msra.mxu0 %v4627
    %5112 = vmatpush.bf16.msra.mxu0 %v4621
    %5113 = vmatpush.bf16.msra.mxu0 %v4615
    %5114 = vmatmul.bf16.gmra.mxu0 %v3168
    %v5115 = vpop.f32.mrf.mxu0
    %v5116 = vadd.f32 %v5103, %v5115
    %v5117 = vpop.f32.mrf.mxu0
    %5118 = vdwg.mxu0
    %5119 = vmatpush.bf16.msra.mxu0 %v4705
    %5120 = vmatpush.bf16.msra.mxu0 %v4699
    %5121 = vmatpush.bf16.msra.mxu0 %v4693
    %5122 = vmatpush.bf16.msra.mxu0 %v4687
    %5123 = vmatpush.bf16.msra.mxu0 %v4681
    %5124 = vmatpush.bf16.msra.mxu0 %v4675
    %5125 = vmatpush.bf16.msra.mxu0 %v4669
    %5126 = vmatpush.bf16.msra.mxu0 %v4663
    %5127 = vmatmul.bf16.gmra.mxu0 %v3169
    %v5128 = vpop.f32.mrf.mxu0
    %v5129 = vadd.f32 %v5116, %v5128
    %v5130 = vpop.f32.mrf.mxu0
    %5131 = vdwg.mxu0
    %5132 = vmatpush.bf16.msra.mxu0 %v4753
    %5133 = vmatpush.bf16.msra.mxu0 %v4747
    %5134 = vmatpush.bf16.msra.mxu0 %v4741
    %5135 = vmatpush.bf16.msra.mxu0 %v4735
    %5136 = vmatpush.bf16.msra.mxu0 %v4729
    %5137 = vmatpush.bf16.msra.mxu0 %v4723
    %5138 = vmatpush.bf16.msra.mxu0 %v4717
    %5139 = vmatpush.bf16.msra.mxu0 %v4711
    %5140 = vmatmul.bf16.gmra.mxu0 %v3170
    %v5141 = vpop.f32.mrf.mxu0
    %v5142 = vadd.f32 %v5129, %v5141
    %v5143 = vpop.f32.mrf.mxu0
    %5144 = vdwg.mxu0
    %5145 = vmatpush.bf16.msra.mxu0 %v4514
    %5146 = vmatpush.bf16.msra.mxu0 %v4508
    %5147 = vmatpush.bf16.msra.mxu0 %v4502
    %5148 = vmatpush.bf16.msra.mxu0 %v4496
    %5149 = vmatpush.bf16.msra.mxu0 %v4490
    %5150 = vmatpush.bf16.msra.mxu0 %v4484
    %5151 = vmatpush.bf16.msra.mxu0 %v4478
    %5152 = vmatpush.bf16.msra.mxu0 %v4472
    %5153 = vmatmul.bf16.gmra.mxu0 %v3165
    %v5154 = vpop.f32.mrf.mxu0
    %v5155 = vadd.f32 0.0, %v5154
    %v5156 = vpop.f32.mrf.mxu0
    %5157 = vdwg.mxu0
    %5158 = vmatpush.bf16.msra.mxu0 %v4562
    %5159 = vmatpush.bf16.msra.mxu0 %v4556
    %5160 = vmatpush.bf16.msra.mxu0 %v4550
    %5161 = vmatpush.bf16.msra.mxu0 %v4544
    %5162 = vmatpush.bf16.msra.mxu0 %v4538
    %5163 = vmatpush.bf16.msra.mxu0 %v4532
    %5164 = vmatpush.bf16.msra.mxu0 %v4526
    %5165 = vmatpush.bf16.msra.mxu0 %v4520
    %5166 = vmatmul.bf16.gmra.mxu0 %v3166
    %v5167 = vpop.f32.mrf.mxu0
    %v5168 = vadd.f32 %v5155, %v5167
    %v5169 = vpop.f32.mrf.mxu0
    %5170 = vdwg.mxu0
    %5171 = vmatpush.bf16.msra.mxu0 %v4610
    %5172 = vmatpush.bf16.msra.mxu0 %v4604
    %5173 = vmatpush.bf16.msra.mxu0 %v4598
    %5174 = vmatpush.bf16.msra.mxu0 %v4592
    %5175 = vmatpush.bf16.msra.mxu0 %v4586
    %5176 = vmatpush.bf16.msra.mxu0 %v4580
    %5177 = vmatpush.bf16.msra.mxu0 %v4574
    %5178 = vmatpush.bf16.msra.mxu0 %v4568
    %5179 = vmatmul.bf16.gmra.mxu0 %v3167
    %v5180 = vpop.f32.mrf.mxu0
    %v5181 = vadd.f32 %v5168, %v5180
    %v5182 = vpop.f32.mrf.mxu0
    %5183 = vdwg.mxu0
    %5184 = vmatpush.bf16.msra.mxu0 %v4658
    %5185 = vmatpush.bf16.msra.mxu0 %v4652
    %5186 = vmatpush.bf16.msra.mxu0 %v4646
    %5187 = vmatpush.bf16.msra.mxu0 %v4640
    %5188 = vmatpush.bf16.msra.mxu0 %v4634
    %5189 = vmatpush.bf16.msra.mxu0 %v4628
    %5190 = vmatpush.bf16.msra.mxu0 %v4622
    %5191 = vmatpush.bf16.msra.mxu0 %v4616
    %5192 = vmatmul.bf16.gmra.mxu0 %v3168
    %v5193 = vpop.f32.mrf.mxu0
    %v5194 = vadd.f32 %v5181, %v5193
    %v5195 = vpop.f32.mrf.mxu0
    %5196 = vdwg.mxu0
    %5197 = vmatpush.bf16.msra.mxu0 %v4706
    %5198 = vmatpush.bf16.msra.mxu0 %v4700
    %5199 = vmatpush.bf16.msra.mxu0 %v4694
    %5200 = vmatpush.bf16.msra.mxu0 %v4688
    %5201 = vmatpush.bf16.msra.mxu0 %v4682
    %5202 = vmatpush.bf16.msra.mxu0 %v4676
    %5203 = vmatpush.bf16.msra.mxu0 %v4670
    %5204 = vmatpush.bf16.msra.mxu0 %v4664
    %5205 = vmatmul.bf16.gmra.mxu0 %v3169
    %v5206 = vpop.f32.mrf.mxu0
    %v5207 = vadd.f32 %v5194, %v5206
    %v5208 = vpop.f32.mrf.mxu0
    %5209 = vdwg.mxu0
    %5210 = vmatpush.bf16.msra.mxu0 %v4754
    %5211 = vmatpush.bf16.msra.mxu0 %v4748
    %5212 = vmatpush.bf16.msra.mxu0 %v4742
    %5213 = vmatpush.bf16.msra.mxu0 %v4736
    %5214 = vmatpush.bf16.msra.mxu0 %v4730
    %5215 = vmatpush.bf16.msra.mxu0 %v4724
    %5216 = vmatpush.bf16.msra.mxu0 %v4718
    %5217 = vmatpush.bf16.msra.mxu0 %v4712
    %5218 = vmatmul.bf16.gmra.mxu0 %v3170
    %v5219 = vpop.f32.mrf.mxu0
    %v5220 = vadd.f32 %v5207, %v5219
    %v5221 = vpop.f32.mrf.mxu0
    %5222 = vdwg.mxu0
    %v5223 = vld [vmem:[%s13] sm:$0x3f]
    %v5225 = vperm.slane %v5223, 0
    %v5226 = vperm.slane %v5223, 1
    %v5227 = vperm.slane %v5223, 2
    %v5228 = vperm.slane %v5223, 3
    %v5229 = vperm.slane %v5223, 4
    %v5230 = vperm.slane %v5223, 5
    %v5237 = vmul.f32 %v4830, %v5225
    %v5238 = vmul.f32 %v4908, %v5226
    %v5239 = vmul.f32 %v4986, %v5227
    %v5240 = vmul.f32 %v5064, %v5228
    %v5241 = vmul.f32 %v5142, %v5229
    %v5242 = vmul.f32 %v5220, %v5230
    %v5243 = vld [vmem:[%s14] sm:$0x3f]
    %v5245 = vperm.slane %v5243, 0
    %v5246 = vperm.slane %v5243, 1
    %v5247 = vperm.slane %v5243, 2
    %v5248 = vperm.slane %v5243, 3
    %v5249 = vperm.slane %v5243, 4
    %v5250 = vperm.slane %v5243, 5
    %v5257 = vadd.f32 %v5237, %v5245
    %v5258 = vadd.f32 %v5238, %v5246
    %v5259 = vadd.f32 %v5239, %v5247
    %v5260 = vadd.f32 %v5240, %v5248
    %v5261 = vadd.f32 %v5241, %v5249
    %v5262 = vadd.f32 %v5242, %v5250
    %v5263 = vmax.f32 %v5257, 0.0
    %v5264 = vmax.f32 %v5258, 0.0
    %v5265 = vmax.f32 %v5259, 0.0
    %v5266 = vmax.f32 %v5260, 0.0
    %v5267 = vmax.f32 %v5261, 0.0
    %v5268 = vmax.f32 %v5262, 0.0
    %v5269 = vpack.c.bf16 %v5263, %v5263
    %v5270 = vpack.c.bf16 %v5264, %v5264
    %v5271 = vpack.c.bf16 %v5265, %v5265
    %v5272 = vpack.c.bf16 %v5266, %v5266
    %v5273 = vpack.c.bf16 %v5267, %v5267
    %v5274 = vpack.c.bf16 %v5268, %v5268
    %v5275 = vld [vmem:[%s15] sm:$0xf]
    %v5276 = vld [vmem:[%s15 + $0x4] sm:$0xf]
    %v5277 = vld [vmem:[%s15 + $0x8] sm:$0xf]
    %v5278 = vld [vmem:[%s15 + $0xc] sm:$0xf]
    %v5279 = vld [vmem:[%s15 + $0x10] sm:$0xf]
    %v5280 = vld [vmem:[%s15 + $0x14] sm:$0xf]
    %v5281 = vld [vmem:[%s15 + $0x18] sm:$0xf]
    %v5282 = vld [vmem:[%s15 + $0x1c] sm:$0xf]
    %v5283 = vld [vmem:[%s15 + $0x20] sm:$0xf]
    %v5284 = vld [vmem:[%s15 + $0x24] sm:$0xf]
    %v5285 = vld [vmem:[%s15 + $0x28] sm:$0xf]
    %v5286 = vld [vmem:[%s15 + $0x2c] sm:$0xf]
    %v5287 = vld [vmem:[%s15 + $0x30] sm:$0xf]
    %v5288 = vld [vmem:[%s15 + $0x34] sm:$0xf]
    %v5289 = vld [vmem:[%s15 + $0x38] sm:$0xf]
    %v5290 = vld [vmem:[%s15 + $0x3c] sm:$0xf]
    %v5291 = vld [vmem:[%s15 + $0x40] sm:$0xf]
    %v5292 = vld [vmem:[%s15 + $0x44] sm:$0xf]
    %v5293 = vld [vmem:[%s15 + $0x48] sm:$0xf]
    %v5294 = vld [vmem:[%s15 + $0x4c] sm:$0xf]
    %v5295 = vld [vmem:[%s15 + $0x50] sm:$0xf]
    %v5296 = vld [vmem:[%s15 + $0x54] sm:$0xf]
    %v5297 = vld [vmem:[%s15 + $0x58] sm:$0xf]
    %v5298 = vld [vmem:[%s15 + $0x5c] sm:$0xf]
    %v5299 = vld [vmem:[%s15 + $0x60] sm:$0xf]
    %v5300 = vld [vmem:[%s15 + $0x64] sm:$0xf]
    %v5301 = vld [vmem:[%s15 + $0x68] sm:$0xf]
    %v5302 = vld [vmem:[%s15 + $0x6c] sm:$0xf]
    %v5303 = vld [vmem:[%s15 + $0x70] sm:$0xf]
    %v5304 = vld [vmem:[%s15 + $0x74] sm:$0xf]
    %v5305 = vld [vmem:[%s15 + $0x78] sm:$0xf]
    %v5306 = vld [vmem:[%s15 + $0x7c] sm:$0xf]
    %v5307 = vld [vmem:[%s15 + $0x80] sm:$0xf]
    %v5308 = vld [vmem:[%s15 + $0x84] sm:$0xf]
    %v5309 = vld [vmem:[%s15 + $0x88] sm:$0xf]
    %v5310 = vld [vmem:[%s15 + $0x8c] sm:$0xf]
    %v5311 = vld [vmem:[%s15 + $0x90] sm:$0xf]
    %v5312 = vld [vmem:[%s15 + $0x94] sm:$0xf]
    %v5313 = vld [vmem:[%s15 + $0x98] sm:$0xf]
    %v5314 = vld [vmem:[%s15 + $0x9c] sm:$0xf]
    %v5315 = vld [vmem:[%s15 + $0xa0] sm:$0xf]
    %v5316 = vld [vmem:[%s15 + $0xa4] sm:$0xf]
    %v5317 = vld [vmem:[%s15 + $0xa8] sm:$0xf]
    %v5318 = vld [vmem:[%s15 + $0xac] sm:$0xf]
    %v5319 = vld [vmem:[%s15 + $0xb0] sm:$0xf]
    %v5320 = vld [vmem:[%s15 + $0xb4] sm:$0xf]
    %v5321 = vld [vmem:[%s15 + $0xb8] sm:$0xf]
    %v5322 = vld [vmem:[%s15 + $0xbc] sm:$0xf]
    %v5323 = vld [vmem:[%s15 + $0xc0] sm:$0xf]
    %v5324 = vld [vmem:[%s15 + $0xc4] sm:$0xf]
    %v5325 = vld [vmem:[%s15 + $0xc8] sm:$0xf]
    %v5326 = vld [vmem:[%s15 + $0xcc] sm:$0xf]
    %v5327 = vld [vmem:[%s15 + $0xd0] sm:$0xf]
    %v5328 = vld [vmem:[%s15 + $0xd4] sm:$0xf]
    %v5329 = vld [vmem:[%s15 + $0xd8] sm:$0xf]
    %v5330 = vld [vmem:[%s15 + $0xdc] sm:$0xf]
    %v5331 = vld [vmem:[%s15 + $0xe0] sm:$0xf]
    %v5332 = vld [vmem:[%s15 + $0xe4] sm:$0xf]
    %v5333 = vld [vmem:[%s15 + $0xe8] sm:$0xf]
    %v5334 = vld [vmem:[%s15 + $0xec] sm:$0xf]
    %v5335 = vld [vmem:[%s15 + $0xf0] sm:$0xf]
    %v5336 = vld [vmem:[%s15 + $0xf4] sm:$0xf]
    %v5337 = vld [vmem:[%s15 + $0xf8] sm:$0xf]
    %v5338 = vld [vmem:[%s15 + $0xfc] sm:$0xf]
    %v5339 = vld [vmem:[%s15 + $0x100] sm:$0xf]
    %v5340 = vld [vmem:[%s15 + $0x104] sm:$0xf]
    %v5341 = vld [vmem:[%s15 + $0x108] sm:$0xf]
    %v5342 = vld [vmem:[%s15 + $0x10c] sm:$0xf]
    %v5343 = vld [vmem:[%s15 + $0x110] sm:$0xf]
    %v5344 = vld [vmem:[%s15 + $0x114] sm:$0xf]
    %v5345 = vld [vmem:[%s15 + $0x118] sm:$0xf]
    %v5346 = vld [vmem:[%s15 + $0x11c] sm:$0xf]
    %v5347 = vld [vmem:[%s15 + $0x120] sm:$0xf]
    %v5348 = vld [vmem:[%s15 + $0x124] sm:$0xf]
    %v5349 = vld [vmem:[%s15 + $0x128] sm:$0xf]
    %v5350 = vld [vmem:[%s15 + $0x12c] sm:$0xf]
    %v5351 = vld [vmem:[%s15 + $0x130] sm:$0xf]
    %v5352 = vld [vmem:[%s15 + $0x134] sm:$0xf]
    %v5353 = vld [vmem:[%s15 + $0x138] sm:$0xf]
    %v5354 = vld [vmem:[%s15 + $0x13c] sm:$0xf]
    %v5355 = vld [vmem:[%s15 + $0x140] sm:$0xf]
    %v5356 = vld [vmem:[%s15 + $0x144] sm:$0xf]
    %v5357 = vld [vmem:[%s15 + $0x148] sm:$0xf]
    %v5358 = vld [vmem:[%s15 + $0x14c] sm:$0xf]
    %v5359 = vld [vmem:[%s15 + $0x150] sm:$0xf]
    %v5360 = vld [vmem:[%s15 + $0x154] sm:$0xf]
    %v5361 = vld [vmem:[%s15 + $0x158] sm:$0xf]
    %v5362 = vld [vmem:[%s15 + $0x15c] sm:$0xf]
    %v5363 = vld [vmem:[%s15 + $0x160] sm:$0xf]
    %v5364 = vld [vmem:[%s15 + $0x164] sm:$0xf]
    %v5365 = vld [vmem:[%s15 + $0x168] sm:$0xf]
    %v5366 = vld [vmem:[%s15 + $0x16c] sm:$0xf]
    %v5367 = vld [vmem:[%s15 + $0x170] sm:$0xf]
    %v5368 = vld [vmem:[%s15 + $0x174] sm:$0xf]
    %v5369 = vld [vmem:[%s15 + $0x178] sm:$0xf]
    %v5370 = vld [vmem:[%s15 + $0x17c] sm:$0xf]
    %v5371 = vld [vmem:[%s16] sm:$0x1]
    %v5373 = vperm.slane %v5371, 0
    %v5471 = vunpack.c.l.b16 %v5275
    %v5472 = vunpack.c.l.b16 %v5276
    %v5473 = vunpack.c.l.b16 %v5277
    %v5474 = vunpack.c.l.b16 %v5278
    %v5475 = vunpack.c.l.b16 %v5279
    %v5476 = vunpack.c.l.b16 %v5280
    %v5477 = vunpack.c.l.b16 %v5281
    %v5478 = vunpack.c.l.b16 %v5282
    %v5479 = vunpack.c.l.b16 %v5283
    %v5480 = vunpack.c.l.b16 %v5284
    %v5481 = vunpack.c.l.b16 %v5285
    %v5482 = vunpack.c.l.b16 %v5286
    %v5483 = vunpack.c.l.b16 %v5287
    %v5484 = vunpack.c.l.b16 %v5288
    %v5485 = vunpack.c.l.b16 %v5289
    %v5486 = vunpack.c.l.b16 %v5290
    %v5487 = vunpack.c.l.b16 %v5291
    %v5488 = vunpack.c.l.b16 %v5292
    %v5489 = vunpack.c.l.b16 %v5293
    %v5490 = vunpack.c.l.b16 %v5294
    %v5491 = vunpack.c.l.b16 %v5295
    %v5492 = vunpack.c.l.b16 %v5296
    %v5493 = vunpack.c.l.b16 %v5297
    %v5494 = vunpack.c.l.b16 %v5298
    %v5495 = vunpack.c.l.b16 %v5299
    %v5496 = vunpack.c.l.b16 %v5300
    %v5497 = vunpack.c.l.b16 %v5301
    %v5498 = vunpack.c.l.b16 %v5302
    %v5499 = vunpack.c.l.b16 %v5303
    %v5500 = vunpack.c.l.b16 %v5304
    %v5501 = vunpack.c.l.b16 %v5305
    %v5502 = vunpack.c.l.b16 %v5306
    %v5503 = vunpack.c.l.b16 %v5307
    %v5504 = vunpack.c.l.b16 %v5308
    %v5505 = vunpack.c.l.b16 %v5309
    %v5506 = vunpack.c.l.b16 %v5310
    %v5507 = vunpack.c.l.b16 %v5311
    %v5508 = vunpack.c.l.b16 %v5312
    %v5509 = vunpack.c.l.b16 %v5313
    %v5510 = vunpack.c.l.b16 %v5314
    %v5511 = vunpack.c.l.b16 %v5315
    %v5512 = vunpack.c.l.b16 %v5316
    %v5513 = vunpack.c.l.b16 %v5317
    %v5514 = vunpack.c.l.b16 %v5318
    %v5515 = vunpack.c.l.b16 %v5319
    %v5516 = vunpack.c.l.b16 %v5320
    %v5517 = vunpack.c.l.b16 %v5321
    %v5518 = vunpack.c.l.b16 %v5322
    %v5519 = vunpack.c.l.b16 %v5323
    %v5520 = vunpack.c.l.b16 %v5324
    %v5521 = vunpack.c.l.b16 %v5325
    %v5522 = vunpack.c.l.b16 %v5326
    %v5523 = vunpack.c.l.b16 %v5327
    %v5524 = vunpack.c.l.b16 %v5328
    %v5525 = vunpack.c.l.b16 %v5329
    %v5526 = vunpack.c.l.b16 %v5330
    %v5527 = vunpack.c.l.b16 %v5331
    %v5528 = vunpack.c.l.b16 %v5332
    %v5529 = vunpack.c.l.b16 %v5333
    %v5530 = vunpack.c.l.b16 %v5334
    %v5531 = vunpack.c.l.b16 %v5335
    %v5532 = vunpack.c.l.b16 %v5336
    %v5533 = vunpack.c.l.b16 %v5337
    %v5534 = vunpack.c.l.b16 %v5338
    %v5535 = vunpack.c.l.b16 %v5339
    %v5536 = vunpack.c.l.b16 %v5340
    %v5537 = vunpack.c.l.b16 %v5341
    %v5538 = vunpack.c.l.b16 %v5342
    %v5539 = vunpack.c.l.b16 %v5343
    %v5540 = vunpack.c.l.b16 %v5344
    %v5541 = vunpack.c.l.b16 %v5345
    %v5542 = vunpack.c.l.b16 %v5346
    %v5543 = vunpack.c.l.b16 %v5347
    %v5544 = vunpack.c.l.b16 %v5348
    %v5545 = vunpack.c.l.b16 %v5349
    %v5546 = vunpack.c.l.b16 %v5350
    %v5547 = vunpack.c.l.b16 %v5351
    %v5548 = vunpack.c.l.b16 %v5352
    %v5549 = vunpack.c.l.b16 %v5353
    %v5550 = vunpack.c.l.b16 %v5354
    %v5551 = vunpack.c.l.b16 %v5355
    %v5552 = vunpack.c.l.b16 %v5356
    %v5553 = vunpack.c.l.b16 %v5357
    %v5554 = vunpack.c.l.b16 %v5358
    %v5555 = vunpack.c.l.b16 %v5359
    %v5556 = vunpack.c.l.b16 %v5360
    %v5557 = vunpack.c.l.b16 %v5361
    %v5558 = vunpack.c.l.b16 %v5362
    %v5559 = vunpack.c.l.b16 %v5363
    %v5560 = vunpack.c.l.b16 %v5364
    %v5561 = vunpack.c.l.b16 %v5365
    %v5562 = vunpack.c.l.b16 %v5366
    %v5563 = vunpack.c.l.b16 %v5367
    %v5564 = vunpack.c.l.b16 %v5368
    %v5565 = vunpack.c.l.b16 %v5369
    %v5566 = vunpack.c.l.b16 %v5370
    %v5567 = vpack.c.b16 %v5472, %v5471
    %v5568 = vpack.c.b16 %v5474, %v5473
    %v5569 = vpack.c.b16 %v5476, %v5475
    %v5570 = vpack.c.b16 %v5478, %v5477
    %v5571 = vpack.c.b16 %v5480, %v5479
    %v5572 = vpack.c.b16 %v5482, %v5481
    %v5573 = vpack.c.b16 %v5484, %v5483
    %v5574 = vpack.c.b16 %v5486, %v5485
    %v5575 = vpack.c.b16 %v5488, %v5487
    %v5576 = vpack.c.b16 %v5490, %v5489
    %v5577 = vpack.c.b16 %v5492, %v5491
    %v5578 = vpack.c.b16 %v5494, %v5493
    %v5579 = vpack.c.b16 %v5496, %v5495
    %v5580 = vpack.c.b16 %v5498, %v5497
    %v5581 = vpack.c.b16 %v5500, %v5499
    %v5582 = vpack.c.b16 %v5502, %v5501
    %v5583 = vpack.c.b16 %v5504, %v5503
    %v5584 = vpack.c.b16 %v5506, %v5505
    %v5585 = vpack.c.b16 %v5508, %v5507
    %v5586 = vpack.c.b16 %v5510, %v5509
    %v5587 = vpack.c.b16 %v5512, %v5511
    %v5588 = vpack.c.b16 %v5514, %v5513
    %v5589 = vpack.c.b16 %v5516, %v5515
    %v5590 = vpack.c.b16 %v5518, %v5517
    %v5591 = vpack.c.b16 %v5520, %v5519
    %v5592 = vpack.c.b16 %v5522, %v5521
    %v5593 = vpack.c.b16 %v5524, %v5523
    %v5594 = vpack.c.b16 %v5526, %v5525
    %v5595 = vpack.c.b16 %v5528, %v5527
    %v5596 = vpack.c.b16 %v5530, %v5529
    %v5597 = vpack.c.b16 %v5532, %v5531
    %v5598 = vpack.c.b16 %v5534, %v5533
    %v5599 = vpack.c.b16 %v5536, %v5535
    %v5600 = vpack.c.b16 %v5538, %v5537
    %v5601 = vpack.c.b16 %v5540, %v5539
    %v5602 = vpack.c.b16 %v5542, %v5541
    %v5603 = vpack.c.b16 %v5544, %v5543
    %v5604 = vpack.c.b16 %v5546, %v5545
    %v5605 = vpack.c.b16 %v5548, %v5547
    %v5606 = vpack.c.b16 %v5550, %v5549
    %v5607 = vpack.c.b16 %v5552, %v5551
    %v5608 = vpack.c.b16 %v5554, %v5553
    %v5609 = vpack.c.b16 %v5556, %v5555
    %v5610 = vpack.c.b16 %v5558, %v5557
    %v5611 = vpack.c.b16 %v5560, %v5559
    %v5612 = vpack.c.b16 %v5562, %v5561
    %v5613 = vpack.c.b16 %v5564, %v5563
    %v5614 = vpack.c.b16 %v5566, %v5565
    %5663 = vmatpush.bf16.msra.mxu0 %v5574
    %5664 = vmatpush.bf16.msra.mxu0 %v5573
    %5665 = vmatpush.bf16.msra.mxu0 %v5572
    %5666 = vmatpush.bf16.msra.mxu0 %v5571
    %5667 = vmatpush.bf16.msra.mxu0 %v5570
    %5668 = vmatpush.bf16.msra.mxu0 %v5569
    %5669 = vmatpush.bf16.msra.mxu0 %v5568
    %5670 = vmatpush.bf16.msra.mxu0 %v5567
    %5671 = vmatmul.bf16.gmra.mxu0 %v5269
    %v5672 = vpop.f32.mrf.mxu0
    %v5673 = vadd.f32 %v5373, %v5672
    %v5674 = vpop.f32.mrf.mxu0
    %5675 = vdwg.mxu0
    %5676 = vmatpush.bf16.msra.mxu0 %v5582
    %5677 = vmatpush.bf16.msra.mxu0 %v5581
    %5678 = vmatpush.bf16.msra.mxu0 %v5580
    %5679 = vmatpush.bf16.msra.mxu0 %v5579
    %5680 = vmatpush.bf16.msra.mxu0 %v5578
    %5681 = vmatpush.bf16.msra.mxu0 %v5577
    %5682 = vmatpush.bf16.msra.mxu0 %v5576
    %5683 = vmatpush.bf16.msra.mxu0 %v5575
    %5684 = vmatmul.bf16.gmra.mxu0 %v5270
    %v5685 = vpop.f32.mrf.mxu0
    %v5686 = vadd.f32 %v5673, %v5685
    %v5687 = vpop.f32.mrf.mxu0
    %5688 = vdwg.mxu0
    %5689 = vmatpush.bf16.msra.mxu0 %v5590
    %5690 = vmatpush.bf16.msra.mxu0 %v5589
    %5691 = vmatpush.bf16.msra.mxu0 %v5588
    %5692 = vmatpush.bf16.msra.mxu0 %v5587
    %5693 = vmatpush.bf16.msra.mxu0 %v5586
    %5694 = vmatpush.bf16.msra.mxu0 %v5585
    %5695 = vmatpush.bf16.msra.mxu0 %v5584
    %5696 = vmatpush.bf16.msra.mxu0 %v5583
    %5697 = vmatmul.bf16.gmra.mxu0 %v5271
    %v5698 = vpop.f32.mrf.mxu0
    %v5699 = vadd.f32 %v5686, %v5698
    %v5700 = vpop.f32.mrf.mxu0
    %5701 = vdwg.mxu0
    %5702 = vmatpush.bf16.msra.mxu0 %v5598
    %5703 = vmatpush.bf16.msra.mxu0 %v5597
    %5704 = vmatpush.bf16.msra.mxu0 %v5596
    %5705 = vmatpush.bf16.msra.mxu0 %v5595
    %5706 = vmatpush.bf16.msra.mxu0 %v5594
    %5707 = vmatpush.bf16.msra.mxu0 %v5593
    %5708 = vmatpush.bf16.msra.mxu0 %v5592
    %5709 = vmatpush.bf16.msra.mxu0 %v5591
    %5710 = vmatmul.bf16.gmra.mxu0 %v5272
    %v5711 = vpop.f32.mrf.mxu0
    %v5712 = vadd.f32 %v5699, %v5711
    %v5713 = vpop.f32.mrf.mxu0
    %5714 = vdwg.mxu0
    %5715 = vmatpush.bf16.msra.mxu0 %v5606
    %5716 = vmatpush.bf16.msra.mxu0 %v5605
    %5717 = vmatpush.bf16.msra.mxu0 %v5604
    %5718 = vmatpush.bf16.msra.mxu0 %v5603
    %5719 = vmatpush.bf16.msra.mxu0 %v5602
    %5720 = vmatpush.bf16.msra.mxu0 %v5601
    %5721 = vmatpush.bf16.msra.mxu0 %v5600
    %5722 = vmatpush.bf16.msra.mxu0 %v5599
    %5723 = vmatmul.bf16.gmra.mxu0 %v5273
    %v5724 = vpop.f32.mrf.mxu0
    %v5725 = vadd.f32 %v5712, %v5724
    %v5726 = vpop.f32.mrf.mxu0
    %5727 = vdwg.mxu0
    %5728 = vmatpush.bf16.msra.mxu0 %v5614
    %5729 = vmatpush.bf16.msra.mxu0 %v5613
    %5730 = vmatpush.bf16.msra.mxu0 %v5612
    %5731 = vmatpush.bf16.msra.mxu0 %v5611
    %5732 = vmatpush.bf16.msra.mxu0 %v5610
    %5733 = vmatpush.bf16.msra.mxu0 %v5609
    %5734 = vmatpush.bf16.msra.mxu0 %v5608
    %5735 = vmatpush.bf16.msra.mxu0 %v5607
    %5736 = vmatmul.bf16.gmra.mxu0 %v5274
    %v5737 = vpop.f32.mrf.mxu0
    %v5738 = vadd.f32 %v5725, %v5737
    %v5739 = vpop.f32.mrf.mxu0
    %5740 = vdwg.mxu0
    %v5741 = vtanh.pop %v5738
    %5743 = vrot.lane.b32.xlu0 %v2839, 6
    %v5744 = vpop.permute.xlu0 %5743
    %5747 = vrot.lane.b32.xlu0 %v2845, 6
    %v5748 = vpop.permute.xlu0 %5747
    %vm5750 = vcmask 48128
    %v5751 = vsel %vm5750, %v5741, %v5744
    %vm5752 = vcmask 146432
    %v5753 = vsel %vm5752, %v5751, %v5748
    %vm5754 = vcmask 244736
    %5755 = vst.msk [vmem:[#allocation7] sm:$0xff] %vm5754, %v5753
    // Predicated region
    $region78: #{tpu_custom_call.1} parent=1 // pred_check
      _
    $region79: #{tpu_custom_call.1} parent=1 // pred_check_branch
      %5757 = sbr.rel (0) target = $region81
    $region80: #{tpu_custom_call.1} parent=1 // pred_region
      %5759 = vsyncadd [#allocation4], 0
      %s5761 = sshll.u32 [#allocation7], 4
      %s5762 = int_to_ptr.vmem [resolvable:$true] %s5761
      %s5763 = sshll.u32 %s17, 4
      %s5764 = int_to_ptr.hbm [resolvable:$true] %s5763
      %5766 = dma.vmem_to_hbm [thread:$0]  %s5762, 128, %s5764, [#allocation4]
    $region81: #{tpu_custom_call.1} parent=1 // pred_fallthru
      _
    // Predicated region
    $region82: #{tpu_custom_call.1} parent=1 // pred_check
      _
    $region83: #{tpu_custom_call.1} parent=1 // pred_check_branch
      %5768 = sbr.rel (0) target = $region85
    $region84: #{tpu_custom_call.1} parent=1 // pred_region
      %5770 = dma.done [#allocation4], 128
    $region85: #{tpu_custom_call.1} parent=1 // pred_fallthru
      _
    %5771 = vsyncpa [#allocation3], 1
    %5772 = vsyncpa [#allocation6], 1
    %5773 = vsyncpa [#allocation4], 1

</llo_original>
